<compile_context>
chip_gen: v7x
topology: tpu7x:2x2x1
jax: 0.10.0
libtpu: 0.0.40
codegen_flags: <defaults>
</compile_context>

<pallas_src>
import math
import functools

import jax
import jax.numpy as jnp
from jax.experimental import pallas as pl
from jax.experimental.pallas import tpu as pltpu


def _layer_norm(x, w, b, eps=1e-5):
    # f32 statistics.
    mean = jnp.mean(x, axis=-1, keepdims=True)
    var = jnp.mean((x - mean) ** 2, axis=-1, keepdims=True)
    return (x - mean) * jax.lax.rsqrt(var + eps) * w + b


def clip_layer_kernel(x_ref,
                      ln1_w_ref, ln1_b_ref,
                      wqkv_ref, bqkv_ref,
                      wo_ref, bo_ref,
                      ln2_w_ref, ln2_b_ref,
                      w1_ref, b1_ref,
                      w2_ref, b2_ref,
                      o_ref,
                      *, n_heads):
    Bt, S, D = x_ref.shape
    dh = D // n_heads

    x = x_ref[...].astype(jnp.float32).reshape(Bt * S, D)   # (Bt*S, D) rows fill the MXU M dim
    residue = x

    # ---- attention block -------------------------------------------------
    h = _layer_norm(x, ln1_w_ref[0], ln1_b_ref[0])

    # fused QKV projection: (Bt*S, D) @ (D, 3D) in bf16, f32 accumulate.
    # (1/sqrt(dh) is already folded into the Q columns of wqkv/bqkv by the wrapper.)
    qkv = jnp.dot(h.astype(jnp.bfloat16), wqkv_ref[...],
                  preferred_element_type=jnp.float32) + bqkv_ref[0]

    # additive causal mask bias (finite negative; diagonal always unmasked).
    row = jax.lax.broadcasted_iota(jnp.int32, (S, S), 0)
    col = jax.lax.broadcasted_iota(jnp.int32, (S, S), 1)
    mask_bias = jnp.where(col > row, -1e30, 0.0).astype(jnp.float32)

    wo = wo_ref[...]                                        # (D, D) bf16, loaded once
    attn = jnp.zeros((Bt * S, D), jnp.float32)
    for hd in range(n_heads):                               # static unroll over heads
        lo = hd * dh
        q_h = qkv[:, lo:lo + dh].reshape(Bt, S, dh).astype(jnp.bfloat16)
        k_h = qkv[:, D + lo:D + lo + dh].reshape(Bt, S, dh).astype(jnp.bfloat16)
        v_h = qkv[:, 2 * D + lo:2 * D + lo + dh].reshape(Bt, S, dh).astype(jnp.bfloat16)

        s = jnp.einsum('bqd,bkd->bqk', q_h, k_h,
                       preferred_element_type=jnp.float32)   # (Bt, S, S)
        s = s + mask_bias
        m = jnp.max(s, axis=-1, keepdims=True)
        p = jnp.exp(s - m)
        denom = jnp.sum(p, axis=-1, keepdims=True)
        p = p * pl.reciprocal(denom, approx=True)            # EUP, not VPU divide

        o_h = jnp.einsum('bqk,bkd->bqd', p.astype(jnp.bfloat16), v_h,
                         preferred_element_type=jnp.float32)  # (Bt, S, dh)
        # fold the per-head output projection in here -> no lane-domain concat.
        attn = attn + jnp.dot(o_h.reshape(Bt * S, dh).astype(jnp.bfloat16),
                              wo[lo:lo + dh, :],
                              preferred_element_type=jnp.float32)

    x1 = attn + bo_ref[0] + residue

    # ---- MLP block (QuickGELU) --------------------------------------------
    h2 = _layer_norm(x1, ln2_w_ref[0], ln2_b_ref[0])
    h2 = jnp.dot(h2.astype(jnp.bfloat16), w1_ref[...],
                 preferred_element_type=jnp.float32) + b1_ref[0]
    h2 = h2 * jax.nn.sigmoid(1.702 * h2)                     # QuickGELU in f32 (v5e-safe)
    h2 = jnp.dot(h2.astype(jnp.bfloat16), w2_ref[...],
                 preferred_element_type=jnp.float32) + b2_ref[0]
    out = h2 + x1

    o_ref[...] = out.reshape(Bt, S, D).astype(o_ref.dtype)


def _pick_block_b(B, S, max_rows=512):
    """Largest divisor of B with block_b*S <= max_rows, preferring >= 2 grid steps."""
    divisors = [d for d in range(1, B + 1) if B % d == 0 and d * S <= max_rows]
    if not divisors:
        return 1
    multi = [d for d in divisors if B // d >= 2]   # keep both v7x TensorCores busy
    return max(multi) if multi else max(divisors)


def clip_layer(x, params, n_heads, *, block_b=None):
    """x: (B, S, D) float32. params: dict of pre-transposed weights (in, out) in f32."""
    B, S, D = x.shape
    dh = D // n_heads
    if block_b is None:
        block_b = _pick_block_b(B, S)
    assert B % block_b == 0

    # Fold 1/sqrt(d_head) into the Q columns of the fused QKV projection, then cast to bf16.
    scale = 1.0 / math.sqrt(dh)
    wqkv = params["wqkv"].astype(jnp.float32).at[:, :D].multiply(scale).astype(jnp.bfloat16)
    bqkv = params["bqkv"].astype(jnp.float32).at[:, :D].multiply(scale)
    wo = params["wo"].astype(jnp.bfloat16)
    w1 = params["w1"].astype(jnp.bfloat16)
    w2 = params["w2"].astype(jnp.bfloat16)

    args = (x,
            params["ln1_w"], params["ln1_b"],
            wqkv, bqkv,
            wo, params["bo"],
            params["ln2_w"], params["ln2_b"],
            w1, params["b1"],
            w2, params["b2"])

    def full_spec(a):
        nd = a.ndim
        return pl.BlockSpec(a.shape, lambda b, _nd=nd: (0,) * _nd)

    in_specs = [pl.BlockSpec((block_b, S, D), lambda b: (b, 0, 0))]
    in_specs += [full_spec(a) for a in args[1:]]

    # Explicit VMEM budget: double-buffered params + in/out x tiles + headroom.
    param_bytes = sum(int(a.size) * a.dtype.itemsize for a in args[1:])
    x_tile_bytes = block_b * S * D * x.dtype.itemsize
    budget = 2 * param_bytes + 4 * x_tile_bytes + (8 << 20)
    vmem_limit = int(min(max(budget, 32 << 20), 64 << 20))   # stay under v7x's 64 MiB physical

    return pl.pallas_call(
        functools.partial(clip_layer_kernel, n_heads=n_heads),
        out_shape=jax.ShapeDtypeStruct((B, S, D), x.dtype),
        grid=(B // block_b,),
        in_specs=in_specs,
        out_specs=pl.BlockSpec((block_b, S, D), lambda b: (b, 0, 0)),
        compiler_params=pltpu.CompilerParams(
            dimension_semantics=("parallel",),
            vmem_limit_bytes=vmem_limit),
    )(*args)


def make_params(key, d_embed):
    """Deterministic synthetic parameters. Linear weights stored as (in, out), f32."""
    ks = jax.random.split(key, 10)
    s = 0.05
    return {
        "ln1_w": 1.0 + 0.1 * jax.random.normal(ks[8], (1, d_embed), jnp.float32),
        "ln1_b": 0.1 * jax.random.normal(ks[9], (1, d_embed), jnp.float32),
        "wqkv": jax.random.normal(ks[0], (d_embed, 3 * d_embed), jnp.float32) * s,
        "bqkv": jax.random.normal(ks[1], (1, 3 * d_embed), jnp.float32) * s,
        "wo":   jax.random.normal(ks[2], (d_embed, d_embed), jnp.float32) * s,
        "bo":   jax.random.normal(ks[3], (1, d_embed), jnp.float32) * s,
        "ln2_w": 1.0 + 0.1 * jax.random.normal(ks[7], (1, d_embed), jnp.float32),
        "ln2_b": 0.1 * jax.random.normal(ks[6], (1, d_embed), jnp.float32),
        "w1":   jax.random.normal(ks[4], (d_embed, 4 * d_embed), jnp.float32) * s,
        "b1":   jax.random.normal(ks[5], (1, 4 * d_embed), jnp.float32) * s,
        "w2":   jax.random.normal(ks[6], (4 * d_embed, d_embed), jnp.float32) * s,
        "b2":   jax.random.normal(ks[7], (1, d_embed), jnp.float32) * s,
    }


def clip_layer_ref(x, p, n_heads):
    """Pure-JAX f32 reference mirroring the PyTorch forward exactly."""
    B, S, D = x.shape
    dh = D // n_heads

    def ln(v, w, b):
        m = v.mean(-1, keepdims=True)
        var = ((v - m) ** 2).mean(-1, keepdims=True)
        return (v - m) / jnp.sqrt(var + 1e-5) * w[0] + b[0]

    res = x
    h = ln(x, p["ln1_w"], p["ln1_b"])
    qkv = h @ p["wqkv"] + p["bqkv"][0]
    q, k, v = jnp.split(qkv, 3, axis=-1)
    q = q.reshape(B, S, n_heads, dh).transpose(0, 2, 1, 3)
    k = k.reshape(B, S, n_heads, dh).transpose(0, 2, 1, 3)
    v = v.reshape(B, S, n_heads, dh).transpose(0, 2, 1, 3)
    w = jnp.einsum("bhqd,bhkd->bhqk", q, k)
    mask = jnp.triu(jnp.ones((S, S), bool), 1)
    w = jnp.where(mask, -jnp.inf, w) / math.sqrt(dh)
    w = jax.nn.softmax(w, axis=-1)
    o = jnp.einsum("bhqk,bhkd->bhqd", w, v).transpose(0, 2, 1, 3).reshape(B, S, D)
    o = o @ p["wo"] + p["bo"][0]
    x1 = o + res
    res2 = x1
    h2 = ln(x1, p["ln2_w"], p["ln2_b"])
    h2 = h2 @ p["w1"] + p["b1"][0]
    h2 = h2 * jax.nn.sigmoid(1.702 * h2)
    h2 = h2 @ p["w2"] + p["b2"][0]
    return h2 + res2


if __name__ == "__main__":
    # Small but lane-dense shapes: D multiple of 128, d_head = 32.
    B, S, D, H = 4, 16, 128, 4
    key = jax.random.PRNGKey(0)
    kx, kp = jax.random.split(key)
    x = jax.random.normal(kx, (B, S, D), jnp.float32)
    params = make_params(kp, D)

    out = jax.block_until_ready(clip_layer(x, params, n_heads=H))
    ref = clip_layer_ref(x, params, H)

    assert out.shape == (B, S, D)
    err = float(jnp.max(jnp.abs(out - ref)))
    # Kernel uses bf16 matmul operands (f32 accumulation) vs. the pure-f32 reference,
    # so tolerance is relaxed accordingly.
    assert err < 5e-2, f"max abs err {err}"
    print("KERNEL_OK")
</pallas_src>

<mosaic_0001>
module attributes {stable_mosaic.version = 11 : i64} {
  func.func @clip_layer_kernel(%arg0: i32, %arg1: memref<2x16x128xf32, #tpu.memory_space<vmem>>, %arg2: memref<1x128xf32, #tpu.memory_space<vmem>>, %arg3: memref<1x128xf32, #tpu.memory_space<vmem>>, %arg4: memref<128x384xbf16, #tpu.memory_space<vmem>>, %arg5: memref<1x384xf32, #tpu.memory_space<vmem>>, %arg6: memref<128x128xbf16, #tpu.memory_space<vmem>>, %arg7: memref<1x128xf32, #tpu.memory_space<vmem>>, %arg8: memref<1x128xf32, #tpu.memory_space<vmem>>, %arg9: memref<1x128xf32, #tpu.memory_space<vmem>>, %arg10: memref<128x512xbf16, #tpu.memory_space<vmem>>, %arg11: memref<1x512xf32, #tpu.memory_space<vmem>>, %arg12: memref<512x128xbf16, #tpu.memory_space<vmem>>, %arg13: memref<1x128xf32, #tpu.memory_space<vmem>>, %arg14: memref<2x16x128xf32, #tpu.memory_space<vmem>>) attributes {dimension_semantics = [#tpu.dimension_semantics<parallel>], iteration_bounds = array<i64: 2>, scalar_prefetch = 0 : i64, scratch_operands = 0 : i64, tpu.core_type = #tpu.core_type<tc>, window_params = [{transform_indices = @transform_0, window_bounds = array<i64: 2, 16, 128>}, {pipeline_mode = #tpu.pipeline_mode<synchronous>, transform_indices = @transform_1, window_bounds = array<i64: 1, 128>}, {pipeline_mode = #tpu.pipeline_mode<synchronous>, transform_indices = @transform_2, window_bounds = array<i64: 1, 128>}, {pipeline_mode = #tpu.pipeline_mode<synchronous>, transform_indices = @transform_3, window_bounds = array<i64: 128, 384>}, {pipeline_mode = #tpu.pipeline_mode<synchronous>, transform_indices = @transform_4, window_bounds = array<i64: 1, 384>}, {pipeline_mode = #tpu.pipeline_mode<synchronous>, transform_indices = @transform_5, window_bounds = array<i64: 128, 128>}, {pipeline_mode = #tpu.pipeline_mode<synchronous>, transform_indices = @transform_6, window_bounds = array<i64: 1, 128>}, {pipeline_mode = #tpu.pipeline_mode<synchronous>, transform_indices = @transform_7, window_bounds = array<i64: 1, 128>}, {pipeline_mode = #tpu.pipeline_mode<synchronous>, transform_indices = @transform_8, window_bounds = array<i64: 1, 128>}, {pipeline_mode = #tpu.pipeline_mode<synchronous>, transform_indices = @transform_9, window_bounds = array<i64: 128, 512>}, {pipeline_mode = #tpu.pipeline_mode<synchronous>, transform_indices = @transform_10, window_bounds = array<i64: 1, 512>}, {pipeline_mode = #tpu.pipeline_mode<synchronous>, transform_indices = @transform_11, window_bounds = array<i64: 512, 128>}, {pipeline_mode = #tpu.pipeline_mode<synchronous>, transform_indices = @transform_12, window_bounds = array<i64: 1, 128>}, {transform_indices = @transform_13, window_bounds = array<i64: 2, 16, 128>}]} {
    %c0 = arith.constant 0 : index
    %c0_0 = arith.constant 0 : index
    %c0_1 = arith.constant 0 : index
    %0 = vector.load %arg1[%c0, %c0_0, %c0_1] : memref<2x16x128xf32, #tpu.memory_space<vmem>>, vector<2x16x128xf32>
    %1 = vector.shape_cast %0 : vector<2x16x128xf32> to vector<32x128xf32>
    %c0_2 = arith.constant 0 : index
    %c0_3 = arith.constant 0 : index
    %2 = vector.load %arg2[%c0_2, %c0_3] : memref<1x128xf32, #tpu.memory_space<vmem>>, vector<1x128xf32>
    %3 = vector.shape_cast %2 : vector<1x128xf32> to vector<128xf32>
    %c0_4 = arith.constant 0 : index
    %c0_5 = arith.constant 0 : index
    %4 = vector.load %arg3[%c0_4, %c0_5] : memref<1x128xf32, #tpu.memory_space<vmem>>, vector<1x128xf32>
    %5 = vector.shape_cast %4 : vector<1x128xf32> to vector<128xf32>
    %cst = arith.constant dense<0.000000e+00> : vector<32xf32>
    %6 = vector.multi_reduction <add>, %1, %cst [1] : vector<32x128xf32> to vector<32xf32>
    %7 = vector.shape_cast %6 : vector<32xf32> to vector<32x1xf32>
    %cst_6 = arith.constant 1.280000e+02 : f32
    %8 = vector.broadcast %cst_6 : f32 to vector<32x1xf32>
    %9 = arith.divf %7, %8 : vector<32x1xf32>
    %10 = vector.broadcast %9 : vector<32x1xf32> to vector<32x128xf32>
    %11 = arith.subf %1, %10 : vector<32x128xf32>
    %12 = arith.mulf %11, %11 : vector<32x128xf32>
    %cst_7 = arith.constant dense<0.000000e+00> : vector<32xf32>
    %13 = vector.multi_reduction <add>, %12, %cst_7 [1] : vector<32x128xf32> to vector<32xf32>
    %14 = vector.shape_cast %13 : vector<32xf32> to vector<32x1xf32>
    %cst_8 = arith.constant 1.280000e+02 : f32
    %15 = vector.broadcast %cst_8 : f32 to vector<32x1xf32>
    %16 = arith.divf %14, %15 : vector<32x1xf32>
    %17 = vector.broadcast %9 : vector<32x1xf32> to vector<32x128xf32>
    %18 = arith.subf %1, %17 : vector<32x128xf32>
    %cst_9 = arith.constant 9.99999974E-6 : f32
    %19 = vector.broadcast %cst_9 : f32 to vector<32x1xf32>
    %20 = arith.addf %16, %19 : vector<32x1xf32>
    %21 = math.rsqrt %20 : vector<32x1xf32>
    %22 = vector.broadcast %21 : vector<32x1xf32> to vector<32x128xf32>
    %23 = arith.mulf %18, %22 : vector<32x128xf32>
    %24 = vector.shape_cast %3 : vector<128xf32> to vector<1x128xf32>
    %25 = vector.broadcast %24 : vector<1x128xf32> to vector<32x128xf32>
    %26 = arith.mulf %23, %25 : vector<32x128xf32>
    %27 = vector.shape_cast %5 : vector<128xf32> to vector<1x128xf32>
    %28 = vector.broadcast %27 : vector<1x128xf32> to vector<32x128xf32>
    %29 = arith.addf %26, %28 : vector<32x128xf32>
    %30 = arith.truncf %29 : vector<32x128xf32> to vector<32x128xbf16>
    %c0_10 = arith.constant 0 : index
    %c0_11 = arith.constant 0 : index
    %31 = vector.load %arg4[%c0_10, %c0_11] : memref<128x384xbf16, #tpu.memory_space<vmem>>, vector<128x384xbf16>
    %cst_12 = arith.constant dense<0.000000e+00> : vector<32x384xf32>
    %32 = tpu.matmul %30, %31, %cst_12 {dimension_numbers = #tpu.dot_dimension_numbers<[1], [0], [0], [1], [0, 0, 1, 1], [], []>} : vector<32x128xbf16>, vector<128x384xbf16>, vector<32x384xf32> -> vector<32x384xf32>
    %c0_13 = arith.constant 0 : index
    %c0_14 = arith.constant 0 : index
    %33 = vector.load %arg5[%c0_13, %c0_14] : memref<1x384xf32, #tpu.memory_space<vmem>>, vector<1x384xf32>
    %34 = vector.shape_cast %33 : vector<1x384xf32> to vector<384xf32>
    %35 = vector.shape_cast %34 : vector<384xf32> to vector<1x384xf32>
    %36 = vector.broadcast %35 : vector<1x384xf32> to vector<32x384xf32>
    %37 = arith.addf %32, %36 : vector<32x384xf32>
    %38 = tpu.iota {dimensions = array<i32: 0>} : vector<16x16xi32>
    %39 = tpu.iota {dimensions = array<i32: 1>} : vector<16x16xi32>
    %40 = arith.cmpi sgt, %39, %38 : vector<16x16xi32>
    %cst_15 = arith.constant -1.000000e+30 : f32
    %cst_16 = arith.constant 0.000000e+00 : f32
    %41 = vector.broadcast %cst_15 : f32 to vector<16x16xf32>
    %42 = vector.broadcast %cst_16 : f32 to vector<16x16xf32>
    %43 = arith.select %40, %41, %42 : vector<16x16xi1>, vector<16x16xf32>
    %c0_17 = arith.constant 0 : index
    %c0_18 = arith.constant 0 : index
    %44 = vector.load %arg6[%c0_17, %c0_18] : memref<128x128xbf16, #tpu.memory_space<vmem>>, vector<128x128xbf16>
    %cst_19 = arith.constant 0.000000e+00 : f32
    %45 = vector.broadcast %cst_19 : f32 to vector<32x128xf32>
    %46 = vector.extract_strided_slice %37 {offsets = [0, 0], sizes = [32, 32], strides = [1, 1]} : vector<32x384xf32> to vector<32x32xf32>
    %47 = vector.shape_cast %46 : vector<32x32xf32> to vector<2x16x32xf32>
    %48 = arith.truncf %47 : vector<2x16x32xf32> to vector<2x16x32xbf16>
    %49 = vector.extract_strided_slice %37 {offsets = [0, 128], sizes = [32, 32], strides = [1, 1]} : vector<32x384xf32> to vector<32x32xf32>
    %50 = vector.shape_cast %49 : vector<32x32xf32> to vector<2x16x32xf32>
    %51 = arith.truncf %50 : vector<2x16x32xf32> to vector<2x16x32xbf16>
    %52 = vector.extract_strided_slice %37 {offsets = [0, 256], sizes = [32, 32], strides = [1, 1]} : vector<32x384xf32> to vector<32x32xf32>
    %53 = vector.shape_cast %52 : vector<32x32xf32> to vector<2x16x32xf32>
    %54 = arith.truncf %53 : vector<2x16x32xf32> to vector<2x16x32xbf16>
    "tpu.trace_start"() <{level = 10 : i32, message = "bqd,bkd->bqk"}> : () -> ()
    %cst_20 = arith.constant dense<0.000000e+00> : vector<2x16x16xf32>
    %55 = tpu.matmul %48, %51, %cst_20 {dimension_numbers = #tpu.dot_dimension_numbers<[2], [2], [1], [1], [0, 0, 0, 1, 1, 1], [0], [0]>} : vector<2x16x32xbf16>, vector<2x16x32xbf16>, vector<2x16x16xf32> -> vector<2x16x16xf32>
    "tpu.trace_stop"() : () -> ()
    %56 = vector.shape_cast %43 : vector<16x16xf32> to vector<1x16x16xf32>
    %57 = vector.broadcast %56 : vector<1x16x16xf32> to vector<2x16x16xf32>
    %58 = arith.addf %55, %57 : vector<2x16x16xf32>
    %cst_21 = arith.constant dense<0xFF800000> : vector<2x16xf32>
    %59 = vector.multi_reduction <maximumf>, %58, %cst_21 [2] : vector<2x16x16xf32> to vector<2x16xf32>
    %60 = vector.shape_cast %59 : vector<2x16xf32> to vector<2x16x1xf32>
    %61 = vector.broadcast %60 : vector<2x16x1xf32> to vector<2x16x16xf32>
    %62 = arith.subf %58, %61 : vector<2x16x16xf32>
    %63 = math.exp %62 : vector<2x16x16xf32>
    %cst_22 = arith.constant dense<0.000000e+00> : vector<2x16xf32>
    %64 = vector.multi_reduction <add>, %63, %cst_22 [2] : vector<2x16x16xf32> to vector<2x16xf32>
    %65 = vector.shape_cast %64 : vector<2x16xf32> to vector<2x16x1xf32>
    %66 = tpu.reciprocal %65 {approx = true} : vector<2x16x1xf32> -> vector<2x16x1xf32>
    %67 = vector.broadcast %66 : vector<2x16x1xf32> to vector<2x16x16xf32>
    %68 = arith.mulf %63, %67 : vector<2x16x16xf32>
    %69 = arith.truncf %68 : vector<2x16x16xf32> to vector<2x16x16xbf16>
    "tpu.trace_start"() <{level = 10 : i32, message = "bqk,bkd->bqd"}> : () -> ()
    %cst_23 = arith.constant dense<0.000000e+00> : vector<2x16x32xf32>
    %70 = tpu.matmul %69, %54, %cst_23 {dimension_numbers = #tpu.dot_dimension_numbers<[2], [1], [1], [2], [0, 0, 0, 1, 1, 2], [0], [0]>} : vector<2x16x16xbf16>, vector<2x16x32xbf16>, vector<2x16x32xf32> -> vector<2x16x32xf32>
    "tpu.trace_stop"() : () -> ()
    %71 = vector.shape_cast %70 : vector<2x16x32xf32> to vector<32x32xf32>
    %72 = arith.truncf %71 : vector<32x32xf32> to vector<32x32xbf16>
    %73 = vector.extract_strided_slice %44 {offsets = [0, 0], sizes = [32, 128], strides = [1, 1]} : vector<128x128xbf16> to vector<32x128xbf16>
    %cst_24 = arith.constant dense<0.000000e+00> : vector<32x128xf32>
    %74 = tpu.matmul %72, %73, %cst_24 {dimension_numbers = #tpu.dot_dimension_numbers<[1], [0], [0], [1], [0, 0, 1, 1], [], []>} : vector<32x32xbf16>, vector<32x128xbf16>, vector<32x128xf32> -> vector<32x128xf32>
    %75 = arith.addf %45, %74 : vector<32x128xf32>
    %76 = vector.extract_strided_slice %37 {offsets = [0, 32], sizes = [32, 32], strides = [1, 1]} : vector<32x384xf32> to vector<32x32xf32>
    %77 = vector.shape_cast %76 : vector<32x32xf32> to vector<2x16x32xf32>
    %78 = arith.truncf %77 : vector<2x16x32xf32> to vector<2x16x32xbf16>
    %79 = vector.extract_strided_slice %37 {offsets = [0, 160], sizes = [32, 32], strides = [1, 1]} : vector<32x384xf32> to vector<32x32xf32>
    %80 = vector.shape_cast %79 : vector<32x32xf32> to vector<2x16x32xf32>
    %81 = arith.truncf %80 : vector<2x16x32xf32> to vector<2x16x32xbf16>
    %82 = vector.extract_strided_slice %37 {offsets = [0, 288], sizes = [32, 32], strides = [1, 1]} : vector<32x384xf32> to vector<32x32xf32>
    %83 = vector.shape_cast %82 : vector<32x32xf32> to vector<2x16x32xf32>
    %84 = arith.truncf %83 : vector<2x16x32xf32> to vector<2x16x32xbf16>
    "tpu.trace_start"() <{level = 10 : i32, message = "bqd,bkd->bqk"}> : () -> ()
    %cst_25 = arith.constant dense<0.000000e+00> : vector<2x16x16xf32>
    %85 = tpu.matmul %78, %81, %cst_25 {dimension_numbers = #tpu.dot_dimension_numbers<[2], [2], [1], [1], [0, 0, 0, 1, 1, 1], [0], [0]>} : vector<2x16x32xbf16>, vector<2x16x32xbf16>, vector<2x16x16xf32> -> vector<2x16x16xf32>
    "tpu.trace_stop"() : () -> ()
    %86 = vector.shape_cast %43 : vector<16x16xf32> to vector<1x16x16xf32>
    %87 = vector.broadcast %86 : vector<1x16x16xf32> to vector<2x16x16xf32>
    %88 = arith.addf %85, %87 : vector<2x16x16xf32>
    %cst_26 = arith.constant dense<0xFF800000> : vector<2x16xf32>
    %89 = vector.multi_reduction <maximumf>, %88, %cst_26 [2] : vector<2x16x16xf32> to vector<2x16xf32>
    %90 = vector.shape_cast %89 : vector<2x16xf32> to vector<2x16x1xf32>
    %91 = vector.broadcast %90 : vector<2x16x1xf32> to vector<2x16x16xf32>
    %92 = arith.subf %88, %91 : vector<2x16x16xf32>
    %93 = math.exp %92 : vector<2x16x16xf32>
    %cst_27 = arith.constant dense<0.000000e+00> : vector<2x16xf32>
    %94 = vector.multi_reduction <add>, %93, %cst_27 [2] : vector<2x16x16xf32> to vector<2x16xf32>
    %95 = vector.shape_cast %94 : vector<2x16xf32> to vector<2x16x1xf32>
    %96 = tpu.reciprocal %95 {approx = true} : vector<2x16x1xf32> -> vector<2x16x1xf32>
    %97 = vector.broadcast %96 : vector<2x16x1xf32> to vector<2x16x16xf32>
    %98 = arith.mulf %93, %97 : vector<2x16x16xf32>
    %99 = arith.truncf %98 : vector<2x16x16xf32> to vector<2x16x16xbf16>
    "tpu.trace_start"() <{level = 10 : i32, message = "bqk,bkd->bqd"}> : () -> ()
    %cst_28 = arith.constant dense<0.000000e+00> : vector<2x16x32xf32>
    %100 = tpu.matmul %99, %84, %cst_28 {dimension_numbers = #tpu.dot_dimension_numbers<[2], [1], [1], [2], [0, 0, 0, 1, 1, 2], [0], [0]>} : vector<2x16x16xbf16>, vector<2x16x32xbf16>, vector<2x16x32xf32> -> vector<2x16x32xf32>
    "tpu.trace_stop"() : () -> ()
    %101 = vector.shape_cast %100 : vector<2x16x32xf32> to vector<32x32xf32>
    %102 = arith.truncf %101 : vector<32x32xf32> to vector<32x32xbf16>
    %103 = vector.extract_strided_slice %44 {offsets = [32, 0], sizes = [32, 128], strides = [1, 1]} : vector<128x128xbf16> to vector<32x128xbf16>
    %cst_29 = arith.constant dense<0.000000e+00> : vector<32x128xf32>
    %104 = tpu.matmul %102, %103, %cst_29 {dimension_numbers = #tpu.dot_dimension_numbers<[1], [0], [0], [1], [0, 0, 1, 1], [], []>} : vector<32x32xbf16>, vector<32x128xbf16>, vector<32x128xf32> -> vector<32x128xf32>
    %105 = arith.addf %75, %104 : vector<32x128xf32>
    %106 = vector.extract_strided_slice %37 {offsets = [0, 64], sizes = [32, 32], strides = [1, 1]} : vector<32x384xf32> to vector<32x32xf32>
    %107 = vector.shape_cast %106 : vector<32x32xf32> to vector<2x16x32xf32>
    %108 = arith.truncf %107 : vector<2x16x32xf32> to vector<2x16x32xbf16>
    %109 = vector.extract_strided_slice %37 {offsets = [0, 192], sizes = [32, 32], strides = [1, 1]} : vector<32x384xf32> to vector<32x32xf32>
    %110 = vector.shape_cast %109 : vector<32x32xf32> to vector<2x16x32xf32>
    %111 = arith.truncf %110 : vector<2x16x32xf32> to vector<2x16x32xbf16>
    %112 = vector.extract_strided_slice %37 {offsets = [0, 320], sizes = [32, 32], strides = [1, 1]} : vector<32x384xf32> to vector<32x32xf32>
    %113 = vector.shape_cast %112 : vector<32x32xf32> to vector<2x16x32xf32>
    %114 = arith.truncf %113 : vector<2x16x32xf32> to vector<2x16x32xbf16>
    "tpu.trace_start"() <{level = 10 : i32, message = "bqd,bkd->bqk"}> : () -> ()
    %cst_30 = arith.constant dense<0.000000e+00> : vector<2x16x16xf32>
    %115 = tpu.matmul %108, %111, %cst_30 {dimension_numbers = #tpu.dot_dimension_numbers<[2], [2], [1], [1], [0, 0, 0, 1, 1, 1], [0], [0]>} : vector<2x16x32xbf16>, vector<2x16x32xbf16>, vector<2x16x16xf32> -> vector<2x16x16xf32>
    "tpu.trace_stop"() : () -> ()
    %116 = vector.shape_cast %43 : vector<16x16xf32> to vector<1x16x16xf32>
    %117 = vector.broadcast %116 : vector<1x16x16xf32> to vector<2x16x16xf32>
    %118 = arith.addf %115, %117 : vector<2x16x16xf32>
    %cst_31 = arith.constant dense<0xFF800000> : vector<2x16xf32>
    %119 = vector.multi_reduction <maximumf>, %118, %cst_31 [2] : vector<2x16x16xf32> to vector<2x16xf32>
    %120 = vector.shape_cast %119 : vector<2x16xf32> to vector<2x16x1xf32>
    %121 = vector.broadcast %120 : vector<2x16x1xf32> to vector<2x16x16xf32>
    %122 = arith.subf %118, %121 : vector<2x16x16xf32>
    %123 = math.exp %122 : vector<2x16x16xf32>
    %cst_32 = arith.constant dense<0.000000e+00> : vector<2x16xf32>
    %124 = vector.multi_reduction <add>, %123, %cst_32 [2] : vector<2x16x16xf32> to vector<2x16xf32>
    %125 = vector.shape_cast %124 : vector<2x16xf32> to vector<2x16x1xf32>
    %126 = tpu.reciprocal %125 {approx = true} : vector<2x16x1xf32> -> vector<2x16x1xf32>
    %127 = vector.broadcast %126 : vector<2x16x1xf32> to vector<2x16x16xf32>
    %128 = arith.mulf %123, %127 : vector<2x16x16xf32>
    %129 = arith.truncf %128 : vector<2x16x16xf32> to vector<2x16x16xbf16>
    "tpu.trace_start"() <{level = 10 : i32, message = "bqk,bkd->bqd"}> : () -> ()
    %cst_33 = arith.constant dense<0.000000e+00> : vector<2x16x32xf32>
    %130 = tpu.matmul %129, %114, %cst_33 {dimension_numbers = #tpu.dot_dimension_numbers<[2], [1], [1], [2], [0, 0, 0, 1, 1, 2], [0], [0]>} : vector<2x16x16xbf16>, vector<2x16x32xbf16>, vector<2x16x32xf32> -> vector<2x16x32xf32>
    "tpu.trace_stop"() : () -> ()
    %131 = vector.shape_cast %130 : vector<2x16x32xf32> to vector<32x32xf32>
    %132 = arith.truncf %131 : vector<32x32xf32> to vector<32x32xbf16>
    %133 = vector.extract_strided_slice %44 {offsets = [64, 0], sizes = [32, 128], strides = [1, 1]} : vector<128x128xbf16> to vector<32x128xbf16>
    %cst_34 = arith.constant dense<0.000000e+00> : vector<32x128xf32>
    %134 = tpu.matmul %132, %133, %cst_34 {dimension_numbers = #tpu.dot_dimension_numbers<[1], [0], [0], [1], [0, 0, 1, 1], [], []>} : vector<32x32xbf16>, vector<32x128xbf16>, vector<32x128xf32> -> vector<32x128xf32>
    %135 = arith.addf %105, %134 : vector<32x128xf32>
    %136 = vector.extract_strided_slice %37 {offsets = [0, 96], sizes = [32, 32], strides = [1, 1]} : vector<32x384xf32> to vector<32x32xf32>
    %137 = vector.shape_cast %136 : vector<32x32xf32> to vector<2x16x32xf32>
    %138 = arith.truncf %137 : vector<2x16x32xf32> to vector<2x16x32xbf16>
    %139 = vector.extract_strided_slice %37 {offsets = [0, 224], sizes = [32, 32], strides = [1, 1]} : vector<32x384xf32> to vector<32x32xf32>
    %140 = vector.shape_cast %139 : vector<32x32xf32> to vector<2x16x32xf32>
    %141 = arith.truncf %140 : vector<2x16x32xf32> to vector<2x16x32xbf16>
    %142 = vector.extract_strided_slice %37 {offsets = [0, 352], sizes = [32, 32], strides = [1, 1]} : vector<32x384xf32> to vector<32x32xf32>
    %143 = vector.shape_cast %142 : vector<32x32xf32> to vector<2x16x32xf32>
    %144 = arith.truncf %143 : vector<2x16x32xf32> to vector<2x16x32xbf16>
    "tpu.trace_start"() <{level = 10 : i32, message = "bqd,bkd->bqk"}> : () -> ()
    %cst_35 = arith.constant dense<0.000000e+00> : vector<2x16x16xf32>
    %145 = tpu.matmul %138, %141, %cst_35 {dimension_numbers = #tpu.dot_dimension_numbers<[2], [2], [1], [1], [0, 0, 0, 1, 1, 1], [0], [0]>} : vector<2x16x32xbf16>, vector<2x16x32xbf16>, vector<2x16x16xf32> -> vector<2x16x16xf32>
    "tpu.trace_stop"() : () -> ()
    %146 = vector.shape_cast %43 : vector<16x16xf32> to vector<1x16x16xf32>
    %147 = vector.broadcast %146 : vector<1x16x16xf32> to vector<2x16x16xf32>
    %148 = arith.addf %145, %147 : vector<2x16x16xf32>
    %cst_36 = arith.constant dense<0xFF800000> : vector<2x16xf32>
    %149 = vector.multi_reduction <maximumf>, %148, %cst_36 [2] : vector<2x16x16xf32> to vector<2x16xf32>
    %150 = vector.shape_cast %149 : vector<2x16xf32> to vector<2x16x1xf32>
    %151 = vector.broadcast %150 : vector<2x16x1xf32> to vector<2x16x16xf32>
    %152 = arith.subf %148, %151 : vector<2x16x16xf32>
    %153 = math.exp %152 : vector<2x16x16xf32>
    %cst_37 = arith.constant dense<0.000000e+00> : vector<2x16xf32>
    %154 = vector.multi_reduction <add>, %153, %cst_37 [2] : vector<2x16x16xf32> to vector<2x16xf32>
    %155 = vector.shape_cast %154 : vector<2x16xf32> to vector<2x16x1xf32>
    %156 = tpu.reciprocal %155 {approx = true} : vector<2x16x1xf32> -> vector<2x16x1xf32>
    %157 = vector.broadcast %156 : vector<2x16x1xf32> to vector<2x16x16xf32>
    %158 = arith.mulf %153, %157 : vector<2x16x16xf32>
    %159 = arith.truncf %158 : vector<2x16x16xf32> to vector<2x16x16xbf16>
    "tpu.trace_start"() <{level = 10 : i32, message = "bqk,bkd->bqd"}> : () -> ()
    %cst_38 = arith.constant dense<0.000000e+00> : vector<2x16x32xf32>
    %160 = tpu.matmul %159, %144, %cst_38 {dimension_numbers = #tpu.dot_dimension_numbers<[2], [1], [1], [2], [0, 0, 0, 1, 1, 2], [0], [0]>} : vector<2x16x16xbf16>, vector<2x16x32xbf16>, vector<2x16x32xf32> -> vector<2x16x32xf32>
    "tpu.trace_stop"() : () -> ()
    %161 = vector.shape_cast %160 : vector<2x16x32xf32> to vector<32x32xf32>
    %162 = arith.truncf %161 : vector<32x32xf32> to vector<32x32xbf16>
    %163 = vector.extract_strided_slice %44 {offsets = [96, 0], sizes = [32, 128], strides = [1, 1]} : vector<128x128xbf16> to vector<32x128xbf16>
    %cst_39 = arith.constant dense<0.000000e+00> : vector<32x128xf32>
    %164 = tpu.matmul %162, %163, %cst_39 {dimension_numbers = #tpu.dot_dimension_numbers<[1], [0], [0], [1], [0, 0, 1, 1], [], []>} : vector<32x32xbf16>, vector<32x128xbf16>, vector<32x128xf32> -> vector<32x128xf32>
    %165 = arith.addf %135, %164 : vector<32x128xf32>
    %c0_40 = arith.constant 0 : index
    %c0_41 = arith.constant 0 : index
    %166 = vector.load %arg7[%c0_40, %c0_41] : memref<1x128xf32, #tpu.memory_space<vmem>>, vector<1x128xf32>
    %167 = vector.shape_cast %166 : vector<1x128xf32> to vector<128xf32>
    %168 = vector.shape_cast %167 : vector<128xf32> to vector<1x128xf32>
    %169 = vector.broadcast %168 : vector<1x128xf32> to vector<32x128xf32>
    %170 = arith.addf %165, %169 : vector<32x128xf32>
    %171 = arith.addf %170, %1 : vector<32x128xf32>
    %c0_42 = arith.constant 0 : index
    %c0_43 = arith.constant 0 : index
    %172 = vector.load %arg8[%c0_42, %c0_43] : memref<1x128xf32, #tpu.memory_space<vmem>>, vector<1x128xf32>
    %173 = vector.shape_cast %172 : vector<1x128xf32> to vector<128xf32>
    %c0_44 = arith.constant 0 : index
    %c0_45 = arith.constant 0 : index
    %174 = vector.load %arg9[%c0_44, %c0_45] : memref<1x128xf32, #tpu.memory_space<vmem>>, vector<1x128xf32>
    %175 = vector.shape_cast %174 : vector<1x128xf32> to vector<128xf32>
    %cst_46 = arith.constant dense<0.000000e+00> : vector<32xf32>
    %176 = vector.multi_reduction <add>, %171, %cst_46 [1] : vector<32x128xf32> to vector<32xf32>
    %177 = vector.shape_cast %176 : vector<32xf32> to vector<32x1xf32>
    %cst_47 = arith.constant 1.280000e+02 : f32
    %178 = vector.broadcast %cst_47 : f32 to vector<32x1xf32>
    %179 = arith.divf %177, %178 : vector<32x1xf32>
    %180 = vector.broadcast %179 : vector<32x1xf32> to vector<32x128xf32>
    %181 = arith.subf %171, %180 : vector<32x128xf32>
    %182 = arith.mulf %181, %181 : vector<32x128xf32>
    %cst_48 = arith.constant dense<0.000000e+00> : vector<32xf32>
    %183 = vector.multi_reduction <add>, %182, %cst_48 [1] : vector<32x128xf32> to vector<32xf32>
    %184 = vector.shape_cast %183 : vector<32xf32> to vector<32x1xf32>
    %cst_49 = arith.constant 1.280000e+02 : f32
    %185 = vector.broadcast %cst_49 : f32 to vector<32x1xf32>
    %186 = arith.divf %184, %185 : vector<32x1xf32>
    %187 = vector.broadcast %179 : vector<32x1xf32> to vector<32x128xf32>
    %188 = arith.subf %171, %187 : vector<32x128xf32>
    %cst_50 = arith.constant 9.99999974E-6 : f32
    %189 = vector.broadcast %cst_50 : f32 to vector<32x1xf32>
    %190 = arith.addf %186, %189 : vector<32x1xf32>
    %191 = math.rsqrt %190 : vector<32x1xf32>
    %192 = vector.broadcast %191 : vector<32x1xf32> to vector<32x128xf32>
    %193 = arith.mulf %188, %192 : vector<32x128xf32>
    %194 = vector.shape_cast %173 : vector<128xf32> to vector<1x128xf32>
    %195 = vector.broadcast %194 : vector<1x128xf32> to vector<32x128xf32>
    %196 = arith.mulf %193, %195 : vector<32x128xf32>
    %197 = vector.shape_cast %175 : vector<128xf32> to vector<1x128xf32>
    %198 = vector.broadcast %197 : vector<1x128xf32> to vector<32x128xf32>
    %199 = arith.addf %196, %198 : vector<32x128xf32>
    %200 = arith.truncf %199 : vector<32x128xf32> to vector<32x128xbf16>
    %c0_51 = arith.constant 0 : index
    %c0_52 = arith.constant 0 : index
    %201 = vector.load %arg10[%c0_51, %c0_52] : memref<128x512xbf16, #tpu.memory_space<vmem>>, vector<128x512xbf16>
    %cst_53 = arith.constant dense<0.000000e+00> : vector<32x512xf32>
    %202 = tpu.matmul %200, %201, %cst_53 {dimension_numbers = #tpu.dot_dimension_numbers<[1], [0], [0], [1], [0, 0, 1, 1], [], []>} : vector<32x128xbf16>, vector<128x512xbf16>, vector<32x512xf32> -> vector<32x512xf32>
    %c0_54 = arith.constant 0 : index
    %c0_55 = arith.constant 0 : index
    %203 = vector.load %arg11[%c0_54, %c0_55] : memref<1x512xf32, #tpu.memory_space<vmem>>, vector<1x512xf32>
    %204 = vector.shape_cast %203 : vector<1x512xf32> to vector<512xf32>
    %205 = vector.shape_cast %204 : vector<512xf32> to vector<1x512xf32>
    %206 = vector.broadcast %205 : vector<1x512xf32> to vector<32x512xf32>
    %207 = arith.addf %202, %206 : vector<32x512xf32>
    %cst_56 = arith.constant 1.702000e+00 : f32
    %208 = vector.broadcast %cst_56 : f32 to vector<32x512xf32>
    %209 = arith.mulf %208, %207 : vector<32x512xf32>
    %210 = arith.negf %209 : vector<32x512xf32>
    %211 = math.exp %210 : vector<32x512xf32>
    %cst_57 = arith.constant 1.000000e+00 : f32
    %212 = vector.broadcast %cst_57 : f32 to vector<32x512xf32>
    %213 = arith.addf %212, %211 : vector<32x512xf32>
    %214 = arith.divf %212, %213 : vector<32x512xf32>
    %215 = arith.mulf %207, %214 : vector<32x512xf32>
    %216 = arith.truncf %215 : vector<32x512xf32> to vector<32x512xbf16>
    %c0_58 = arith.constant 0 : index
    %c0_59 = arith.constant 0 : index
    %217 = vector.load %arg12[%c0_58, %c0_59] : memref<512x128xbf16, #tpu.memory_space<vmem>>, vector<512x128xbf16>
    %cst_60 = arith.constant dense<0.000000e+00> : vector<32x128xf32>
    %218 = tpu.matmul %216, %217, %cst_60 {dimension_numbers = #tpu.dot_dimension_numbers<[1], [0], [0], [1], [0, 0, 1, 1], [], []>} : vector<32x512xbf16>, vector<512x128xbf16>, vector<32x128xf32> -> vector<32x128xf32>
    %c0_61 = arith.constant 0 : index
    %c0_62 = arith.constant 0 : index
    %219 = vector.load %arg13[%c0_61, %c0_62] : memref<1x128xf32, #tpu.memory_space<vmem>>, vector<1x128xf32>
    %220 = vector.shape_cast %219 : vector<1x128xf32> to vector<128xf32>
    %221 = vector.shape_cast %220 : vector<128xf32> to vector<1x128xf32>
    %222 = vector.broadcast %221 : vector<1x128xf32> to vector<32x128xf32>
    %223 = arith.addf %218, %222 : vector<32x128xf32>
    %224 = arith.addf %223, %171 : vector<32x128xf32>
    %225 = vector.shape_cast %224 : vector<32x128xf32> to vector<2x16x128xf32>
    %c0_63 = arith.constant 0 : index
    %c0_64 = arith.constant 0 : index
    %c0_65 = arith.constant 0 : index
    %226 = vector.load %arg14[%c0_63, %c0_64, %c0_65] : memref<2x16x128xf32, #tpu.memory_space<vmem>>, vector<2x16x128xf32>
    tpu.vector_store %arg14[%c0_63, %c0_64, %c0_65], %225 {strides = array<i32>} : memref<2x16x128xf32, #tpu.memory_space<vmem>>, vector<2x16x128xf32>,
    return
  }
  func.func @transform_0(%arg0: i32) -> (i32, i32, i32) {
    %c0_i32 = arith.constant 0 : i32
    %c0_i32_0 = arith.constant 0 : i32
    %c0_i32_1 = arith.constant 0 : i32
    return %arg0, %c0_i32, %c0_i32_0 : i32, i32, i32
  }
  func.func @transform_1(%arg0: i32) -> (i32, i32) {
    %c0_i32 = arith.constant 0 : i32
    %c0_i32_0 = arith.constant 0 : i32
    %c0_i32_1 = arith.constant 0 : i32
    return %c0_i32, %c0_i32_0 : i32, i32
  }
  func.func @transform_2(%arg0: i32) -> (i32, i32) {
    %c0_i32 = arith.constant 0 : i32
    %c0_i32_0 = arith.constant 0 : i32
    %c0_i32_1 = arith.constant 0 : i32
    return %c0_i32, %c0_i32_0 : i32, i32
  }
  func.func @transform_3(%arg0: i32) -> (i32, i32) {
    %c0_i32 = arith.constant 0 : i32
    %c0_i32_0 = arith.constant 0 : i32
    %c0_i32_1 = arith.constant 0 : i32
    return %c0_i32, %c0_i32_0 : i32, i32
  }
  func.func @transform_4(%arg0: i32) -> (i32, i32) {
    %c0_i32 = arith.constant 0 : i32
    %c0_i32_0 = arith.constant 0 : i32
    %c0_i32_1 = arith.constant 0 : i32
    return %c0_i32, %c0_i32_0 : i32, i32
  }
  func.func @transform_5(%arg0: i32) -> (i32, i32) {
    %c0_i32 = arith.constant 0 : i32
    %c0_i32_0 = arith.constant 0 : i32
    %c0_i32_1 = arith.constant 0 : i32
    return %c0_i32, %c0_i32_0 : i32, i32
  }
  func.func @transform_6(%arg0: i32) -> (i32, i32) {
    %c0_i32 = arith.constant 0 : i32
    %c0_i32_0 = arith.constant 0 : i32
    %c0_i32_1 = arith.constant 0 : i32
    return %c0_i32, %c0_i32_0 : i32, i32
  }
  func.func @transform_7(%arg0: i32) -> (i32, i32) {
    %c0_i32 = arith.constant 0 : i32
    %c0_i32_0 = arith.constant 0 : i32
    %c0_i32_1 = arith.constant 0 : i32
    return %c0_i32, %c0_i32_0 : i32, i32
  }
  func.func @transform_8(%arg0: i32) -> (i32, i32) {
    %c0_i32 = arith.constant 0 : i32
    %c0_i32_0 = arith.constant 0 : i32
    %c0_i32_1 = arith.constant 0 : i32
    return %c0_i32, %c0_i32_0 : i32, i32
  }
  func.func @transform_9(%arg0: i32) -> (i32, i32) {
    %c0_i32 = arith.constant 0 : i32
    %c0_i32_0 = arith.constant 0 : i32
    %c0_i32_1 = arith.constant 0 : i32
    return %c0_i32, %c0_i32_0 : i32, i32
  }
  func.func @transform_10(%arg0: i32) -> (i32, i32) {
    %c0_i32 = arith.constant 0 : i32
    %c0_i32_0 = arith.constant 0 : i32
    %c0_i32_1 = arith.constant 0 : i32
    return %c0_i32, %c0_i32_0 : i32, i32
  }
  func.func @transform_11(%arg0: i32) -> (i32, i32) {
    %c0_i32 = arith.constant 0 : i32
    %c0_i32_0 = arith.constant 0 : i32
    %c0_i32_1 = arith.constant 0 : i32
    return %c0_i32, %c0_i32_0 : i32, i32
  }
  func.func @transform_12(%arg0: i32) -> (i32, i32) {
    %c0_i32 = arith.constant 0 : i32
    %c0_i32_0 = arith.constant 0 : i32
    %c0_i32_1 = arith.constant 0 : i32
    return %c0_i32, %c0_i32_0 : i32, i32
  }
  func.func @transform_13(%arg0: i32) -> (i32, i32, i32) {
    %c0_i32 = arith.constant 0 : i32
    %c0_i32_0 = arith.constant 0 : i32
    %c0_i32_1 = arith.constant 0 : i32
    return %arg0, %c0_i32, %c0_i32_0 : i32, i32, i32
  }
}

</mosaic_0001>

<llo_original>
// kernel: tpu_custom_call.1
$region0: #{tpu_custom_call.1}
  #allocation0 [shape = 'u32[]', space=smem, size = 0x4, offset = 0x4, fixed_abs, tag = 'smem constant byte address 0x4 - core index']
  #allocation1 [shape = 'u32[144,128]{1,0:T(1,128)}', space=vmem, size = 0x12000, scoped, tag = 'internal scratch']
  %s0 = inlined_call_operand.hbm [shape: f32[4,16,128], index: 0, kind: input, shape index: {}]
  %s1 = inlined_call_operand.hbm [shape: f32[1,128], index: 1, kind: input, shape index: {}]
  %s2 = inlined_call_operand.hbm [shape: f32[1,128], index: 2, kind: input, shape index: {}]
  %s3 = inlined_call_operand.hbm [shape: bf16[128,384], index: 3, kind: input, shape index: {}]
  %s4 = inlined_call_operand.vmem [shape: f32[1,384], index: 4, kind: input, shape index: {}]
  %s5 = inlined_call_operand.hbm [shape: bf16[128,128], index: 5, kind: input, shape index: {}]
  %s6 = inlined_call_operand.vmem [shape: f32[1,128], index: 6, kind: input, shape index: {}]
  %s7 = inlined_call_operand.vmem [shape: f32[1,128], index: 7, kind: input, shape index: {}]
  %s8 = inlined_call_operand.vmem [shape: f32[1,128], index: 8, kind: input, shape index: {}]
  %s9 = inlined_call_operand.hbm [shape: bf16[128,512], index: 9, kind: input, shape index: {}]
  %s10 = inlined_call_operand.vmem [shape: f32[1,512], index: 10, kind: input, shape index: {}]
  %s11 = inlined_call_operand.hbm [shape: bf16[512,128], index: 11, kind: input, shape index: {}]
  %s12 = inlined_call_operand.vmem [shape: f32[1,128], index: 12, kind: input, shape index: {}]
  %s13 = inlined_call_operand.hbm [shape: f32[4,16,128], index: 13, kind: output, shape index: {}]
  %s14 = sld [smem:[#allocation0]]
  $region113: #{tpu_custom_call.1} parent=0
    _
  %s16 = ssub.s32 1, %s14
  %s17 = scalar_select 0, %s16, %s14
  $region1: #{tpu_custom_call.1} parent=0
    #allocation2 [shape = 'u8[32768]{0}', space=vmem, size = 0x8000, scoped, tag = 'input window, operand 0']
    #allocation3 [shape = 's32[2]{0}', space=sflag, size = 0x8, scoped, tag = 'scoped memory for tpu_custom_call.1']
    #allocation4 [shape = 's32[2]{0}', space=sflag, size = 0x8, scoped, tag = 'scoped memory for tpu_custom_call.1']
    #allocation5 [shape = 'u8[512]{0}', space=vmem, size = 0x400, scoped, tag = 'input window, operand 1, single buffered']
    #allocation6 [shape = 's32[1]{0}', space=sflag, size = 0x4, scoped, tag = 'scoped memory for tpu_custom_call.1']
    #allocation7 [shape = 'u8[512]{0}', space=vmem, size = 0x400, scoped, tag = 'input window, operand 2, single buffered']
    #allocation8 [shape = 'u8[98304]{0}', space=vmem, size = 0x18000, scoped, tag = 'input window, operand 3, single buffered']
    #allocation9 [shape = 's32[1]{0}', space=sflag, size = 0x4, scoped, tag = 'scoped memory for tpu_custom_call.1']
    #allocation10 [shape = 'u8[32768]{0}', space=vmem, size = 0x8000, scoped, tag = 'input window, operand 5, single buffered']
    #allocation11 [shape = 'u8[131072]{0}', space=vmem, size = 0x20000, scoped, tag = 'input window, operand 9, single buffered']
    #allocation12 [shape = 's32[1]{0}', space=sflag, size = 0x4, scoped, tag = 'scoped memory for tpu_custom_call.1']
    #allocation13 [shape = 'u8[131072]{0}', space=vmem, size = 0x20000, scoped, tag = 'input window, operand 11, single buffered']
    #allocation14 [shape = 'u8[32768]{0}', space=vmem, size = 0x8000, scoped, tag = 'output window, operand 0']
    %18 = vsyncpa [#allocation3], 0
    %s19 = scalar_lea.sflag [#allocation3], 1
    %20 = vsyncpa %s19, 0
    %21 = vsyncpa [#allocation6], 0
    %22 = vsyncpa [#allocation9], 0
    %23 = vsyncpa [#allocation12], 0
    %24 = vsyncpa [#allocation4], 0
    %s25 = scalar_lea.sflag [#allocation4], 1
    %26 = vsyncpa %s25, 0
    loop: start=0, step=1, limit=4
    $region2: #{tpu_custom_call.1} parent=1 // loop_pre_header
      _
    $region3: #{tpu_custom_call.1} parent=1 // loop_header
      %s28 = sphi 0, %s32
      %p29 = scmp.ge.s32.totalorder %s28, 4
      %s38 = sphi 0, %s40
      %s41 = sphi 0, %s38
      %s42 = sphi 0, %s41
      %s58 = sphi 0, %s42
      %s62 = sphi 0, %s62
      %s64 = sphi 0, %s62
      %s65 = sphi 0, %s64
      %s79 = sphi 0, %s65
      %s83 = sphi 0, %s83
      %s85 = sphi 0, %s83
      %s86 = sphi 0, %s85
      %s100 = sphi 0, %s86
      %s104 = sphi 0, %s104
      %s106 = sphi 0, %s104
      %s107 = sphi 0, %s106
      %s121 = sphi 0, %s107
      %s125 = sphi 0, %s125
      %s127 = sphi 0, %s125
      %s128 = sphi 0, %s127
      %s142 = sphi 0, %s128
      %s146 = sphi 0, %s146
      %s148 = sphi 0, %s146
      %s149 = sphi 0, %s148
      %s163 = sphi 0, %s149
      %s167 = sphi 0, %s167
      %s169 = sphi 0, %s167
      %s170 = sphi 0, %s169
      %s184 = sphi 0, %s170
      %s188 = sphi 0, %s188
      %s190 = sphi 0, %s188
      %s191 = sphi 0, %s190
      %s205 = sphi 0, %s191
      %s209 = sphi 0, %s209
      %s211 = sphi 0, %s209
      %s212 = sphi 0, %s211
      %s226 = sphi 0, %s212
      %s230 = sphi 0, %s230
      %s232 = sphi 0, %s230
      %s233 = sphi 0, %s232
      %s247 = sphi 0, %s233
      %s251 = sphi 0, %s251
      %s253 = sphi 0, %s251
      %s254 = sphi 0, %s253
      %s268 = sphi 0, %s254
      %s272 = sphi 0, %s272
      %s274 = sphi 0, %s272
      %s275 = sphi 0, %s274
      %s289 = sphi 0, %s275
      %s293 = sphi 0, %s293
      %s295 = sphi 0, %s293
      %s296 = sphi 0, %s295
      %s310 = sphi 0, %s296
      %s316 = sphi 0, %s318
      %s319 = sphi 0, %s316
      %s320 = sphi 0, %s319
      %s336 = sphi 0, %s320
    $region4: #{tpu_custom_call.1} parent=1 // loop_header_branch
      %31 = sbr.rel (%p29) target = $region8
    $region5: #{tpu_custom_call.1} parent=1 // loop_body
      %s33 = ssub.s32 %s28, 1
      %s34 = ssub.s32 %s28, 2
      %s35 = sadd.s32 %s28, 1
      %s36 = ssub.s32 %s28, %s35
      %p37 = scmp.eq.s32.totalorder %s36, 0
      %s39 = sadd.s32 %s38, 1
      %s40 = scalar_select %p37, %s38, %s39
      %p43 = pneg %p37
      %p44 = scmp.eq.s32.totalorder %s28, 1
      %p45 = por %p43, %p44
      %p46 = scmp.ne.s32.totalorder %s38, %s41
      %p47 = scmp.eq.s32.totalorder %s28, 0
      %p48 = por %p46, %p47
      %p49 = scmp.ne.s32.totalorder %s38, %s41
      %p50 = scmp.eq.s32.totalorder %s33, 1
      %p51 = por %p49, %p50
      %p52 = scmp.ne.s32.totalorder %s41, %s42
      %p53 = scmp.eq.s32.totalorder %s33, 0
      %p54 = por %p52, %p53
      %p55 = scmp.ne.s32.totalorder %s41, %s42
      %p56 = scmp.eq.s32.totalorder %s34, 1
      %p57 = por %p55, %p56
      %p59 = scmp.ne.s32.totalorder %s42, %s58
      %p60 = scmp.eq.s32.totalorder %s34, 0
      %p61 = por %p59, %p60
      %s63 = sadd.s32 %s62, 1
      %p66 = scmp.eq.s32.totalorder %s28, 1
      %p67 = scmp.ne.s32.totalorder %s62, %s64
      %p68 = scmp.eq.s32.totalorder %s28, 0
      %p69 = por %p67, %p68
      %p70 = scmp.ne.s32.totalorder %s62, %s64
      %p71 = scmp.eq.s32.totalorder %s33, 1
      %p72 = por %p70, %p71
      %p73 = scmp.ne.s32.totalorder %s64, %s65
      %p74 = scmp.eq.s32.totalorder %s33, 0
      %p75 = por %p73, %p74
      %p76 = scmp.ne.s32.totalorder %s64, %s65
      %p77 = scmp.eq.s32.totalorder %s34, 1
      %p78 = por %p76, %p77
      %p80 = scmp.ne.s32.totalorder %s65, %s79
      %p81 = scmp.eq.s32.totalorder %s34, 0
      %p82 = por %p80, %p81
      %s84 = sadd.s32 %s83, 1
      %p87 = scmp.eq.s32.totalorder %s28, 1
      %p88 = scmp.ne.s32.totalorder %s83, %s85
      %p89 = scmp.eq.s32.totalorder %s28, 0
      %p90 = por %p88, %p89
      %p91 = scmp.ne.s32.totalorder %s83, %s85
      %p92 = scmp.eq.s32.totalorder %s33, 1
      %p93 = por %p91, %p92
      %p94 = scmp.ne.s32.totalorder %s85, %s86
      %p95 = scmp.eq.s32.totalorder %s33, 0
      %p96 = por %p94, %p95
      %p97 = scmp.ne.s32.totalorder %s85, %s86
      %p98 = scmp.eq.s32.totalorder %s34, 1
      %p99 = por %p97, %p98
      %p101 = scmp.ne.s32.totalorder %s86, %s100
      %p102 = scmp.eq.s32.totalorder %s34, 0
      %p103 = por %p101, %p102
      %s105 = sadd.s32 %s104, 1
      %p108 = scmp.eq.s32.totalorder %s28, 1
      %p109 = scmp.ne.s32.totalorder %s104, %s106
      %p110 = scmp.eq.s32.totalorder %s28, 0
      %p111 = por %p109, %p110
      %p112 = scmp.ne.s32.totalorder %s104, %s106
      %p113 = scmp.eq.s32.totalorder %s33, 1
      %p114 = por %p112, %p113
      %p115 = scmp.ne.s32.totalorder %s106, %s107
      %p116 = scmp.eq.s32.totalorder %s33, 0
      %p117 = por %p115, %p116
      %p118 = scmp.ne.s32.totalorder %s106, %s107
      %p119 = scmp.eq.s32.totalorder %s34, 1
      %p120 = por %p118, %p119
      %p122 = scmp.ne.s32.totalorder %s107, %s121
      %p123 = scmp.eq.s32.totalorder %s34, 0
      %p124 = por %p122, %p123
      %s126 = sadd.s32 %s125, 1
      %p129 = scmp.eq.s32.totalorder %s28, 1
      %p130 = scmp.ne.s32.totalorder %s125, %s127
      %p131 = scmp.eq.s32.totalorder %s28, 0
      %p132 = por %p130, %p131
      %p133 = scmp.ne.s32.totalorder %s125, %s127
      %p134 = scmp.eq.s32.totalorder %s33, 1
      %p135 = por %p133, %p134
      %p136 = scmp.ne.s32.totalorder %s127, %s128
      %p137 = scmp.eq.s32.totalorder %s33, 0
      %p138 = por %p136, %p137
      %p139 = scmp.ne.s32.totalorder %s127, %s128
      %p140 = scmp.eq.s32.totalorder %s34, 1
      %p141 = por %p139, %p140
      %p143 = scmp.ne.s32.totalorder %s128, %s142
      %p144 = scmp.eq.s32.totalorder %s34, 0
      %p145 = por %p143, %p144
      %s147 = sadd.s32 %s146, 1
      %p150 = scmp.eq.s32.totalorder %s28, 1
      %p151 = scmp.ne.s32.totalorder %s146, %s148
      %p152 = scmp.eq.s32.totalorder %s28, 0
      %p153 = por %p151, %p152
      %p154 = scmp.ne.s32.totalorder %s146, %s148
      %p155 = scmp.eq.s32.totalorder %s33, 1
      %p156 = por %p154, %p155
      %p157 = scmp.ne.s32.totalorder %s148, %s149
      %p158 = scmp.eq.s32.totalorder %s33, 0
      %p159 = por %p157, %p158
      %p160 = scmp.ne.s32.totalorder %s148, %s149
      %p161 = scmp.eq.s32.totalorder %s34, 1
      %p162 = por %p160, %p161
      %p164 = scmp.ne.s32.totalorder %s149, %s163
      %p165 = scmp.eq.s32.totalorder %s34, 0
      %p166 = por %p164, %p165
      %s168 = sadd.s32 %s167, 1
      %p171 = scmp.eq.s32.totalorder %s28, 1
      %p172 = scmp.ne.s32.totalorder %s167, %s169
      %p173 = scmp.eq.s32.totalorder %s28, 0
      %p174 = por %p172, %p173
      %p175 = scmp.ne.s32.totalorder %s167, %s169
      %p176 = scmp.eq.s32.totalorder %s33, 1
      %p177 = por %p175, %p176
      %p178 = scmp.ne.s32.totalorder %s169, %s170
      %p179 = scmp.eq.s32.totalorder %s33, 0
      %p180 = por %p178, %p179
      %p181 = scmp.ne.s32.totalorder %s169, %s170
      %p182 = scmp.eq.s32.totalorder %s34, 1
      %p183 = por %p181, %p182
      %p185 = scmp.ne.s32.totalorder %s170, %s184
      %p186 = scmp.eq.s32.totalorder %s34, 0
      %p187 = por %p185, %p186
      %s189 = sadd.s32 %s188, 1
      %p192 = scmp.eq.s32.totalorder %s28, 1
      %p193 = scmp.ne.s32.totalorder %s188, %s190
      %p194 = scmp.eq.s32.totalorder %s28, 0
      %p195 = por %p193, %p194
      %p196 = scmp.ne.s32.totalorder %s188, %s190
      %p197 = scmp.eq.s32.totalorder %s33, 1
      %p198 = por %p196, %p197
      %p199 = scmp.ne.s32.totalorder %s190, %s191
      %p200 = scmp.eq.s32.totalorder %s33, 0
      %p201 = por %p199, %p200
      %p202 = scmp.ne.s32.totalorder %s190, %s191
      %p203 = scmp.eq.s32.totalorder %s34, 1
      %p204 = por %p202, %p203
      %p206 = scmp.ne.s32.totalorder %s191, %s205
      %p207 = scmp.eq.s32.totalorder %s34, 0
      %p208 = por %p206, %p207
      %s210 = sadd.s32 %s209, 1
      %p213 = scmp.eq.s32.totalorder %s28, 1
      %p214 = scmp.ne.s32.totalorder %s209, %s211
      %p215 = scmp.eq.s32.totalorder %s28, 0
      %p216 = por %p214, %p215
      %p217 = scmp.ne.s32.totalorder %s209, %s211
      %p218 = scmp.eq.s32.totalorder %s33, 1
      %p219 = por %p217, %p218
      %p220 = scmp.ne.s32.totalorder %s211, %s212
      %p221 = scmp.eq.s32.totalorder %s33, 0
      %p222 = por %p220, %p221
      %p223 = scmp.ne.s32.totalorder %s211, %s212
      %p224 = scmp.eq.s32.totalorder %s34, 1
      %p225 = por %p223, %p224
      %p227 = scmp.ne.s32.totalorder %s212, %s226
      %p228 = scmp.eq.s32.totalorder %s34, 0
      %p229 = por %p227, %p228
      %s231 = sadd.s32 %s230, 1
      %p234 = scmp.eq.s32.totalorder %s28, 1
      %p235 = scmp.ne.s32.totalorder %s230, %s232
      %p236 = scmp.eq.s32.totalorder %s28, 0
      %p237 = por %p235, %p236
      %p238 = scmp.ne.s32.totalorder %s230, %s232
      %p239 = scmp.eq.s32.totalorder %s33, 1
      %p240 = por %p238, %p239
      %p241 = scmp.ne.s32.totalorder %s232, %s233
      %p242 = scmp.eq.s32.totalorder %s33, 0
      %p243 = por %p241, %p242
      %p244 = scmp.ne.s32.totalorder %s232, %s233
      %p245 = scmp.eq.s32.totalorder %s34, 1
      %p246 = por %p244, %p245
      %p248 = scmp.ne.s32.totalorder %s233, %s247
      %p249 = scmp.eq.s32.totalorder %s34, 0
      %p250 = por %p248, %p249
      %s252 = sadd.s32 %s251, 1
      %p255 = scmp.eq.s32.totalorder %s28, 1
      %p256 = scmp.ne.s32.totalorder %s251, %s253
      %p257 = scmp.eq.s32.totalorder %s28, 0
      %p258 = por %p256, %p257
      %p259 = scmp.ne.s32.totalorder %s251, %s253
      %p260 = scmp.eq.s32.totalorder %s33, 1
      %p261 = por %p259, %p260
      %p262 = scmp.ne.s32.totalorder %s253, %s254
      %p263 = scmp.eq.s32.totalorder %s33, 0
      %p264 = por %p262, %p263
      %p265 = scmp.ne.s32.totalorder %s253, %s254
      %p266 = scmp.eq.s32.totalorder %s34, 1
      %p267 = por %p265, %p266
      %p269 = scmp.ne.s32.totalorder %s254, %s268
      %p270 = scmp.eq.s32.totalorder %s34, 0
      %p271 = por %p269, %p270
      %s273 = sadd.s32 %s272, 1
      %p276 = scmp.eq.s32.totalorder %s28, 1
      %p277 = scmp.ne.s32.totalorder %s272, %s274
      %p278 = scmp.eq.s32.totalorder %s28, 0
      %p279 = por %p277, %p278
      %p280 = scmp.ne.s32.totalorder %s272, %s274
      %p281 = scmp.eq.s32.totalorder %s33, 1
      %p282 = por %p280, %p281
      %p283 = scmp.ne.s32.totalorder %s274, %s275
      %p284 = scmp.eq.s32.totalorder %s33, 0
      %p285 = por %p283, %p284
      %p286 = scmp.ne.s32.totalorder %s274, %s275
      %p287 = scmp.eq.s32.totalorder %s34, 1
      %p288 = por %p286, %p287
      %p290 = scmp.ne.s32.totalorder %s275, %s289
      %p291 = scmp.eq.s32.totalorder %s34, 0
      %p292 = por %p290, %p291
      %s294 = sadd.s32 %s293, 1
      %p297 = scmp.eq.s32.totalorder %s28, 1
      %p298 = scmp.ne.s32.totalorder %s293, %s295
      %p299 = scmp.eq.s32.totalorder %s28, 0
      %p300 = por %p298, %p299
      %p301 = scmp.ne.s32.totalorder %s293, %s295
      %p302 = scmp.eq.s32.totalorder %s33, 1
      %p303 = por %p301, %p302
      %p304 = scmp.ne.s32.totalorder %s295, %s296
      %p305 = scmp.eq.s32.totalorder %s33, 0
      %p306 = por %p304, %p305
      %p307 = scmp.ne.s32.totalorder %s295, %s296
      %p308 = scmp.eq.s32.totalorder %s34, 1
      %p309 = por %p307, %p308
      %p311 = scmp.ne.s32.totalorder %s296, %s310
      %p312 = scmp.eq.s32.totalorder %s34, 0
      %p313 = por %p311, %p312
      %s314 = ssub.s32 %s28, %s35
      %p315 = scmp.eq.s32.totalorder %s314, 0
      %s317 = sadd.s32 %s316, 1
      %s318 = scalar_select %p315, %s316, %s317
      %p321 = pneg %p315
      %p322 = scmp.eq.s32.totalorder %s28, 1
      %p323 = por %p321, %p322
      %p324 = scmp.ne.s32.totalorder %s316, %s319
      %p325 = scmp.eq.s32.totalorder %s28, 0
      %p326 = por %p324, %p325
      %p327 = scmp.ne.s32.totalorder %s316, %s319
      %p328 = scmp.eq.s32.totalorder %s33, 1
      %p329 = por %p327, %p328
      %p330 = scmp.ne.s32.totalorder %s319, %s320
      %p331 = scmp.eq.s32.totalorder %s33, 0
      %p332 = por %p330, %p331
      %p333 = scmp.ne.s32.totalorder %s319, %s320
      %p334 = scmp.eq.s32.totalorder %s34, 1
      %p335 = por %p333, %p334
      %p337 = scmp.ne.s32.totalorder %s320, %s336
      %p338 = scmp.eq.s32.totalorder %s34, 0
      %p339 = por %p337, %p338
      %p340 = scmp.le.s32.totalorder 1, %s28
      %p341 = scmp.lt.s32.totalorder %s28, 3
      %p342 = pnand %p340, %p341
      %p343 = pneg %p342
      // Predicated region
      $region9: #{tpu_custom_call.1} parent=5 // pred_check
        _
      $region10: #{tpu_custom_call.1} parent=5 // pred_check_branch
        %345 = sbr.rel (%p342) target = $region12
      $region11: #{tpu_custom_call.1} parent=5 // pred_region
        %s346 = ssub.s32 %s28, 1
        // Predicated region
        $region13: #{tpu_custom_call.1} parent=11 // pred_check
          %p347 = pneg %p75
        $region14: #{tpu_custom_call.1} parent=11 // pred_check_branch
          %349 = sbr.rel (%p347) target = $region16
        $region15: #{tpu_custom_call.1} parent=11 // pred_region
          %s351 = ssub.s32 16, 16
          %352 = vsyncadd [#allocation6], %s351
          %s354 = sshll.u32 [#allocation5], 4
          %s355 = int_to_ptr.vmem [resolvable:$true] %s354
          %357 = dma.hbm_to_vmem [thread:$0]  %s1, 16, %s355, [#allocation6]
        $region16: #{tpu_custom_call.1} parent=11 // pred_fallthru
          _
        // Predicated region
        $region17: #{tpu_custom_call.1} parent=11 // pred_check
          %p358 = pneg %p96
        $region18: #{tpu_custom_call.1} parent=11 // pred_check_branch
          %360 = sbr.rel (%p358) target = $region20
        $region19: #{tpu_custom_call.1} parent=11 // pred_region
          %s362 = ssub.s32 16, 16
          %363 = vsyncadd [#allocation6], %s362
          %s365 = sshll.u32 [#allocation7], 4
          %s366 = int_to_ptr.vmem [resolvable:$true] %s365
          %368 = dma.hbm_to_vmem [thread:$0]  %s2, 16, %s366, [#allocation6]
        $region20: #{tpu_custom_call.1} parent=11 // pred_fallthru
          _
        // Predicated region
        $region21: #{tpu_custom_call.1} parent=11 // pred_check
          %p369 = pneg %p117
        $region22: #{tpu_custom_call.1} parent=11 // pred_check_branch
          %371 = sbr.rel (%p369) target = $region24
        $region23: #{tpu_custom_call.1} parent=11 // pred_region
          %s373 = ssub.s32 3072, 3072
          %374 = vsyncadd [#allocation9], %s373
          %s375 = sshll.u32 [#allocation8], 4
          %s376 = int_to_ptr.vmem [resolvable:$true] %s375
          %381 = dma.hbm_to_vmem [thread:$0]  %s3, 3072, %s376, [#allocation9], 192, 192, 12
        $region24: #{tpu_custom_call.1} parent=11 // pred_fallthru
          _
        // Predicated region
        $region25: #{tpu_custom_call.1} parent=11 // pred_check
          %p382 = pneg %p138
        $region26: #{tpu_custom_call.1} parent=11 // pred_check_branch
          %384 = sbr.rel (%p382) target = $region28
        $region27: #{tpu_custom_call.1} parent=11 // pred_region
          _
        $region28: #{tpu_custom_call.1} parent=11 // pred_fallthru
          _
        // Predicated region
        $region29: #{tpu_custom_call.1} parent=11 // pred_check
          %p385 = pneg %p159
        $region30: #{tpu_custom_call.1} parent=11 // pred_check_branch
          %387 = sbr.rel (%p385) target = $region32
        $region31: #{tpu_custom_call.1} parent=11 // pred_region
          %s389 = ssub.s32 1024, 1024
          %390 = vsyncadd [#allocation9], %s389
          %s391 = sshll.u32 [#allocation10], 4
          %s392 = int_to_ptr.vmem [resolvable:$true] %s391
          %397 = dma.hbm_to_vmem [thread:$0]  %s5, 1024, %s392, [#allocation9], 64, 64, 4
        $region32: #{tpu_custom_call.1} parent=11 // pred_fallthru
          _
        // Predicated region
        $region33: #{tpu_custom_call.1} parent=11 // pred_check
          %p398 = pneg %p180
        $region34: #{tpu_custom_call.1} parent=11 // pred_check_branch
          %400 = sbr.rel (%p398) target = $region36
        $region35: #{tpu_custom_call.1} parent=11 // pred_region
          _
        $region36: #{tpu_custom_call.1} parent=11 // pred_fallthru
          _
        // Predicated region
        $region37: #{tpu_custom_call.1} parent=11 // pred_check
          %p401 = pneg %p201
        $region38: #{tpu_custom_call.1} parent=11 // pred_check_branch
          %403 = sbr.rel (%p401) target = $region40
        $region39: #{tpu_custom_call.1} parent=11 // pred_region
          _
        $region40: #{tpu_custom_call.1} parent=11 // pred_fallthru
          _
        // Predicated region
        $region41: #{tpu_custom_call.1} parent=11 // pred_check
          %p404 = pneg %p222
        $region42: #{tpu_custom_call.1} parent=11 // pred_check_branch
          %406 = sbr.rel (%p404) target = $region44
        $region43: #{tpu_custom_call.1} parent=11 // pred_region
          _
        $region44: #{tpu_custom_call.1} parent=11 // pred_fallthru
          _
        // Predicated region
        $region45: #{tpu_custom_call.1} parent=11 // pred_check
          %p407 = pneg %p243
        $region46: #{tpu_custom_call.1} parent=11 // pred_check_branch
          %409 = sbr.rel (%p407) target = $region48
        $region47: #{tpu_custom_call.1} parent=11 // pred_region
          %s411 = ssub.s32 4096, 4096
          %412 = vsyncadd [#allocation12], %s411
          %s413 = sshll.u32 [#allocation11], 4
          %s414 = int_to_ptr.vmem [resolvable:$true] %s413
          %419 = dma.hbm_to_vmem [thread:$0]  %s9, 4096, %s414, [#allocation12], 256, 256, 16
        $region48: #{tpu_custom_call.1} parent=11 // pred_fallthru
          _
        // Predicated region
        $region49: #{tpu_custom_call.1} parent=11 // pred_check
          %p420 = pneg %p264
        $region50: #{tpu_custom_call.1} parent=11 // pred_check_branch
          %422 = sbr.rel (%p420) target = $region52
        $region51: #{tpu_custom_call.1} parent=11 // pred_region
          _
        $region52: #{tpu_custom_call.1} parent=11 // pred_fallthru
          _
        // Predicated region
        $region53: #{tpu_custom_call.1} parent=11 // pred_check
          %p423 = pneg %p285
        $region54: #{tpu_custom_call.1} parent=11 // pred_check_branch
          %425 = sbr.rel (%p423) target = $region56
        $region55: #{tpu_custom_call.1} parent=11 // pred_region
          %s427 = ssub.s32 4096, 4096
          %428 = vsyncadd [#allocation12], %s427
          %s429 = sshll.u32 [#allocation13], 4
          %s430 = int_to_ptr.vmem [resolvable:$true] %s429
          %435 = dma.hbm_to_vmem [thread:$0]  %s11, 4096, %s430, [#allocation12], 64, 64, 4
        $region56: #{tpu_custom_call.1} parent=11 // pred_fallthru
          _
        // Predicated region
        $region57: #{tpu_custom_call.1} parent=11 // pred_check
          %p436 = pneg %p306
        $region58: #{tpu_custom_call.1} parent=11 // pred_check_branch
          %438 = sbr.rel (%p436) target = $region60
        $region59: #{tpu_custom_call.1} parent=11 // pred_region
          _
        $region60: #{tpu_custom_call.1} parent=11 // pred_fallthru
          _
      $region12: #{tpu_custom_call.1} parent=5 // pred_fallthru
        _
      %p439 = scmp.lt.s32.totalorder %s28, 2
      // Predicated region
      $region61: #{tpu_custom_call.1} parent=5 // pred_check
        %p440 = pneg %p439
      $region62: #{tpu_custom_call.1} parent=5 // pred_check_branch
        %442 = sbr.rel (%p440) target = $region64
      $region63: #{tpu_custom_call.1} parent=5 // pred_region
        // Predicated region
        $region65: #{tpu_custom_call.1} parent=63 // pred_check
          %p443 = pneg %p48
        $region66: #{tpu_custom_call.1} parent=63 // pred_check_branch
          %445 = sbr.rel (%p443) target = $region68
        $region67: #{tpu_custom_call.1} parent=63 // pred_region
          %s446 = sand.u32 %s38, 1
          %s447 = scalar_lea.sflag [#allocation3], %s446
          %s448 = sand.u32 %s38, 1
          %s449 = smul.addr %s448, 32
          %s450 = scalar_lea.vmem [#allocation2], %s449
          %s451 = smul.u32 2, %s28
          %s453 = ssub.s32 512, 512
          %454 = vsyncadd %s447, %s453
          %s455 = smul.addr %s451, 2
          %s456 = smul.addr %s455, 128
          %s457 = scalar_lea.hbm %s0, %s456
          %s458 = sshll.u32 %s450, 4
          %s459 = int_to_ptr.vmem [resolvable:$true] %s458
          %464 = dma.hbm_to_vmem [thread:$0]  %s457, 512, %s459, %s447, 128, 128, 8
        $region68: #{tpu_custom_call.1} parent=63 // pred_fallthru
          _
      $region64: #{tpu_custom_call.1} parent=5 // pred_fallthru
        _
      %p465 = scmp.le.s32.totalorder 1, %s28
      %p466 = scmp.lt.s32.totalorder %s28, 3
      %p467 = pnand %p465, %p466
      %p468 = pneg %p467
      // Predicated region
      $region69: #{tpu_custom_call.1} parent=5 // pred_check
        _
      $region70: #{tpu_custom_call.1} parent=5 // pred_check_branch
        %470 = sbr.rel (%p467) target = $region72
      $region71: #{tpu_custom_call.1} parent=5 // pred_region
        %s471 = ssub.s32 %s28, 1
        %s472 = sand.u32 %s41, 1
        %s473 = scalar_lea.sflag [#allocation3], %s472
        %s474 = sand.u32 %s41, 1
        %s475 = smul.addr %s474, 32
        %s476 = scalar_lea.vmem [#allocation2], %s475
        // Predicated region
        $region73: #{tpu_custom_call.1} parent=71 // pred_check
          %p477 = pneg %p54
        $region74: #{tpu_custom_call.1} parent=71 // pred_check_branch
          %479 = sbr.rel (%p477) target = $region76
        $region75: #{tpu_custom_call.1} parent=71 // pred_region
          %480 = dma.done %s473, 512
        $region76: #{tpu_custom_call.1} parent=71 // pred_fallthru
          _
        // Predicated region
        $region77: #{tpu_custom_call.1} parent=71 // pred_check
          %p481 = pneg %p75
        $region78: #{tpu_custom_call.1} parent=71 // pred_check_branch
          %483 = sbr.rel (%p481) target = $region80
        $region79: #{tpu_custom_call.1} parent=71 // pred_region
          %484 = dma.done [#allocation6], 16
        $region80: #{tpu_custom_call.1} parent=71 // pred_fallthru
          _
        // Predicated region
        $region81: #{tpu_custom_call.1} parent=71 // pred_check
          %p485 = pneg %p96
        $region82: #{tpu_custom_call.1} parent=71 // pred_check_branch
          %487 = sbr.rel (%p485) target = $region84
        $region83: #{tpu_custom_call.1} parent=71 // pred_region
          %488 = dma.done [#allocation6], 16
        $region84: #{tpu_custom_call.1} parent=71 // pred_fallthru
          _
        // Predicated region
        $region85: #{tpu_custom_call.1} parent=71 // pred_check
          %p489 = pneg %p117
        $region86: #{tpu_custom_call.1} parent=71 // pred_check_branch
          %491 = sbr.rel (%p489) target = $region88
        $region87: #{tpu_custom_call.1} parent=71 // pred_region
          %492 = dma.done [#allocation9], 3072
        $region88: #{tpu_custom_call.1} parent=71 // pred_fallthru
          _
        // Predicated region
        $region89: #{tpu_custom_call.1} parent=71 // pred_check
          %p493 = pneg %p159
        $region90: #{tpu_custom_call.1} parent=71 // pred_check_branch
          %495 = sbr.rel (%p493) target = $region92
        $region91: #{tpu_custom_call.1} parent=71 // pred_region
          %496 = dma.done [#allocation9], 1024
        $region92: #{tpu_custom_call.1} parent=71 // pred_fallthru
          _
        // Predicated region
        $region93: #{tpu_custom_call.1} parent=71 // pred_check
          %p497 = pneg %p243
        $region94: #{tpu_custom_call.1} parent=71 // pred_check_branch
          %499 = sbr.rel (%p497) target = $region96
        $region95: #{tpu_custom_call.1} parent=71 // pred_region
          %500 = dma.done [#allocation12], 4096
        $region96: #{tpu_custom_call.1} parent=71 // pred_fallthru
          _
        // Predicated region
        $region97: #{tpu_custom_call.1} parent=71 // pred_check
          %p501 = pneg %p285
        $region98: #{tpu_custom_call.1} parent=71 // pred_check_branch
          %503 = sbr.rel (%p501) target = $region100
        $region99: #{tpu_custom_call.1} parent=71 // pred_region
          %504 = dma.done [#allocation12], 4096
        $region100: #{tpu_custom_call.1} parent=71 // pred_fallthru
          _
        %s505 = sand.u32 %s41, 1
        %s506 = scalar_lea.sflag [#allocation3], %s505
        %s507 = sand.u32 %s41, 1
        %s508 = smul.addr %s507, 32
        %s509 = scalar_lea.vmem [#allocation2], %s508
        %p510 = pneg %p54
        %p511 = pneg %p51
        %p512 = pneg %p75
        %p513 = pneg %p72
        %p514 = pneg %p96
        %p515 = pneg %p93
        %p516 = pneg %p117
        %p517 = pneg %p114
        %p518 = pneg %p138
        %p519 = pneg %p135
        %p520 = pneg %p159
        %p521 = pneg %p156
        %p522 = pneg %p180
        %p523 = pneg %p177
        %p524 = pneg %p201
        %p525 = pneg %p198
        %p526 = pneg %p222
        %p527 = pneg %p219
        %p528 = pneg %p243
        %p529 = pneg %p240
        %p530 = pneg %p264
        %p531 = pneg %p261
        %p532 = pneg %p285
        %p533 = pneg %p282
        %p534 = pneg %p306
        %p535 = pneg %p303
        %p536 = pneg %p332
        %p537 = pneg %p329
        %s538 = sand.u32 %s319, 1
        %s539 = scalar_lea.sflag [#allocation4], %s538
        %s540 = sand.u32 %s319, 1
        %s541 = smul.addr %s540, 32
        %s542 = scalar_lea.vmem [#allocation14], %s541
        %s543 = smul.u32 2, %s33
        %s544 = smul.u32 2, %s33
        %v546 = vld [vmem:[%s476] sm:$0xff]
        %v547 = vld [vmem:[%s476 + $0x8] sm:$0xff]
        %v548 = vld [vmem:[%s476 + $0x10] sm:$0xff]
        %v549 = vld [vmem:[%s476 + $0x18] sm:$0xff]
        %v550 = vld [vmem:[#allocation5] sm:$0x1]
        %v551 = vld [vmem:[#allocation7] sm:$0x1]
        %552 = vadd.xlane.f32.xlu0 %v546
        %v553 = vpop.xlane.xlu0 %552
        %554 = vadd.xlane.f32.xlu0 %v547
        %v555 = vpop.xlane.xlu0 %554
        %556 = vadd.xlane.f32.xlu0 %v548
        %v557 = vpop.xlane.xlu0 %556
        %558 = vadd.xlane.f32.xlu0 %v549
        %v559 = vpop.xlane.xlu0 %558
        %v560 = vrcp.pop 128.0
        %v561 = vmul.f32 %v553, %v560
        %v562 = vmul.f32 %v555, %v560
        %v563 = vmul.f32 %v557, %v560
        %v564 = vmul.f32 %v559, %v560
        %v565 = vsub.f32 %v546, %v561
        %v566 = vsub.f32 %v547, %v562
        %v567 = vsub.f32 %v548, %v563
        %v568 = vsub.f32 %v549, %v564
        %v569 = vmul.f32 %v565, %v565
        %v570 = vmul.f32 %v566, %v566
        %v571 = vmul.f32 %v567, %v567
        %v572 = vmul.f32 %v568, %v568
        %573 = vadd.xlane.f32.xlu0 %v569
        %v574 = vpop.xlane.xlu0 %573
        %575 = vadd.xlane.f32.xlu0 %v570
        %v576 = vpop.xlane.xlu0 %575
        %577 = vadd.xlane.f32.xlu0 %v571
        %v578 = vpop.xlane.xlu0 %577
        %579 = vadd.xlane.f32.xlu0 %v572
        %v580 = vpop.xlane.xlu0 %579
        %v581 = vmul.f32 %v574, %v560
        %v582 = vmul.f32 %v576, %v560
        %v583 = vmul.f32 %v578, %v560
        %v584 = vmul.f32 %v580, %v560
        %v585 = vadd.f32 %v581, 1e-05
        %v586 = vadd.f32 %v582, 1e-05
        %v587 = vadd.f32 %v583, 1e-05
        %v588 = vadd.f32 %v584, 1e-05
        %v589 = vrsqrt.pop %v585
        %v590 = vrsqrt.pop %v586
        %v591 = vrsqrt.pop %v587
        %v592 = vrsqrt.pop %v588
        %v593 = vmul.f32 %v565, %v589
        %v594 = vmul.f32 %v566, %v590
        %v595 = vmul.f32 %v567, %v591
        %v596 = vmul.f32 %v568, %v592
        %v598 = vlaneseq
        %v599 = vshrl.u32 %v598, 7
        %v600 = vsub.s32 0, %v599
        %v601 = vrot.slane %v550, %v600
        %v603 = vmul.f32 %v593, %v601
        %v604 = vmul.f32 %v594, %v601
        %v605 = vmul.f32 %v595, %v601
        %v606 = vmul.f32 %v596, %v601
        %v608 = vlaneseq
        %v609 = vshrl.u32 %v608, 7
        %v610 = vsub.s32 0, %v609
        %v611 = vrot.slane %v551, %v610
        %v613 = vadd.f32 %v603, %v611
        %v614 = vadd.f32 %v604, %v611
        %v615 = vadd.f32 %v605, %v611
        %v616 = vadd.f32 %v606, %v611
        %v617 = vpack.c.bf16 %v614, %v613
        %v618 = vpack.c.bf16 %v616, %v615
        %v619 = vld [vmem:[#allocation8] sm:$0xff]
        %v620 = vld [vmem:[#allocation8 + $0x8] sm:$0xf]
        %v621 = vld [vmem:[#allocation8 + $0xc] sm:$0xff]
        %v622 = vld [vmem:[#allocation8 + $0x14] sm:$0xf]
        %v623 = vld [vmem:[#allocation8 + $0x18] sm:$0xff]
        %v624 = vld [vmem:[#allocation8 + $0x20] sm:$0xf]
        %v625 = vld [vmem:[#allocation8 + $0x24] sm:$0xff]
        %v626 = vld [vmem:[#allocation8 + $0x2c] sm:$0xf]
        %v627 = vld [vmem:[#allocation8 + $0x30] sm:$0xff]
        %v628 = vld [vmem:[#allocation8 + $0x38] sm:$0xf]
        %v629 = vld [vmem:[#allocation8 + $0x3c] sm:$0xff]
        %v630 = vld [vmem:[#allocation8 + $0x44] sm:$0xf]
        %v631 = vld [vmem:[#allocation8 + $0x48] sm:$0xff]
        %v632 = vld [vmem:[#allocation8 + $0x50] sm:$0xf]
        %v633 = vld [vmem:[#allocation8 + $0x54] sm:$0xff]
        %v634 = vld [vmem:[#allocation8 + $0x5c] sm:$0xf]
        %v635 = vld [vmem:[#allocation8 + $0x60] sm:$0xff]
        %v636 = vld [vmem:[#allocation8 + $0x68] sm:$0xf]
        %v637 = vld [vmem:[#allocation8 + $0x6c] sm:$0xff]
        %v638 = vld [vmem:[#allocation8 + $0x74] sm:$0xf]
        %v639 = vld [vmem:[#allocation8 + $0x78] sm:$0xff]
        %v640 = vld [vmem:[#allocation8 + $0x80] sm:$0xf]
        %v641 = vld [vmem:[#allocation8 + $0x84] sm:$0xff]
        %v642 = vld [vmem:[#allocation8 + $0x8c] sm:$0xf]
        %v643 = vld [vmem:[#allocation8 + $0x90] sm:$0xff]
        %v644 = vld [vmem:[#allocation8 + $0x98] sm:$0xf]
        %v645 = vld [vmem:[#allocation8 + $0x9c] sm:$0xff]
        %v646 = vld [vmem:[#allocation8 + $0xa4] sm:$0xf]
        %v647 = vld [vmem:[#allocation8 + $0xa8] sm:$0xff]
        %v648 = vld [vmem:[#allocation8 + $0xb0] sm:$0xf]
        %v649 = vld [vmem:[#allocation8 + $0xb4] sm:$0xff]
        %v650 = vld [vmem:[#allocation8 + $0xbc] sm:$0xf]
        %v651 = vld [vmem:[%s4] sm:$0x7]
        %v653 = vlaneseq
        %v654 = vshrl.u32 %v653, 7
        %v655 = vsub.s32 0, %v654
        %v656 = vrot.slane %v651, %v655
        %v657 = vlaneseq
        %v658 = vshrl.u32 %v657, 7
        %v659 = vsub.s32 1, %v658
        %v660 = vrot.slane %v651, %v659
        %v661 = vlaneseq
        %v662 = vshrl.u32 %v661, 7
        %v663 = vsub.s32 2, %v662
        %v664 = vrot.slane %v651, %v663
        %v700 = vunpack.c.l.b16 %v619
        %v701 = vunpack.c.h.b16 %v619
        %v702 = vunpack.c.l.b16 %v620
        %v703 = vunpack.c.l.b16 %v621
        %v704 = vunpack.c.h.b16 %v621
        %v705 = vunpack.c.l.b16 %v622
        %v706 = vunpack.c.l.b16 %v623
        %v707 = vunpack.c.h.b16 %v623
        %v708 = vunpack.c.l.b16 %v624
        %v709 = vunpack.c.l.b16 %v625
        %v710 = vunpack.c.h.b16 %v625
        %v711 = vunpack.c.l.b16 %v626
        %v712 = vunpack.c.l.b16 %v627
        %v713 = vunpack.c.h.b16 %v627
        %v714 = vunpack.c.l.b16 %v628
        %v715 = vunpack.c.l.b16 %v629
        %v716 = vunpack.c.h.b16 %v629
        %v717 = vunpack.c.l.b16 %v630
        %v718 = vunpack.c.l.b16 %v631
        %v719 = vunpack.c.h.b16 %v631
        %v720 = vunpack.c.l.b16 %v632
        %v721 = vunpack.c.l.b16 %v633
        %v722 = vunpack.c.h.b16 %v633
        %v723 = vunpack.c.l.b16 %v634
        %v724 = vunpack.c.l.b16 %v635
        %v725 = vunpack.c.h.b16 %v635
        %v726 = vunpack.c.l.b16 %v636
        %v727 = vunpack.c.l.b16 %v637
        %v728 = vunpack.c.h.b16 %v637
        %v729 = vunpack.c.l.b16 %v638
        %v730 = vunpack.c.l.b16 %v639
        %v731 = vunpack.c.h.b16 %v639
        %v732 = vunpack.c.l.b16 %v640
        %v733 = vunpack.c.l.b16 %v641
        %v734 = vunpack.c.h.b16 %v641
        %v735 = vunpack.c.l.b16 %v642
        %v736 = vunpack.c.l.b16 %v643
        %v737 = vunpack.c.h.b16 %v643
        %v738 = vunpack.c.l.b16 %v644
        %v739 = vunpack.c.l.b16 %v645
        %v740 = vunpack.c.h.b16 %v645
        %v741 = vunpack.c.l.b16 %v646
        %v742 = vunpack.c.l.b16 %v647
        %v743 = vunpack.c.h.b16 %v647
        %v744 = vunpack.c.l.b16 %v648
        %v745 = vunpack.c.l.b16 %v649
        %v746 = vunpack.c.h.b16 %v649
        %v747 = vunpack.c.l.b16 %v650
        %v748 = vpack.c.b16 %v703, %v700
        %v749 = vpack.c.b16 %v704, %v701
        %v750 = vpack.c.b16 %v705, %v702
        %v751 = vpack.c.b16 %v709, %v706
        %v752 = vpack.c.b16 %v710, %v707
        %v753 = vpack.c.b16 %v711, %v708
        %v754 = vpack.c.b16 %v715, %v712
        %v755 = vpack.c.b16 %v716, %v713
        %v756 = vpack.c.b16 %v717, %v714
        %v757 = vpack.c.b16 %v721, %v718
        %v758 = vpack.c.b16 %v722, %v719
        %v759 = vpack.c.b16 %v723, %v720
        %v760 = vpack.c.b16 %v727, %v724
        %v761 = vpack.c.b16 %v728, %v725
        %v762 = vpack.c.b16 %v729, %v726
        %v763 = vpack.c.b16 %v733, %v730
        %v764 = vpack.c.b16 %v734, %v731
        %v765 = vpack.c.b16 %v735, %v732
        %v766 = vpack.c.b16 %v739, %v736
        %v767 = vpack.c.b16 %v740, %v737
        %v768 = vpack.c.b16 %v741, %v738
        %v769 = vpack.c.b16 %v745, %v742
        %v770 = vpack.c.b16 %v746, %v743
        %v771 = vpack.c.b16 %v747, %v744
        %796 = vmatprep.subr.bf16.mxu0 %v749
        %797 = vmatpush1.bf16.msra.mxu0 %v748
        %798 = vmatprep.subr.bf16.mxu0 %v752
        %799 = vmatpush1.bf16.msra.mxu0 %v751
        %800 = vmatprep.subr.bf16.mxu0 %v755
        %801 = vmatpush1.bf16.msra.mxu0 %v754
        %802 = vmatprep.subr.bf16.mxu0 %v758
        %803 = vmatpush1.bf16.msra.mxu0 %v757
        %804 = vmatprep.subr.bf16.mxu0 %v761
        %805 = vmatpush1.bf16.msra.mxu0 %v760
        %806 = vmatprep.subr.bf16.mxu0 %v764
        %807 = vmatpush1.bf16.msra.mxu0 %v763
        %808 = vmatprep.subr.bf16.mxu0 %v767
        %809 = vmatpush1.bf16.msra.mxu0 %v766
        %810 = vmatprep.subr.bf16.mxu0 %v770
        %811 = vmatpush1.bf16.msra.mxu0 %v769
        %812 = vmatprep.subr.bf16.mxu0 0
        %813 = vmatpush1.bf16.msra.mxu0 0
        %814 = vmatprep.subr.bf16.mxu0 0
        %815 = vmatpush1.bf16.msra.mxu0 0
        %816 = vmatprep.subr.bf16.mxu0 0
        %817 = vmatpush1.bf16.msra.mxu0 0
        %818 = vmatprep.subr.bf16.mxu0 0
        %819 = vmatpush1.bf16.msra.mxu0 0
        %820 = vmatprep.subr.bf16.mxu0 0
        %821 = vmatpush1.bf16.msra.mxu0 0
        %822 = vmatprep.subr.bf16.mxu0 0
        %823 = vmatpush1.bf16.msra.mxu0 0
        %824 = vmatprep.subr.bf16.mxu0 0
        %825 = vmatpush1.bf16.msra.mxu0 0
        %826 = vmatprep.subr.bf16.mxu0 0
        %827 = vmatpush1.bf16.msra.mxu0 0
        %828 = vmatprep.mubr.bf16.mxu0 0
        %829 = vmatmul.mubr.bf16.gmra.mrb[0].mxu0 %v617
        %v830 = vpop.f32.mrb[0].mxu0
        %v831 = vadd.f32 %v656, %v830
        %v832 = vpop.f32.mrb[0].mxu0
        %v833 = vadd.f32 %v660, %v832
        %v834 = vpop.f32.mrb[0].mxu0
        %v835 = vadd.f32 %v656, %v834
        %v836 = vpop.f32.mrb[0].mxu0
        %v837 = vadd.f32 %v660, %v836
        %838 = vmatprep.mubr.bf16.mxu0 0
        %839 = vmatmul.mubr.bf16.gmra.mrb[0].mxu0 %v618
        %v840 = vpop.f32.mrb[0].mxu0
        %v841 = vadd.f32 %v656, %v840
        %v842 = vpop.f32.mrb[0].mxu0
        %v843 = vadd.f32 %v660, %v842
        %v844 = vpop.f32.mrb[0].mxu0
        %v845 = vadd.f32 %v656, %v844
        %v846 = vpop.f32.mrb[0].mxu0
        %v847 = vadd.f32 %v660, %v846
        %848 = vdwg.mxu0
        %849 = vmatprep.subr.bf16.mxu0 0
        %850 = vmatpush1.bf16.msra.mxu0 %v750
        %851 = vmatprep.subr.bf16.mxu0 0
        %852 = vmatpush1.bf16.msra.mxu0 %v753
        %853 = vmatprep.subr.bf16.mxu0 0
        %854 = vmatpush1.bf16.msra.mxu0 %v756
        %855 = vmatprep.subr.bf16.mxu0 0
        %856 = vmatpush1.bf16.msra.mxu0 %v759
        %857 = vmatprep.subr.bf16.mxu0 0
        %858 = vmatpush1.bf16.msra.mxu0 %v762
        %859 = vmatprep.subr.bf16.mxu0 0
        %860 = vmatpush1.bf16.msra.mxu0 %v765
        %861 = vmatprep.subr.bf16.mxu0 0
        %862 = vmatpush1.bf16.msra.mxu0 %v768
        %863 = vmatprep.subr.bf16.mxu0 0
        %864 = vmatpush1.bf16.msra.mxu0 %v771
        %865 = vmatprep.subr.bf16.mxu0 0
        %866 = vmatpush1.bf16.msra.mxu0 0
        %867 = vmatprep.subr.bf16.mxu0 0
        %868 = vmatpush1.bf16.msra.mxu0 0
        %869 = vmatprep.subr.bf16.mxu0 0
        %870 = vmatpush1.bf16.msra.mxu0 0
        %871 = vmatprep.subr.bf16.mxu0 0
        %872 = vmatpush1.bf16.msra.mxu0 0
        %873 = vmatprep.subr.bf16.mxu0 0
        %874 = vmatpush1.bf16.msra.mxu0 0
        %875 = vmatprep.subr.bf16.mxu0 0
        %876 = vmatpush1.bf16.msra.mxu0 0
        %877 = vmatprep.subr.bf16.mxu0 0
        %878 = vmatpush1.bf16.msra.mxu0 0
        %879 = vmatprep.subr.bf16.mxu0 0
        %880 = vmatpush1.bf16.msra.mxu0 0
        %881 = vmatprep.mubr.bf16.mxu0 0
        %882 = vmatmul.mubr.bf16.gmra.mrb[0].mxu0 %v617
        %v883 = vpop.f32.mrb[0].mxu0
        %v884 = vadd.f32 %v664, %v883
        %v885 = vpop.f32.mrb[0].mxu0
        %v886 = vpop.f32.mrb[0].mxu0
        %v887 = vadd.f32 %v664, %v886
        %v888 = vpop.f32.mrb[0].mxu0
        %889 = vmatprep.mubr.bf16.mxu0 0
        %890 = vmatmul.mubr.bf16.gmra.mrb[0].mxu0 %v618
        %v891 = vpop.f32.mrb[0].mxu0
        %v892 = vadd.f32 %v664, %v891
        %v893 = vpop.f32.mrb[0].mxu0
        %v894 = vpop.f32.mrb[0].mxu0
        %v895 = vadd.f32 %v664, %v894
        %v896 = vpop.f32.mrb[0].mxu0
        %897 = vdwg.mxu0
        %v898 = vlaneseq
        %v899 = vshrl.u32 %v898, 7
        %v900 = vadd.s32 %v899, 8
        %v901 = vlaneseq
        %v902 = vand.u32 %v901, 127
        %vm903 = vcmp.gt.s32.totalorder %v902, %v899
        %vm904 = vcmp.gt.s32.totalorder %v902, %v900
        %v905 = vsel %vm903, -1e+30, 0.0
        %v906 = vsel %vm904, -1e+30, 0.0
        %v907 = vld [vmem:[#allocation10] sm:$0xf]
        %v908 = vld [vmem:[#allocation10 + $0x4] sm:$0xf]
        %v909 = vld [vmem:[#allocation10 + $0x8] sm:$0xf]
        %v910 = vld [vmem:[#allocation10 + $0xc] sm:$0xf]
        %v911 = vld [vmem:[#allocation10 + $0x10] sm:$0xf]
        %v912 = vld [vmem:[#allocation10 + $0x14] sm:$0xf]
        %v913 = vld [vmem:[#allocation10 + $0x18] sm:$0xf]
        %v914 = vld [vmem:[#allocation10 + $0x1c] sm:$0xf]
        %v915 = vld [vmem:[#allocation10 + $0x20] sm:$0xf]
        %v916 = vld [vmem:[#allocation10 + $0x24] sm:$0xf]
        %v917 = vld [vmem:[#allocation10 + $0x28] sm:$0xf]
        %v918 = vld [vmem:[#allocation10 + $0x2c] sm:$0xf]
        %v919 = vld [vmem:[#allocation10 + $0x30] sm:$0xf]
        %v920 = vld [vmem:[#allocation10 + $0x34] sm:$0xf]
        %v921 = vld [vmem:[#allocation10 + $0x38] sm:$0xf]
        %v922 = vld [vmem:[#allocation10 + $0x3c] sm:$0xf]
        %v923 = vpack.c.bf16 %v835, %v831
        %v924 = vpack.c.bf16 %v845, %v841
        %v925 = vpack.c.bf16 %v837, %v833
        %v926 = vpack.c.bf16 %v847, %v843
        %v927 = vpack.c.bf16 %v887, %v884
        %v928 = vpack.c.bf16 %v895, %v892
        %vm929 = vcmask 261120
        %v931 = vsel %vm929, %v923, 0
        %v934 = vsel %vm929, %v925, 0
        %936 = vmatprep.subr.bf16.mxu0 0
        %937 = vmatpush1.bf16.xpose.msra.mxu0 %v934
        %938 = vmatprep.subr.bf16.mxu0 0
        %939 = vmatpush1.bf16.xpose.msra.mxu0 0
        %940 = vmatprep.subr.bf16.mxu0 0
        %941 = vmatpush1.bf16.xpose.msra.mxu0 0
        %942 = vmatprep.subr.bf16.mxu0 0
        %943 = vmatpush1.bf16.xpose.msra.mxu0 0
        %944 = vmatprep.subr.bf16.mxu0 0
        %945 = vmatpush1.bf16.xpose.msra.mxu0 0
        %946 = vmatprep.subr.bf16.mxu0 0
        %947 = vmatpush1.bf16.xpose.msra.mxu0 0
        %948 = vmatprep.subr.bf16.mxu0 0
        %949 = vmatpush1.bf16.xpose.msra.mxu0 0
        %950 = vmatprep.subr.bf16.mxu0 0
        %951 = vmatpush1.bf16.xpose.msra.mxu0 0
        %952 = vmatprep.subr.bf16.mxu0 0
        %953 = vmatpush1.bf16.xpose.msra.mxu0 0
        %954 = vmatprep.subr.bf16.mxu0 0
        %955 = vmatpush1.bf16.xpose.msra.mxu0 0
        %956 = vmatprep.subr.bf16.mxu0 0
        %957 = vmatpush1.bf16.xpose.msra.mxu0 0
        %958 = vmatprep.subr.bf16.mxu0 0
        %959 = vmatpush1.bf16.xpose.msra.mxu0 0
        %960 = vmatprep.subr.bf16.mxu0 0
        %961 = vmatpush1.bf16.xpose.msra.mxu0 0
        %962 = vmatprep.subr.bf16.mxu0 0
        %963 = vmatpush1.bf16.xpose.msra.mxu0 0
        %964 = vmatprep.subr.bf16.mxu0 0
        %965 = vmatpush1.bf16.xpose.msra.mxu0 0
        %966 = vmatprep.subr.bf16.mxu0 0
        %967 = vmatpush1.bf16.xpose.msra.mxu0 0
        %968 = vmatprep.mubr.bf16.mxu0 0
        %969 = vmatmul.mubr.bf16.gmra.mrb[0].mxu0 %v931
        %v970 = vpop.f32.mrb[0].mxu0
        %v971 = vadd.f32 %v905, %v970
        %v972 = vpop.f32.mrb[0].mxu0
        %v973 = vpop.f32.mrb[0].mxu0
        %v974 = vadd.f32 %v906, %v973
        %v975 = vpop.f32.mrb[0].mxu0
        %976 = vdwg.mxu0
        %v978 = vsel %vm929, %v924, 0
        %v981 = vsel %vm929, %v926, 0
        %983 = vmatprep.subr.bf16.mxu0 0
        %984 = vmatpush1.bf16.xpose.msra.mxu0 %v981
        %985 = vmatprep.subr.bf16.mxu0 0
        %986 = vmatpush1.bf16.xpose.msra.mxu0 0
        %987 = vmatprep.subr.bf16.mxu0 0
        %988 = vmatpush1.bf16.xpose.msra.mxu0 0
        %989 = vmatprep.subr.bf16.mxu0 0
        %990 = vmatpush1.bf16.xpose.msra.mxu0 0
        %991 = vmatprep.subr.bf16.mxu0 0
        %992 = vmatpush1.bf16.xpose.msra.mxu0 0
        %993 = vmatprep.subr.bf16.mxu0 0
        %994 = vmatpush1.bf16.xpose.msra.mxu0 0
        %995 = vmatprep.subr.bf16.mxu0 0
        %996 = vmatpush1.bf16.xpose.msra.mxu0 0
        %997 = vmatprep.subr.bf16.mxu0 0
        %998 = vmatpush1.bf16.xpose.msra.mxu0 0
        %999 = vmatprep.subr.bf16.mxu0 0
        %1000 = vmatpush1.bf16.xpose.msra.mxu0 0
        %1001 = vmatprep.subr.bf16.mxu0 0
        %1002 = vmatpush1.bf16.xpose.msra.mxu0 0
        %1003 = vmatprep.subr.bf16.mxu0 0
        %1004 = vmatpush1.bf16.xpose.msra.mxu0 0
        %1005 = vmatprep.subr.bf16.mxu0 0
        %1006 = vmatpush1.bf16.xpose.msra.mxu0 0
        %1007 = vmatprep.subr.bf16.mxu0 0
        %1008 = vmatpush1.bf16.xpose.msra.mxu0 0
        %1009 = vmatprep.subr.bf16.mxu0 0
        %1010 = vmatpush1.bf16.xpose.msra.mxu0 0
        %1011 = vmatprep.subr.bf16.mxu0 0
        %1012 = vmatpush1.bf16.xpose.msra.mxu0 0
        %1013 = vmatprep.subr.bf16.mxu0 0
        %1014 = vmatpush1.bf16.xpose.msra.mxu0 0
        %1015 = vmatprep.mubr.bf16.mxu0 0
        %1016 = vmatmul.mubr.bf16.gmra.mrb[0].mxu0 %v978
        %v1017 = vpop.f32.mrb[0].mxu0
        %v1018 = vadd.f32 %v905, %v1017
        %v1019 = vpop.f32.mrb[0].mxu0
        %v1020 = vpop.f32.mrb[0].mxu0
        %v1021 = vadd.f32 %v906, %v1020
        %v1022 = vpop.f32.mrb[0].mxu0
        %1023 = vdwg.mxu0
        %vm1024 = vcmask 130048
        %v1025 = vsel %vm1024, %v971, -inf
        %1026 = vmax.xlane.f32.xlu0 %v1025
        %v1027 = vpop.xlane.xlu0 %1026
        %v1028 = vsel %vm1024, %v974, -inf
        %1029 = vmax.xlane.f32.xlu0 %v1028
        %v1030 = vpop.xlane.xlu0 %1029
        %v1031 = vsel %vm1024, %v1018, -inf
        %1032 = vmax.xlane.f32.xlu0 %v1031
        %v1033 = vpop.xlane.xlu0 %1032
        %v1034 = vsel %vm1024, %v1021, -inf
        %1035 = vmax.xlane.f32.xlu0 %v1034
        %v1036 = vpop.xlane.xlu0 %1035
        %v1037 = vsub.f32 %v971, %v1027
        %v1038 = vsub.f32 %v974, %v1030
        %v1039 = vsub.f32 %v1018, %v1033
        %v1040 = vsub.f32 %v1021, %v1036
        %v1041 = vmul.f32 %v1037, 1.442695
        %v1042 = vpow.pop %v1041
        %v1043 = vmul.f32 %v1038, 1.442695
        %v1044 = vpow.pop %v1043
        %v1045 = vmul.f32 %v1039, 1.442695
        %v1046 = vpow.pop %v1045
        %v1047 = vmul.f32 %v1040, 1.442695
        %v1048 = vpow.pop %v1047
        %v1049 = vsel %vm1024, %v1042, 0.0
        %1050 = vadd.xlane.f32.xlu0 %v1049
        %v1051 = vpop.xlane.xlu0 %1050
        %v1052 = vsel %vm1024, %v1044, 0.0
        %1053 = vadd.xlane.f32.xlu0 %v1052
        %v1054 = vpop.xlane.xlu0 %1053
        %v1055 = vsel %vm1024, %v1046, 0.0
        %1056 = vadd.xlane.f32.xlu0 %v1055
        %v1057 = vpop.xlane.xlu0 %1056
        %v1058 = vsel %vm1024, %v1048, 0.0
        %1059 = vadd.xlane.f32.xlu0 %v1058
        %v1060 = vpop.xlane.xlu0 %1059
        %v1061 = vrcp.pop %v1051
        %v1062 = vrcp.pop %v1054
        %v1063 = vrcp.pop %v1057
        %v1064 = vrcp.pop %v1060
        %v1065 = vmul.f32 %v1042, %v1061
        %v1066 = vmul.f32 %v1044, %v1062
        %v1067 = vmul.f32 %v1046, %v1063
        %v1068 = vmul.f32 %v1048, %v1064
        %v1069 = vpack.c.bf16 %v1066, %v1065
        %v1070 = vpack.c.bf16 %v1068, %v1067
        %v1072 = vsel %vm1024, %v1069, 0
        %1074 = vmatprep.subr.bf16.mxu0 0
        %1075 = vmatpush1.bf16.msra.mxu0 %v927
        %1076 = vmatprep.subr.bf16.mxu0 0
        %1077 = vmatpush1.bf16.msra.mxu0 0
        %1078 = vmatprep.subr.bf16.mxu0 0
        %1079 = vmatpush1.bf16.msra.mxu0 0
        %1080 = vmatprep.subr.bf16.mxu0 0
        %1081 = vmatpush1.bf16.msra.mxu0 0
        %1082 = vmatprep.subr.bf16.mxu0 0
        %1083 = vmatpush1.bf16.msra.mxu0 0
        %1084 = vmatprep.subr.bf16.mxu0 0
        %1085 = vmatpush1.bf16.msra.mxu0 0
        %1086 = vmatprep.subr.bf16.mxu0 0
        %1087 = vmatpush1.bf16.msra.mxu0 0
        %1088 = vmatprep.subr.bf16.mxu0 0
        %1089 = vmatpush1.bf16.msra.mxu0 0
        %1090 = vmatprep.subr.bf16.mxu0 0
        %1091 = vmatpush1.bf16.msra.mxu0 0
        %1092 = vmatprep.subr.bf16.mxu0 0
        %1093 = vmatpush1.bf16.msra.mxu0 0
        %1094 = vmatprep.subr.bf16.mxu0 0
        %1095 = vmatpush1.bf16.msra.mxu0 0
        %1096 = vmatprep.subr.bf16.mxu0 0
        %1097 = vmatpush1.bf16.msra.mxu0 0
        %1098 = vmatprep.subr.bf16.mxu0 0
        %1099 = vmatpush1.bf16.msra.mxu0 0
        %1100 = vmatprep.subr.bf16.mxu0 0
        %1101 = vmatpush1.bf16.msra.mxu0 0
        %1102 = vmatprep.subr.bf16.mxu0 0
        %1103 = vmatpush1.bf16.msra.mxu0 0
        %1104 = vmatprep.subr.bf16.mxu0 0
        %1105 = vmatpush1.bf16.msra.mxu0 0
        %1106 = vmatprep.mubr.bf16.mxu0 0
        %1107 = vmatmul.mubr.bf16.gmra.mrb[0].mxu0 %v1072
        %v1108 = vpop.f32.mrb[0].mxu0
        %v1109 = vadd.f32 0.0, %v1108
        %v1110 = vpop.f32.mrb[0].mxu0
        %v1111 = vpop.f32.mrb[0].mxu0
        %v1112 = vadd.f32 0.0, %v1111
        %v1113 = vpop.f32.mrb[0].mxu0
        %1114 = vdwg.mxu0
        %v1116 = vsel %vm1024, %v1070, 0
        %1118 = vmatprep.subr.bf16.mxu0 0
        %1119 = vmatpush1.bf16.msra.mxu0 %v928
        %1120 = vmatprep.subr.bf16.mxu0 0
        %1121 = vmatpush1.bf16.msra.mxu0 0
        %1122 = vmatprep.subr.bf16.mxu0 0
        %1123 = vmatpush1.bf16.msra.mxu0 0
        %1124 = vmatprep.subr.bf16.mxu0 0
        %1125 = vmatpush1.bf16.msra.mxu0 0
        %1126 = vmatprep.subr.bf16.mxu0 0
        %1127 = vmatpush1.bf16.msra.mxu0 0
        %1128 = vmatprep.subr.bf16.mxu0 0
        %1129 = vmatpush1.bf16.msra.mxu0 0
        %1130 = vmatprep.subr.bf16.mxu0 0
        %1131 = vmatpush1.bf16.msra.mxu0 0
        %1132 = vmatprep.subr.bf16.mxu0 0
        %1133 = vmatpush1.bf16.msra.mxu0 0
        %1134 = vmatprep.subr.bf16.mxu0 0
        %1135 = vmatpush1.bf16.msra.mxu0 0
        %1136 = vmatprep.subr.bf16.mxu0 0
        %1137 = vmatpush1.bf16.msra.mxu0 0
        %1138 = vmatprep.subr.bf16.mxu0 0
        %1139 = vmatpush1.bf16.msra.mxu0 0
        %1140 = vmatprep.subr.bf16.mxu0 0
        %1141 = vmatpush1.bf16.msra.mxu0 0
        %1142 = vmatprep.subr.bf16.mxu0 0
        %1143 = vmatpush1.bf16.msra.mxu0 0
        %1144 = vmatprep.subr.bf16.mxu0 0
        %1145 = vmatpush1.bf16.msra.mxu0 0
        %1146 = vmatprep.subr.bf16.mxu0 0
        %1147 = vmatpush1.bf16.msra.mxu0 0
        %1148 = vmatprep.subr.bf16.mxu0 0
        %1149 = vmatpush1.bf16.msra.mxu0 0
        %1150 = vmatprep.mubr.bf16.mxu0 0
        %1151 = vmatmul.mubr.bf16.gmra.mrb[0].mxu0 %v1116
        %v1152 = vpop.f32.mrb[0].mxu0
        %v1153 = vadd.f32 0.0, %v1152
        %v1154 = vpop.f32.mrb[0].mxu0
        %v1155 = vpop.f32.mrb[0].mxu0
        %v1156 = vadd.f32 0.0, %v1155
        %v1157 = vpop.f32.mrb[0].mxu0
        %1158 = vdwg.mxu0
        %v1159 = vpack.c.bf16 %v1112, %v1109
        %v1160 = vpack.c.bf16 %v1156, %v1153
        %1162 = vrot.lane.b32.xlu0 %v923, 96
        %v1163 = vpop.permute.xlu0 %1162
        %1165 = vrot.lane.b32.xlu0 %v925, 96
        %v1166 = vpop.permute.xlu0 %1165
        %v1168 = vsel %vm929, %v1163, 0
        %v1171 = vsel %vm929, %v1166, 0
        %1173 = vmatprep.subr.bf16.mxu0 0
        %1174 = vmatpush1.bf16.xpose.msra.mxu0 %v1171
        %1175 = vmatprep.subr.bf16.mxu0 0
        %1176 = vmatpush1.bf16.xpose.msra.mxu0 0
        %1177 = vmatprep.subr.bf16.mxu0 0
        %1178 = vmatpush1.bf16.xpose.msra.mxu0 0
        %1179 = vmatprep.subr.bf16.mxu0 0
        %1180 = vmatpush1.bf16.xpose.msra.mxu0 0
        %1181 = vmatprep.subr.bf16.mxu0 0
        %1182 = vmatpush1.bf16.xpose.msra.mxu0 0
        %1183 = vmatprep.subr.bf16.mxu0 0
        %1184 = vmatpush1.bf16.xpose.msra.mxu0 0
        %1185 = vmatprep.subr.bf16.mxu0 0
        %1186 = vmatpush1.bf16.xpose.msra.mxu0 0
        %1187 = vmatprep.subr.bf16.mxu0 0
        %1188 = vmatpush1.bf16.xpose.msra.mxu0 0
        %1189 = vmatprep.subr.bf16.mxu0 0
        %1190 = vmatpush1.bf16.xpose.msra.mxu0 0
        %1191 = vmatprep.subr.bf16.mxu0 0
        %1192 = vmatpush1.bf16.xpose.msra.mxu0 0
        %1193 = vmatprep.subr.bf16.mxu0 0
        %1194 = vmatpush1.bf16.xpose.msra.mxu0 0
        %1195 = vmatprep.subr.bf16.mxu0 0
        %1196 = vmatpush1.bf16.xpose.msra.mxu0 0
        %1197 = vmatprep.subr.bf16.mxu0 0
        %1198 = vmatpush1.bf16.xpose.msra.mxu0 0
        %1199 = vmatprep.subr.bf16.mxu0 0
        %1200 = vmatpush1.bf16.xpose.msra.mxu0 0
        %1201 = vmatprep.subr.bf16.mxu0 0
        %1202 = vmatpush1.bf16.xpose.msra.mxu0 0
        %1203 = vmatprep.subr.bf16.mxu0 0
        %1204 = vmatpush1.bf16.xpose.msra.mxu0 0
        %1205 = vmatprep.mubr.bf16.mxu0 0
        %1206 = vmatmul.mubr.bf16.gmra.mrb[0].mxu0 %v1168
        %v1207 = vpop.f32.mrb[0].mxu0
        %v1208 = vadd.f32 %v905, %v1207
        %v1209 = vpop.f32.mrb[0].mxu0
        %v1210 = vpop.f32.mrb[0].mxu0
        %v1211 = vadd.f32 %v906, %v1210
        %v1212 = vpop.f32.mrb[0].mxu0
        %1213 = vdwg.mxu0
        %1215 = vrot.lane.b32.xlu0 %v924, 96
        %v1216 = vpop.permute.xlu0 %1215
        %1218 = vrot.lane.b32.xlu0 %v926, 96
        %v1219 = vpop.permute.xlu0 %1218
        %v1221 = vsel %vm929, %v1216, 0
        %v1224 = vsel %vm929, %v1219, 0
        %1226 = vmatprep.subr.bf16.mxu0 0
        %1227 = vmatpush1.bf16.xpose.msra.mxu0 %v1224
        %1228 = vmatprep.subr.bf16.mxu0 0
        %1229 = vmatpush1.bf16.xpose.msra.mxu0 0
        %1230 = vmatprep.subr.bf16.mxu0 0
        %1231 = vmatpush1.bf16.xpose.msra.mxu0 0
        %1232 = vmatprep.subr.bf16.mxu0 0
        %1233 = vmatpush1.bf16.xpose.msra.mxu0 0
        %1234 = vmatprep.subr.bf16.mxu0 0
        %1235 = vmatpush1.bf16.xpose.msra.mxu0 0
        %1236 = vmatprep.subr.bf16.mxu0 0
        %1237 = vmatpush1.bf16.xpose.msra.mxu0 0
        %1238 = vmatprep.subr.bf16.mxu0 0
        %1239 = vmatpush1.bf16.xpose.msra.mxu0 0
        %1240 = vmatprep.subr.bf16.mxu0 0
        %1241 = vmatpush1.bf16.xpose.msra.mxu0 0
        %1242 = vmatprep.subr.bf16.mxu0 0
        %1243 = vmatpush1.bf16.xpose.msra.mxu0 0
        %1244 = vmatprep.subr.bf16.mxu0 0
        %1245 = vmatpush1.bf16.xpose.msra.mxu0 0
        %1246 = vmatprep.subr.bf16.mxu0 0
        %1247 = vmatpush1.bf16.xpose.msra.mxu0 0
        %1248 = vmatprep.subr.bf16.mxu0 0
        %1249 = vmatpush1.bf16.xpose.msra.mxu0 0
        %1250 = vmatprep.subr.bf16.mxu0 0
        %1251 = vmatpush1.bf16.xpose.msra.mxu0 0
        %1252 = vmatprep.subr.bf16.mxu0 0
        %1253 = vmatpush1.bf16.xpose.msra.mxu0 0
        %1254 = vmatprep.subr.bf16.mxu0 0
        %1255 = vmatpush1.bf16.xpose.msra.mxu0 0
        %1256 = vmatprep.subr.bf16.mxu0 0
        %1257 = vmatpush1.bf16.xpose.msra.mxu0 0
        %1258 = vmatprep.mubr.bf16.mxu0 0
        %1259 = vmatmul.mubr.bf16.gmra.mrb[0].mxu0 %v1221
        %v1260 = vpop.f32.mrb[0].mxu0
        %v1261 = vadd.f32 %v905, %v1260
        %v1262 = vpop.f32.mrb[0].mxu0
        %v1263 = vpop.f32.mrb[0].mxu0
        %v1264 = vadd.f32 %v906, %v1263
        %v1265 = vpop.f32.mrb[0].mxu0
        %1266 = vdwg.mxu0
        %v1267 = vsel %vm1024, %v1208, -inf
        %1268 = vmax.xlane.f32.xlu0 %v1267
        %v1269 = vpop.xlane.xlu0 %1268
        %v1270 = vsel %vm1024, %v1211, -inf
        %1271 = vmax.xlane.f32.xlu0 %v1270
        %v1272 = vpop.xlane.xlu0 %1271
        %v1273 = vsel %vm1024, %v1261, -inf
        %1274 = vmax.xlane.f32.xlu0 %v1273
        %v1275 = vpop.xlane.xlu0 %1274
        %v1276 = vsel %vm1024, %v1264, -inf
        %1277 = vmax.xlane.f32.xlu0 %v1276
        %v1278 = vpop.xlane.xlu0 %1277
        %v1279 = vsub.f32 %v1208, %v1269
        %v1280 = vsub.f32 %v1211, %v1272
        %v1281 = vsub.f32 %v1261, %v1275
        %v1282 = vsub.f32 %v1264, %v1278
        %v1283 = vmul.f32 %v1279, 1.442695
        %v1284 = vpow.pop %v1283
        %v1285 = vmul.f32 %v1280, 1.442695
        %v1286 = vpow.pop %v1285
        %v1287 = vmul.f32 %v1281, 1.442695
        %v1288 = vpow.pop %v1287
        %v1289 = vmul.f32 %v1282, 1.442695
        %v1290 = vpow.pop %v1289
        %v1291 = vsel %vm1024, %v1284, 0.0
        %1292 = vadd.xlane.f32.xlu0 %v1291
        %v1293 = vpop.xlane.xlu0 %1292
        %v1294 = vsel %vm1024, %v1286, 0.0
        %1295 = vadd.xlane.f32.xlu0 %v1294
        %v1296 = vpop.xlane.xlu0 %1295
        %v1297 = vsel %vm1024, %v1288, 0.0
        %1298 = vadd.xlane.f32.xlu0 %v1297
        %v1299 = vpop.xlane.xlu0 %1298
        %v1300 = vsel %vm1024, %v1290, 0.0
        %1301 = vadd.xlane.f32.xlu0 %v1300
        %v1302 = vpop.xlane.xlu0 %1301
        %v1303 = vrcp.pop %v1293
        %v1304 = vrcp.pop %v1296
        %v1305 = vrcp.pop %v1299
        %v1306 = vrcp.pop %v1302
        %v1307 = vmul.f32 %v1284, %v1303
        %v1308 = vmul.f32 %v1286, %v1304
        %v1309 = vmul.f32 %v1288, %v1305
        %v1310 = vmul.f32 %v1290, %v1306
        %v1311 = vpack.c.bf16 %v1308, %v1307
        %v1312 = vpack.c.bf16 %v1310, %v1309
        %1314 = vrot.lane.b32.xlu0 %v927, 96
        %v1315 = vpop.permute.xlu0 %1314
        %v1318 = vsel %vm1024, %v1311, 0
        %1320 = vmatprep.subr.bf16.mxu0 0
        %1321 = vmatpush1.bf16.msra.mxu0 %v1315
        %1322 = vmatprep.subr.bf16.mxu0 0
        %1323 = vmatpush1.bf16.msra.mxu0 0
        %1324 = vmatprep.subr.bf16.mxu0 0
        %1325 = vmatpush1.bf16.msra.mxu0 0
        %1326 = vmatprep.subr.bf16.mxu0 0
        %1327 = vmatpush1.bf16.msra.mxu0 0
        %1328 = vmatprep.subr.bf16.mxu0 0
        %1329 = vmatpush1.bf16.msra.mxu0 0
        %1330 = vmatprep.subr.bf16.mxu0 0
        %1331 = vmatpush1.bf16.msra.mxu0 0
        %1332 = vmatprep.subr.bf16.mxu0 0
        %1333 = vmatpush1.bf16.msra.mxu0 0
        %1334 = vmatprep.subr.bf16.mxu0 0
        %1335 = vmatpush1.bf16.msra.mxu0 0
        %1336 = vmatprep.subr.bf16.mxu0 0
        %1337 = vmatpush1.bf16.msra.mxu0 0
        %1338 = vmatprep.subr.bf16.mxu0 0
        %1339 = vmatpush1.bf16.msra.mxu0 0
        %1340 = vmatprep.subr.bf16.mxu0 0
        %1341 = vmatpush1.bf16.msra.mxu0 0
        %1342 = vmatprep.subr.bf16.mxu0 0
        %1343 = vmatpush1.bf16.msra.mxu0 0
        %1344 = vmatprep.subr.bf16.mxu0 0
        %1345 = vmatpush1.bf16.msra.mxu0 0
        %1346 = vmatprep.subr.bf16.mxu0 0
        %1347 = vmatpush1.bf16.msra.mxu0 0
        %1348 = vmatprep.subr.bf16.mxu0 0
        %1349 = vmatpush1.bf16.msra.mxu0 0
        %1350 = vmatprep.subr.bf16.mxu0 0
        %1351 = vmatpush1.bf16.msra.mxu0 0
        %1352 = vmatprep.mubr.bf16.mxu0 0
        %1353 = vmatmul.mubr.bf16.gmra.mrb[0].mxu0 %v1318
        %v1354 = vpop.f32.mrb[0].mxu0
        %v1355 = vadd.f32 0.0, %v1354
        %v1356 = vpop.f32.mrb[0].mxu0
        %v1357 = vpop.f32.mrb[0].mxu0
        %v1358 = vadd.f32 0.0, %v1357
        %v1359 = vpop.f32.mrb[0].mxu0
        %1360 = vdwg.mxu0
        %1362 = vrot.lane.b32.xlu0 %v928, 96
        %v1363 = vpop.permute.xlu0 %1362
        %v1366 = vsel %vm1024, %v1312, 0
        %1368 = vmatprep.subr.bf16.mxu0 0
        %1369 = vmatpush1.bf16.msra.mxu0 %v1363
        %1370 = vmatprep.subr.bf16.mxu0 0
        %1371 = vmatpush1.bf16.msra.mxu0 0
        %1372 = vmatprep.subr.bf16.mxu0 0
        %1373 = vmatpush1.bf16.msra.mxu0 0
        %1374 = vmatprep.subr.bf16.mxu0 0
        %1375 = vmatpush1.bf16.msra.mxu0 0
        %1376 = vmatprep.subr.bf16.mxu0 0
        %1377 = vmatpush1.bf16.msra.mxu0 0
        %1378 = vmatprep.subr.bf16.mxu0 0
        %1379 = vmatpush1.bf16.msra.mxu0 0
        %1380 = vmatprep.subr.bf16.mxu0 0
        %1381 = vmatpush1.bf16.msra.mxu0 0
        %1382 = vmatprep.subr.bf16.mxu0 0
        %1383 = vmatpush1.bf16.msra.mxu0 0
        %1384 = vmatprep.subr.bf16.mxu0 0
        %1385 = vmatpush1.bf16.msra.mxu0 0
        %1386 = vmatprep.subr.bf16.mxu0 0
        %1387 = vmatpush1.bf16.msra.mxu0 0
        %1388 = vmatprep.subr.bf16.mxu0 0
        %1389 = vmatpush1.bf16.msra.mxu0 0
        %1390 = vmatprep.subr.bf16.mxu0 0
        %1391 = vmatpush1.bf16.msra.mxu0 0
        %1392 = vmatprep.subr.bf16.mxu0 0
        %1393 = vmatpush1.bf16.msra.mxu0 0
        %1394 = vmatprep.subr.bf16.mxu0 0
        %1395 = vmatpush1.bf16.msra.mxu0 0
        %1396 = vmatprep.subr.bf16.mxu0 0
        %1397 = vmatpush1.bf16.msra.mxu0 0
        %1398 = vmatprep.subr.bf16.mxu0 0
        %1399 = vmatpush1.bf16.msra.mxu0 0
        %1400 = vmatprep.mubr.bf16.mxu0 0
        %1401 = vmatmul.mubr.bf16.gmra.mrb[0].mxu0 %v1366
        %v1402 = vpop.f32.mrb[0].mxu0
        %v1403 = vadd.f32 0.0, %v1402
        %v1404 = vpop.f32.mrb[0].mxu0
        %v1405 = vpop.f32.mrb[0].mxu0
        %v1406 = vadd.f32 0.0, %v1405
        %v1407 = vpop.f32.mrb[0].mxu0
        %1408 = vdwg.mxu0
        %v1409 = vpack.c.bf16 %v1358, %v1355
        %v1410 = vpack.c.bf16 %v1406, %v1403
        %v1415 = vunpack.c.l.b16 %v911
        %v1416 = vunpack.c.l.b16 %v912
        %v1417 = vunpack.c.l.b16 %v913
        %v1418 = vunpack.c.l.b16 %v914
        %v1419 = vpack.c.b16 %v1416, %v1415
        %v1420 = vpack.c.b16 %v1418, %v1417
        %v1424 = vsel %vm929, %v1409, 0
        %v1427 = vsel %vm929, %v1410, 0
        %1429 = vmatprep.subr.bf16.mxu0 0
        %1430 = vmatpush1.bf16.msra.mxu0 %v1419
        %1431 = vmatprep.subr.bf16.mxu0 0
        %1432 = vmatpush1.bf16.msra.mxu0 %v1420
        %1433 = vmatprep.subr.bf16.mxu0 0
        %1434 = vmatpush1.bf16.msra.mxu0 0
        %1435 = vmatprep.subr.bf16.mxu0 0
        %1436 = vmatpush1.bf16.msra.mxu0 0
        %1437 = vmatprep.subr.bf16.mxu0 0
        %1438 = vmatpush1.bf16.msra.mxu0 0
        %1439 = vmatprep.subr.bf16.mxu0 0
        %1440 = vmatpush1.bf16.msra.mxu0 0
        %1441 = vmatprep.subr.bf16.mxu0 0
        %1442 = vmatpush1.bf16.msra.mxu0 0
        %1443 = vmatprep.subr.bf16.mxu0 0
        %1444 = vmatpush1.bf16.msra.mxu0 0
        %1445 = vmatprep.subr.bf16.mxu0 0
        %1446 = vmatpush1.bf16.msra.mxu0 0
        %1447 = vmatprep.subr.bf16.mxu0 0
        %1448 = vmatpush1.bf16.msra.mxu0 0
        %1449 = vmatprep.subr.bf16.mxu0 0
        %1450 = vmatpush1.bf16.msra.mxu0 0
        %1451 = vmatprep.subr.bf16.mxu0 0
        %1452 = vmatpush1.bf16.msra.mxu0 0
        %1453 = vmatprep.subr.bf16.mxu0 0
        %1454 = vmatpush1.bf16.msra.mxu0 0
        %1455 = vmatprep.subr.bf16.mxu0 0
        %1456 = vmatpush1.bf16.msra.mxu0 0
        %1457 = vmatprep.subr.bf16.mxu0 0
        %1458 = vmatpush1.bf16.msra.mxu0 0
        %1459 = vmatprep.subr.bf16.mxu0 0
        %1460 = vmatpush1.bf16.msra.mxu0 0
        %1461 = vmatprep.mubr.bf16.mxu0 0
        %1462 = vmatmul.mubr.bf16.gmra.mrb[0].mxu0 %v1424
        %v1463 = vpop.f32.mrb[0].mxu0
        %v1464 = vadd.f32 0.0, %v1463
        %v1465 = vpop.f32.mrb[0].mxu0
        %v1466 = vpop.f32.mrb[0].mxu0
        %v1467 = vadd.f32 0.0, %v1466
        %v1468 = vpop.f32.mrb[0].mxu0
        %1469 = vmatprep.mubr.bf16.mxu0 0
        %1470 = vmatmul.mubr.bf16.gmra.mrb[0].mxu0 %v1427
        %v1471 = vpop.f32.mrb[0].mxu0
        %v1472 = vadd.f32 0.0, %v1471
        %v1473 = vpop.f32.mrb[0].mxu0
        %v1474 = vpop.f32.mrb[0].mxu0
        %v1475 = vadd.f32 0.0, %v1474
        %v1476 = vpop.f32.mrb[0].mxu0
        %1477 = vdwg.mxu0
        %v1482 = vunpack.c.l.b16 %v907
        %v1483 = vunpack.c.l.b16 %v908
        %v1484 = vunpack.c.l.b16 %v909
        %v1485 = vunpack.c.l.b16 %v910
        %v1486 = vpack.c.b16 %v1483, %v1482
        %v1487 = vpack.c.b16 %v1485, %v1484
        %v1491 = vsel %vm929, %v1159, 0
        %v1494 = vsel %vm929, %v1160, 0
        %1496 = vmatprep.subr.bf16.mxu0 0
        %1497 = vmatpush1.bf16.msra.mxu0 %v1486
        %1498 = vmatprep.subr.bf16.mxu0 0
        %1499 = vmatpush1.bf16.msra.mxu0 %v1487
        %1500 = vmatprep.subr.bf16.mxu0 0
        %1501 = vmatpush1.bf16.msra.mxu0 0
        %1502 = vmatprep.subr.bf16.mxu0 0
        %1503 = vmatpush1.bf16.msra.mxu0 0
        %1504 = vmatprep.subr.bf16.mxu0 0
        %1505 = vmatpush1.bf16.msra.mxu0 0
        %1506 = vmatprep.subr.bf16.mxu0 0
        %1507 = vmatpush1.bf16.msra.mxu0 0
        %1508 = vmatprep.subr.bf16.mxu0 0
        %1509 = vmatpush1.bf16.msra.mxu0 0
        %1510 = vmatprep.subr.bf16.mxu0 0
        %1511 = vmatpush1.bf16.msra.mxu0 0
        %1512 = vmatprep.subr.bf16.mxu0 0
        %1513 = vmatpush1.bf16.msra.mxu0 0
        %1514 = vmatprep.subr.bf16.mxu0 0
        %1515 = vmatpush1.bf16.msra.mxu0 0
        %1516 = vmatprep.subr.bf16.mxu0 0
        %1517 = vmatpush1.bf16.msra.mxu0 0
        %1518 = vmatprep.subr.bf16.mxu0 0
        %1519 = vmatpush1.bf16.msra.mxu0 0
        %1520 = vmatprep.subr.bf16.mxu0 0
        %1521 = vmatpush1.bf16.msra.mxu0 0
        %1522 = vmatprep.subr.bf16.mxu0 0
        %1523 = vmatpush1.bf16.msra.mxu0 0
        %1524 = vmatprep.subr.bf16.mxu0 0
        %1525 = vmatpush1.bf16.msra.mxu0 0
        %1526 = vmatprep.subr.bf16.mxu0 0
        %1527 = vmatpush1.bf16.msra.mxu0 0
        %1528 = vmatprep.mubr.bf16.mxu0 0
        %1529 = vmatmul.mubr.bf16.gmra.mrb[0].mxu0 %v1491
        %v1530 = vpop.f32.mrb[0].mxu0
        %v1531 = vadd.f32 %v1464, %v1530
        %v1532 = vpop.f32.mrb[0].mxu0
        %v1533 = vpop.f32.mrb[0].mxu0
        %v1534 = vadd.f32 %v1467, %v1533
        %v1535 = vpop.f32.mrb[0].mxu0
        %1536 = vmatprep.mubr.bf16.mxu0 0
        %1537 = vmatmul.mubr.bf16.gmra.mrb[0].mxu0 %v1494
        %v1538 = vpop.f32.mrb[0].mxu0
        %v1539 = vadd.f32 %v1472, %v1538
        %v1540 = vpop.f32.mrb[0].mxu0
        %v1541 = vpop.f32.mrb[0].mxu0
        %v1542 = vadd.f32 %v1475, %v1541
        %v1543 = vpop.f32.mrb[0].mxu0
        %1544 = vdwg.mxu0
        %1545 = vrot.lane.b32.xlu0 %v923, 64
        %v1546 = vpop.permute.xlu0 %1545
        %1547 = vrot.lane.b32.xlu0 %v925, 64
        %v1548 = vpop.permute.xlu0 %1547
        %v1550 = vsel %vm929, %v1546, 0
        %v1553 = vsel %vm929, %v1548, 0
        %1555 = vmatprep.subr.bf16.mxu0 0
        %1556 = vmatpush1.bf16.xpose.msra.mxu0 %v1553
        %1557 = vmatprep.subr.bf16.mxu0 0
        %1558 = vmatpush1.bf16.xpose.msra.mxu0 0
        %1559 = vmatprep.subr.bf16.mxu0 0
        %1560 = vmatpush1.bf16.xpose.msra.mxu0 0
        %1561 = vmatprep.subr.bf16.mxu0 0
        %1562 = vmatpush1.bf16.xpose.msra.mxu0 0
        %1563 = vmatprep.subr.bf16.mxu0 0
        %1564 = vmatpush1.bf16.xpose.msra.mxu0 0
        %1565 = vmatprep.subr.bf16.mxu0 0
        %1566 = vmatpush1.bf16.xpose.msra.mxu0 0
        %1567 = vmatprep.subr.bf16.mxu0 0
        %1568 = vmatpush1.bf16.xpose.msra.mxu0 0
        %1569 = vmatprep.subr.bf16.mxu0 0
        %1570 = vmatpush1.bf16.xpose.msra.mxu0 0
        %1571 = vmatprep.subr.bf16.mxu0 0
        %1572 = vmatpush1.bf16.xpose.msra.mxu0 0
        %1573 = vmatprep.subr.bf16.mxu0 0
        %1574 = vmatpush1.bf16.xpose.msra.mxu0 0
        %1575 = vmatprep.subr.bf16.mxu0 0
        %1576 = vmatpush1.bf16.xpose.msra.mxu0 0
        %1577 = vmatprep.subr.bf16.mxu0 0
        %1578 = vmatpush1.bf16.xpose.msra.mxu0 0
        %1579 = vmatprep.subr.bf16.mxu0 0
        %1580 = vmatpush1.bf16.xpose.msra.mxu0 0
        %1581 = vmatprep.subr.bf16.mxu0 0
        %1582 = vmatpush1.bf16.xpose.msra.mxu0 0
        %1583 = vmatprep.subr.bf16.mxu0 0
        %1584 = vmatpush1.bf16.xpose.msra.mxu0 0
        %1585 = vmatprep.subr.bf16.mxu0 0
        %1586 = vmatpush1.bf16.xpose.msra.mxu0 0
        %1587 = vmatprep.mubr.bf16.mxu0 0
        %1588 = vmatmul.mubr.bf16.gmra.mrb[0].mxu0 %v1550
        %v1589 = vpop.f32.mrb[0].mxu0
        %v1590 = vadd.f32 %v905, %v1589
        %v1591 = vpop.f32.mrb[0].mxu0
        %v1592 = vpop.f32.mrb[0].mxu0
        %v1593 = vadd.f32 %v906, %v1592
        %v1594 = vpop.f32.mrb[0].mxu0
        %1595 = vdwg.mxu0
        %1596 = vrot.lane.b32.xlu0 %v924, 64
        %v1597 = vpop.permute.xlu0 %1596
        %1598 = vrot.lane.b32.xlu0 %v926, 64
        %v1599 = vpop.permute.xlu0 %1598
        %v1601 = vsel %vm929, %v1597, 0
        %v1604 = vsel %vm929, %v1599, 0
        %1606 = vmatprep.subr.bf16.mxu0 0
        %1607 = vmatpush1.bf16.xpose.msra.mxu0 %v1604
        %1608 = vmatprep.subr.bf16.mxu0 0
        %1609 = vmatpush1.bf16.xpose.msra.mxu0 0
        %1610 = vmatprep.subr.bf16.mxu0 0
        %1611 = vmatpush1.bf16.xpose.msra.mxu0 0
        %1612 = vmatprep.subr.bf16.mxu0 0
        %1613 = vmatpush1.bf16.xpose.msra.mxu0 0
        %1614 = vmatprep.subr.bf16.mxu0 0
        %1615 = vmatpush1.bf16.xpose.msra.mxu0 0
        %1616 = vmatprep.subr.bf16.mxu0 0
        %1617 = vmatpush1.bf16.xpose.msra.mxu0 0
        %1618 = vmatprep.subr.bf16.mxu0 0
        %1619 = vmatpush1.bf16.xpose.msra.mxu0 0
        %1620 = vmatprep.subr.bf16.mxu0 0
        %1621 = vmatpush1.bf16.xpose.msra.mxu0 0
        %1622 = vmatprep.subr.bf16.mxu0 0
        %1623 = vmatpush1.bf16.xpose.msra.mxu0 0
        %1624 = vmatprep.subr.bf16.mxu0 0
        %1625 = vmatpush1.bf16.xpose.msra.mxu0 0
        %1626 = vmatprep.subr.bf16.mxu0 0
        %1627 = vmatpush1.bf16.xpose.msra.mxu0 0
        %1628 = vmatprep.subr.bf16.mxu0 0
        %1629 = vmatpush1.bf16.xpose.msra.mxu0 0
        %1630 = vmatprep.subr.bf16.mxu0 0
        %1631 = vmatpush1.bf16.xpose.msra.mxu0 0
        %1632 = vmatprep.subr.bf16.mxu0 0
        %1633 = vmatpush1.bf16.xpose.msra.mxu0 0
        %1634 = vmatprep.subr.bf16.mxu0 0
        %1635 = vmatpush1.bf16.xpose.msra.mxu0 0
        %1636 = vmatprep.subr.bf16.mxu0 0
        %1637 = vmatpush1.bf16.xpose.msra.mxu0 0
        %1638 = vmatprep.mubr.bf16.mxu0 0
        %1639 = vmatmul.mubr.bf16.gmra.mrb[0].mxu0 %v1601
        %v1640 = vpop.f32.mrb[0].mxu0
        %v1641 = vadd.f32 %v905, %v1640
        %v1642 = vpop.f32.mrb[0].mxu0
        %v1643 = vpop.f32.mrb[0].mxu0
        %v1644 = vadd.f32 %v906, %v1643
        %v1645 = vpop.f32.mrb[0].mxu0
        %1646 = vdwg.mxu0
        %v1647 = vsel %vm1024, %v1590, -inf
        %1648 = vmax.xlane.f32.xlu0 %v1647
        %v1649 = vpop.xlane.xlu0 %1648
        %v1650 = vsel %vm1024, %v1593, -inf
        %1651 = vmax.xlane.f32.xlu0 %v1650
        %v1652 = vpop.xlane.xlu0 %1651
        %v1653 = vsel %vm1024, %v1641, -inf
        %1654 = vmax.xlane.f32.xlu0 %v1653
        %v1655 = vpop.xlane.xlu0 %1654
        %v1656 = vsel %vm1024, %v1644, -inf
        %1657 = vmax.xlane.f32.xlu0 %v1656
        %v1658 = vpop.xlane.xlu0 %1657
        %v1659 = vsub.f32 %v1590, %v1649
        %v1660 = vsub.f32 %v1593, %v1652
        %v1661 = vsub.f32 %v1641, %v1655
        %v1662 = vsub.f32 %v1644, %v1658
        %v1663 = vmul.f32 %v1659, 1.442695
        %v1664 = vpow.pop %v1663
        %v1665 = vmul.f32 %v1660, 1.442695
        %v1666 = vpow.pop %v1665
        %v1667 = vmul.f32 %v1661, 1.442695
        %v1668 = vpow.pop %v1667
        %v1669 = vmul.f32 %v1662, 1.442695
        %v1670 = vpow.pop %v1669
        %v1671 = vsel %vm1024, %v1664, 0.0
        %1672 = vadd.xlane.f32.xlu0 %v1671
        %v1673 = vpop.xlane.xlu0 %1672
        %v1674 = vsel %vm1024, %v1666, 0.0
        %1675 = vadd.xlane.f32.xlu0 %v1674
        %v1676 = vpop.xlane.xlu0 %1675
        %v1677 = vsel %vm1024, %v1668, 0.0
        %1678 = vadd.xlane.f32.xlu0 %v1677
        %v1679 = vpop.xlane.xlu0 %1678
        %v1680 = vsel %vm1024, %v1670, 0.0
        %1681 = vadd.xlane.f32.xlu0 %v1680
        %v1682 = vpop.xlane.xlu0 %1681
        %v1683 = vrcp.pop %v1673
        %v1684 = vrcp.pop %v1676
        %v1685 = vrcp.pop %v1679
        %v1686 = vrcp.pop %v1682
        %v1687 = vmul.f32 %v1664, %v1683
        %v1688 = vmul.f32 %v1666, %v1684
        %v1689 = vmul.f32 %v1668, %v1685
        %v1690 = vmul.f32 %v1670, %v1686
        %v1691 = vpack.c.bf16 %v1688, %v1687
        %v1692 = vpack.c.bf16 %v1690, %v1689
        %1693 = vrot.lane.b32.xlu0 %v927, 64
        %v1694 = vpop.permute.xlu0 %1693
        %v1697 = vsel %vm1024, %v1691, 0
        %1699 = vmatprep.subr.bf16.mxu0 0
        %1700 = vmatpush1.bf16.msra.mxu0 %v1694
        %1701 = vmatprep.subr.bf16.mxu0 0
        %1702 = vmatpush1.bf16.msra.mxu0 0
        %1703 = vmatprep.subr.bf16.mxu0 0
        %1704 = vmatpush1.bf16.msra.mxu0 0
        %1705 = vmatprep.subr.bf16.mxu0 0
        %1706 = vmatpush1.bf16.msra.mxu0 0
        %1707 = vmatprep.subr.bf16.mxu0 0
        %1708 = vmatpush1.bf16.msra.mxu0 0
        %1709 = vmatprep.subr.bf16.mxu0 0
        %1710 = vmatpush1.bf16.msra.mxu0 0
        %1711 = vmatprep.subr.bf16.mxu0 0
        %1712 = vmatpush1.bf16.msra.mxu0 0
        %1713 = vmatprep.subr.bf16.mxu0 0
        %1714 = vmatpush1.bf16.msra.mxu0 0
        %1715 = vmatprep.subr.bf16.mxu0 0
        %1716 = vmatpush1.bf16.msra.mxu0 0
        %1717 = vmatprep.subr.bf16.mxu0 0
        %1718 = vmatpush1.bf16.msra.mxu0 0
        %1719 = vmatprep.subr.bf16.mxu0 0
        %1720 = vmatpush1.bf16.msra.mxu0 0
        %1721 = vmatprep.subr.bf16.mxu0 0
        %1722 = vmatpush1.bf16.msra.mxu0 0
        %1723 = vmatprep.subr.bf16.mxu0 0
        %1724 = vmatpush1.bf16.msra.mxu0 0
        %1725 = vmatprep.subr.bf16.mxu0 0
        %1726 = vmatpush1.bf16.msra.mxu0 0
        %1727 = vmatprep.subr.bf16.mxu0 0
        %1728 = vmatpush1.bf16.msra.mxu0 0
        %1729 = vmatprep.subr.bf16.mxu0 0
        %1730 = vmatpush1.bf16.msra.mxu0 0
        %1731 = vmatprep.mubr.bf16.mxu0 0
        %1732 = vmatmul.mubr.bf16.gmra.mrb[0].mxu0 %v1697
        %v1733 = vpop.f32.mrb[0].mxu0
        %v1734 = vadd.f32 0.0, %v1733
        %v1735 = vpop.f32.mrb[0].mxu0
        %v1736 = vpop.f32.mrb[0].mxu0
        %v1737 = vadd.f32 0.0, %v1736
        %v1738 = vpop.f32.mrb[0].mxu0
        %1739 = vdwg.mxu0
        %1740 = vrot.lane.b32.xlu0 %v928, 64
        %v1741 = vpop.permute.xlu0 %1740
        %v1744 = vsel %vm1024, %v1692, 0
        %1746 = vmatprep.subr.bf16.mxu0 0
        %1747 = vmatpush1.bf16.msra.mxu0 %v1741
        %1748 = vmatprep.subr.bf16.mxu0 0
        %1749 = vmatpush1.bf16.msra.mxu0 0
        %1750 = vmatprep.subr.bf16.mxu0 0
        %1751 = vmatpush1.bf16.msra.mxu0 0
        %1752 = vmatprep.subr.bf16.mxu0 0
        %1753 = vmatpush1.bf16.msra.mxu0 0
        %1754 = vmatprep.subr.bf16.mxu0 0
        %1755 = vmatpush1.bf16.msra.mxu0 0
        %1756 = vmatprep.subr.bf16.mxu0 0
        %1757 = vmatpush1.bf16.msra.mxu0 0
        %1758 = vmatprep.subr.bf16.mxu0 0
        %1759 = vmatpush1.bf16.msra.mxu0 0
        %1760 = vmatprep.subr.bf16.mxu0 0
        %1761 = vmatpush1.bf16.msra.mxu0 0
        %1762 = vmatprep.subr.bf16.mxu0 0
        %1763 = vmatpush1.bf16.msra.mxu0 0
        %1764 = vmatprep.subr.bf16.mxu0 0
        %1765 = vmatpush1.bf16.msra.mxu0 0
        %1766 = vmatprep.subr.bf16.mxu0 0
        %1767 = vmatpush1.bf16.msra.mxu0 0
        %1768 = vmatprep.subr.bf16.mxu0 0
        %1769 = vmatpush1.bf16.msra.mxu0 0
        %1770 = vmatprep.subr.bf16.mxu0 0
        %1771 = vmatpush1.bf16.msra.mxu0 0
        %1772 = vmatprep.subr.bf16.mxu0 0
        %1773 = vmatpush1.bf16.msra.mxu0 0
        %1774 = vmatprep.subr.bf16.mxu0 0
        %1775 = vmatpush1.bf16.msra.mxu0 0
        %1776 = vmatprep.subr.bf16.mxu0 0
        %1777 = vmatpush1.bf16.msra.mxu0 0
        %1778 = vmatprep.mubr.bf16.mxu0 0
        %1779 = vmatmul.mubr.bf16.gmra.mrb[0].mxu0 %v1744
        %v1780 = vpop.f32.mrb[0].mxu0
        %v1781 = vadd.f32 0.0, %v1780
        %v1782 = vpop.f32.mrb[0].mxu0
        %v1783 = vpop.f32.mrb[0].mxu0
        %v1784 = vadd.f32 0.0, %v1783
        %v1785 = vpop.f32.mrb[0].mxu0
        %1786 = vdwg.mxu0
        %v1787 = vpack.c.bf16 %v1737, %v1734
        %v1788 = vpack.c.bf16 %v1784, %v1781
        %v1793 = vunpack.c.l.b16 %v915
        %v1794 = vunpack.c.l.b16 %v916
        %v1795 = vunpack.c.l.b16 %v917
        %v1796 = vunpack.c.l.b16 %v918
        %v1797 = vpack.c.b16 %v1794, %v1793
        %v1798 = vpack.c.b16 %v1796, %v1795
        %v1802 = vsel %vm929, %v1787, 0
        %v1805 = vsel %vm929, %v1788, 0
        %1807 = vmatprep.subr.bf16.mxu0 0
        %1808 = vmatpush1.bf16.msra.mxu0 %v1797
        %1809 = vmatprep.subr.bf16.mxu0 0
        %1810 = vmatpush1.bf16.msra.mxu0 %v1798
        %1811 = vmatprep.subr.bf16.mxu0 0
        %1812 = vmatpush1.bf16.msra.mxu0 0
        %1813 = vmatprep.subr.bf16.mxu0 0
        %1814 = vmatpush1.bf16.msra.mxu0 0
        %1815 = vmatprep.subr.bf16.mxu0 0
        %1816 = vmatpush1.bf16.msra.mxu0 0
        %1817 = vmatprep.subr.bf16.mxu0 0
        %1818 = vmatpush1.bf16.msra.mxu0 0
        %1819 = vmatprep.subr.bf16.mxu0 0
        %1820 = vmatpush1.bf16.msra.mxu0 0
        %1821 = vmatprep.subr.bf16.mxu0 0
        %1822 = vmatpush1.bf16.msra.mxu0 0
        %1823 = vmatprep.subr.bf16.mxu0 0
        %1824 = vmatpush1.bf16.msra.mxu0 0
        %1825 = vmatprep.subr.bf16.mxu0 0
        %1826 = vmatpush1.bf16.msra.mxu0 0
        %1827 = vmatprep.subr.bf16.mxu0 0
        %1828 = vmatpush1.bf16.msra.mxu0 0
        %1829 = vmatprep.subr.bf16.mxu0 0
        %1830 = vmatpush1.bf16.msra.mxu0 0
        %1831 = vmatprep.subr.bf16.mxu0 0
        %1832 = vmatpush1.bf16.msra.mxu0 0
        %1833 = vmatprep.subr.bf16.mxu0 0
        %1834 = vmatpush1.bf16.msra.mxu0 0
        %1835 = vmatprep.subr.bf16.mxu0 0
        %1836 = vmatpush1.bf16.msra.mxu0 0
        %1837 = vmatprep.subr.bf16.mxu0 0
        %1838 = vmatpush1.bf16.msra.mxu0 0
        %1839 = vmatprep.mubr.bf16.mxu0 0
        %1840 = vmatmul.mubr.bf16.gmra.mrb[0].mxu0 %v1802
        %v1841 = vpop.f32.mrb[0].mxu0
        %v1842 = vadd.f32 0.0, %v1841
        %v1843 = vpop.f32.mrb[0].mxu0
        %v1844 = vpop.f32.mrb[0].mxu0
        %v1845 = vadd.f32 0.0, %v1844
        %v1846 = vpop.f32.mrb[0].mxu0
        %1847 = vmatprep.mubr.bf16.mxu0 0
        %1848 = vmatmul.mubr.bf16.gmra.mrb[0].mxu0 %v1805
        %v1849 = vpop.f32.mrb[0].mxu0
        %v1850 = vadd.f32 0.0, %v1849
        %v1851 = vpop.f32.mrb[0].mxu0
        %v1852 = vpop.f32.mrb[0].mxu0
        %v1853 = vadd.f32 0.0, %v1852
        %v1854 = vpop.f32.mrb[0].mxu0
        %1855 = vdwg.mxu0
        %v1856 = vadd.f32 %v1531, %v1842
        %v1857 = vadd.f32 %v1534, %v1845
        %v1858 = vadd.f32 %v1539, %v1850
        %v1859 = vadd.f32 %v1542, %v1853
        %1860 = vrot.lane.b32.xlu0 %v923, 32
        %v1861 = vpop.permute.xlu0 %1860
        %1862 = vrot.lane.b32.xlu0 %v925, 32
        %v1863 = vpop.permute.xlu0 %1862
        %v1865 = vsel %vm929, %v1861, 0
        %v1868 = vsel %vm929, %v1863, 0
        %1870 = vmatprep.subr.bf16.mxu0 0
        %1871 = vmatpush1.bf16.xpose.msra.mxu0 %v1868
        %1872 = vmatprep.subr.bf16.mxu0 0
        %1873 = vmatpush1.bf16.xpose.msra.mxu0 0
        %1874 = vmatprep.subr.bf16.mxu0 0
        %1875 = vmatpush1.bf16.xpose.msra.mxu0 0
        %1876 = vmatprep.subr.bf16.mxu0 0
        %1877 = vmatpush1.bf16.xpose.msra.mxu0 0
        %1878 = vmatprep.subr.bf16.mxu0 0
        %1879 = vmatpush1.bf16.xpose.msra.mxu0 0
        %1880 = vmatprep.subr.bf16.mxu0 0
        %1881 = vmatpush1.bf16.xpose.msra.mxu0 0
        %1882 = vmatprep.subr.bf16.mxu0 0
        %1883 = vmatpush1.bf16.xpose.msra.mxu0 0
        %1884 = vmatprep.subr.bf16.mxu0 0
        %1885 = vmatpush1.bf16.xpose.msra.mxu0 0
        %1886 = vmatprep.subr.bf16.mxu0 0
        %1887 = vmatpush1.bf16.xpose.msra.mxu0 0
        %1888 = vmatprep.subr.bf16.mxu0 0
        %1889 = vmatpush1.bf16.xpose.msra.mxu0 0
        %1890 = vmatprep.subr.bf16.mxu0 0
        %1891 = vmatpush1.bf16.xpose.msra.mxu0 0
        %1892 = vmatprep.subr.bf16.mxu0 0
        %1893 = vmatpush1.bf16.xpose.msra.mxu0 0
        %1894 = vmatprep.subr.bf16.mxu0 0
        %1895 = vmatpush1.bf16.xpose.msra.mxu0 0
        %1896 = vmatprep.subr.bf16.mxu0 0
        %1897 = vmatpush1.bf16.xpose.msra.mxu0 0
        %1898 = vmatprep.subr.bf16.mxu0 0
        %1899 = vmatpush1.bf16.xpose.msra.mxu0 0
        %1900 = vmatprep.subr.bf16.mxu0 0
        %1901 = vmatpush1.bf16.xpose.msra.mxu0 0
        %1902 = vmatprep.mubr.bf16.mxu0 0
        %1903 = vmatmul.mubr.bf16.gmra.mrb[0].mxu0 %v1865
        %v1904 = vpop.f32.mrb[0].mxu0
        %v1905 = vadd.f32 %v905, %v1904
        %v1906 = vpop.f32.mrb[0].mxu0
        %v1907 = vpop.f32.mrb[0].mxu0
        %v1908 = vadd.f32 %v906, %v1907
        %v1909 = vpop.f32.mrb[0].mxu0
        %1910 = vdwg.mxu0
        %1911 = vrot.lane.b32.xlu0 %v924, 32
        %v1912 = vpop.permute.xlu0 %1911
        %1913 = vrot.lane.b32.xlu0 %v926, 32
        %v1914 = vpop.permute.xlu0 %1913
        %v1916 = vsel %vm929, %v1912, 0
        %v1919 = vsel %vm929, %v1914, 0
        %1921 = vmatprep.subr.bf16.mxu0 0
        %1922 = vmatpush1.bf16.xpose.msra.mxu0 %v1919
        %1923 = vmatprep.subr.bf16.mxu0 0
        %1924 = vmatpush1.bf16.xpose.msra.mxu0 0
        %1925 = vmatprep.subr.bf16.mxu0 0
        %1926 = vmatpush1.bf16.xpose.msra.mxu0 0
        %1927 = vmatprep.subr.bf16.mxu0 0
        %1928 = vmatpush1.bf16.xpose.msra.mxu0 0
        %1929 = vmatprep.subr.bf16.mxu0 0
        %1930 = vmatpush1.bf16.xpose.msra.mxu0 0
        %1931 = vmatprep.subr.bf16.mxu0 0
        %1932 = vmatpush1.bf16.xpose.msra.mxu0 0
        %1933 = vmatprep.subr.bf16.mxu0 0
        %1934 = vmatpush1.bf16.xpose.msra.mxu0 0
        %1935 = vmatprep.subr.bf16.mxu0 0
        %1936 = vmatpush1.bf16.xpose.msra.mxu0 0
        %1937 = vmatprep.subr.bf16.mxu0 0
        %1938 = vmatpush1.bf16.xpose.msra.mxu0 0
        %1939 = vmatprep.subr.bf16.mxu0 0
        %1940 = vmatpush1.bf16.xpose.msra.mxu0 0
        %1941 = vmatprep.subr.bf16.mxu0 0
        %1942 = vmatpush1.bf16.xpose.msra.mxu0 0
        %1943 = vmatprep.subr.bf16.mxu0 0
        %1944 = vmatpush1.bf16.xpose.msra.mxu0 0
        %1945 = vmatprep.subr.bf16.mxu0 0
        %1946 = vmatpush1.bf16.xpose.msra.mxu0 0
        %1947 = vmatprep.subr.bf16.mxu0 0
        %1948 = vmatpush1.bf16.xpose.msra.mxu0 0
        %1949 = vmatprep.subr.bf16.mxu0 0
        %1950 = vmatpush1.bf16.xpose.msra.mxu0 0
        %1951 = vmatprep.subr.bf16.mxu0 0
        %1952 = vmatpush1.bf16.xpose.msra.mxu0 0
        %1953 = vmatprep.mubr.bf16.mxu0 0
        %1954 = vmatmul.mubr.bf16.gmra.mrb[0].mxu0 %v1916
        %v1955 = vpop.f32.mrb[0].mxu0
        %v1956 = vadd.f32 %v905, %v1955
        %v1957 = vpop.f32.mrb[0].mxu0
        %v1958 = vpop.f32.mrb[0].mxu0
        %v1959 = vadd.f32 %v906, %v1958
        %v1960 = vpop.f32.mrb[0].mxu0
        %1961 = vdwg.mxu0
        %v1962 = vsel %vm1024, %v1905, -inf
        %1963 = vmax.xlane.f32.xlu0 %v1962
        %v1964 = vpop.xlane.xlu0 %1963
        %v1965 = vsel %vm1024, %v1908, -inf
        %1966 = vmax.xlane.f32.xlu0 %v1965
        %v1967 = vpop.xlane.xlu0 %1966
        %v1968 = vsel %vm1024, %v1956, -inf
        %1969 = vmax.xlane.f32.xlu0 %v1968
        %v1970 = vpop.xlane.xlu0 %1969
        %v1971 = vsel %vm1024, %v1959, -inf
        %1972 = vmax.xlane.f32.xlu0 %v1971
        %v1973 = vpop.xlane.xlu0 %1972
        %v1974 = vsub.f32 %v1905, %v1964
        %v1975 = vsub.f32 %v1908, %v1967
        %v1976 = vsub.f32 %v1956, %v1970
        %v1977 = vsub.f32 %v1959, %v1973
        %v1978 = vmul.f32 %v1974, 1.442695
        %v1979 = vpow.pop %v1978
        %v1980 = vmul.f32 %v1975, 1.442695
        %v1981 = vpow.pop %v1980
        %v1982 = vmul.f32 %v1976, 1.442695
        %v1983 = vpow.pop %v1982
        %v1984 = vmul.f32 %v1977, 1.442695
        %v1985 = vpow.pop %v1984
        %v1986 = vsel %vm1024, %v1979, 0.0
        %1987 = vadd.xlane.f32.xlu0 %v1986
        %v1988 = vpop.xlane.xlu0 %1987
        %v1989 = vsel %vm1024, %v1981, 0.0
        %1990 = vadd.xlane.f32.xlu0 %v1989
        %v1991 = vpop.xlane.xlu0 %1990
        %v1992 = vsel %vm1024, %v1983, 0.0
        %1993 = vadd.xlane.f32.xlu0 %v1992
        %v1994 = vpop.xlane.xlu0 %1993
        %v1995 = vsel %vm1024, %v1985, 0.0
        %1996 = vadd.xlane.f32.xlu0 %v1995
        %v1997 = vpop.xlane.xlu0 %1996
        %v1998 = vrcp.pop %v1988
        %v1999 = vrcp.pop %v1991
        %v2000 = vrcp.pop %v1994
        %v2001 = vrcp.pop %v1997
        %v2002 = vmul.f32 %v1979, %v1998
        %v2003 = vmul.f32 %v1981, %v1999
        %v2004 = vmul.f32 %v1983, %v2000
        %v2005 = vmul.f32 %v1985, %v2001
        %v2006 = vpack.c.bf16 %v2003, %v2002
        %v2007 = vpack.c.bf16 %v2005, %v2004
        %2008 = vrot.lane.b32.xlu0 %v927, 32
        %v2009 = vpop.permute.xlu0 %2008
        %v2012 = vsel %vm1024, %v2006, 0
        %2014 = vmatprep.subr.bf16.mxu0 0
        %2015 = vmatpush1.bf16.msra.mxu0 %v2009
        %2016 = vmatprep.subr.bf16.mxu0 0
        %2017 = vmatpush1.bf16.msra.mxu0 0
        %2018 = vmatprep.subr.bf16.mxu0 0
        %2019 = vmatpush1.bf16.msra.mxu0 0
        %2020 = vmatprep.subr.bf16.mxu0 0
        %2021 = vmatpush1.bf16.msra.mxu0 0
        %2022 = vmatprep.subr.bf16.mxu0 0
        %2023 = vmatpush1.bf16.msra.mxu0 0
        %2024 = vmatprep.subr.bf16.mxu0 0
        %2025 = vmatpush1.bf16.msra.mxu0 0
        %2026 = vmatprep.subr.bf16.mxu0 0
        %2027 = vmatpush1.bf16.msra.mxu0 0
        %2028 = vmatprep.subr.bf16.mxu0 0
        %2029 = vmatpush1.bf16.msra.mxu0 0
        %2030 = vmatprep.subr.bf16.mxu0 0
        %2031 = vmatpush1.bf16.msra.mxu0 0
        %2032 = vmatprep.subr.bf16.mxu0 0
        %2033 = vmatpush1.bf16.msra.mxu0 0
        %2034 = vmatprep.subr.bf16.mxu0 0
        %2035 = vmatpush1.bf16.msra.mxu0 0
        %2036 = vmatprep.subr.bf16.mxu0 0
        %2037 = vmatpush1.bf16.msra.mxu0 0
        %2038 = vmatprep.subr.bf16.mxu0 0
        %2039 = vmatpush1.bf16.msra.mxu0 0
        %2040 = vmatprep.subr.bf16.mxu0 0
        %2041 = vmatpush1.bf16.msra.mxu0 0
        %2042 = vmatprep.subr.bf16.mxu0 0
        %2043 = vmatpush1.bf16.msra.mxu0 0
        %2044 = vmatprep.subr.bf16.mxu0 0
        %2045 = vmatpush1.bf16.msra.mxu0 0
        %2046 = vmatprep.mubr.bf16.mxu0 0
        %2047 = vmatmul.mubr.bf16.gmra.mrb[0].mxu0 %v2012
        %v2048 = vpop.f32.mrb[0].mxu0
        %v2049 = vadd.f32 0.0, %v2048
        %v2050 = vpop.f32.mrb[0].mxu0
        %v2051 = vpop.f32.mrb[0].mxu0
        %v2052 = vadd.f32 0.0, %v2051
        %v2053 = vpop.f32.mrb[0].mxu0
        %2054 = vdwg.mxu0
        %2055 = vrot.lane.b32.xlu0 %v928, 32
        %v2056 = vpop.permute.xlu0 %2055
        %v2059 = vsel %vm1024, %v2007, 0
        %2061 = vmatprep.subr.bf16.mxu0 0
        %2062 = vmatpush1.bf16.msra.mxu0 %v2056
        %2063 = vmatprep.subr.bf16.mxu0 0
        %2064 = vmatpush1.bf16.msra.mxu0 0
        %2065 = vmatprep.subr.bf16.mxu0 0
        %2066 = vmatpush1.bf16.msra.mxu0 0
        %2067 = vmatprep.subr.bf16.mxu0 0
        %2068 = vmatpush1.bf16.msra.mxu0 0
        %2069 = vmatprep.subr.bf16.mxu0 0
        %2070 = vmatpush1.bf16.msra.mxu0 0
        %2071 = vmatprep.subr.bf16.mxu0 0
        %2072 = vmatpush1.bf16.msra.mxu0 0
        %2073 = vmatprep.subr.bf16.mxu0 0
        %2074 = vmatpush1.bf16.msra.mxu0 0
        %2075 = vmatprep.subr.bf16.mxu0 0
        %2076 = vmatpush1.bf16.msra.mxu0 0
        %2077 = vmatprep.subr.bf16.mxu0 0
        %2078 = vmatpush1.bf16.msra.mxu0 0
        %2079 = vmatprep.subr.bf16.mxu0 0
        %2080 = vmatpush1.bf16.msra.mxu0 0
        %2081 = vmatprep.subr.bf16.mxu0 0
        %2082 = vmatpush1.bf16.msra.mxu0 0
        %2083 = vmatprep.subr.bf16.mxu0 0
        %2084 = vmatpush1.bf16.msra.mxu0 0
        %2085 = vmatprep.subr.bf16.mxu0 0
        %2086 = vmatpush1.bf16.msra.mxu0 0
        %2087 = vmatprep.subr.bf16.mxu0 0
        %2088 = vmatpush1.bf16.msra.mxu0 0
        %2089 = vmatprep.subr.bf16.mxu0 0
        %2090 = vmatpush1.bf16.msra.mxu0 0
        %2091 = vmatprep.subr.bf16.mxu0 0
        %2092 = vmatpush1.bf16.msra.mxu0 0
        %2093 = vmatprep.mubr.bf16.mxu0 0
        %2094 = vmatmul.mubr.bf16.gmra.mrb[0].mxu0 %v2059
        %v2095 = vpop.f32.mrb[0].mxu0
        %v2096 = vadd.f32 0.0, %v2095
        %v2097 = vpop.f32.mrb[0].mxu0
        %v2098 = vpop.f32.mrb[0].mxu0
        %v2099 = vadd.f32 0.0, %v2098
        %v2100 = vpop.f32.mrb[0].mxu0
        %2101 = vdwg.mxu0
        %v2102 = vpack.c.bf16 %v2052, %v2049
        %v2103 = vpack.c.bf16 %v2099, %v2096
        %v2108 = vunpack.c.l.b16 %v919
        %v2109 = vunpack.c.l.b16 %v920
        %v2110 = vunpack.c.l.b16 %v921
        %v2111 = vunpack.c.l.b16 %v922
        %v2112 = vpack.c.b16 %v2109, %v2108
        %v2113 = vpack.c.b16 %v2111, %v2110
        %v2117 = vsel %vm929, %v2102, 0
        %v2120 = vsel %vm929, %v2103, 0
        %2122 = vmatprep.subr.bf16.mxu0 0
        %2123 = vmatpush1.bf16.msra.mxu0 %v2112
        %2124 = vmatprep.subr.bf16.mxu0 0
        %2125 = vmatpush1.bf16.msra.mxu0 %v2113
        %2126 = vmatprep.subr.bf16.mxu0 0
        %2127 = vmatpush1.bf16.msra.mxu0 0
        %2128 = vmatprep.subr.bf16.mxu0 0
        %2129 = vmatpush1.bf16.msra.mxu0 0
        %2130 = vmatprep.subr.bf16.mxu0 0
        %2131 = vmatpush1.bf16.msra.mxu0 0
        %2132 = vmatprep.subr.bf16.mxu0 0
        %2133 = vmatpush1.bf16.msra.mxu0 0
        %2134 = vmatprep.subr.bf16.mxu0 0
        %2135 = vmatpush1.bf16.msra.mxu0 0
        %2136 = vmatprep.subr.bf16.mxu0 0
        %2137 = vmatpush1.bf16.msra.mxu0 0
        %2138 = vmatprep.subr.bf16.mxu0 0
        %2139 = vmatpush1.bf16.msra.mxu0 0
        %2140 = vmatprep.subr.bf16.mxu0 0
        %2141 = vmatpush1.bf16.msra.mxu0 0
        %2142 = vmatprep.subr.bf16.mxu0 0
        %2143 = vmatpush1.bf16.msra.mxu0 0
        %2144 = vmatprep.subr.bf16.mxu0 0
        %2145 = vmatpush1.bf16.msra.mxu0 0
        %2146 = vmatprep.subr.bf16.mxu0 0
        %2147 = vmatpush1.bf16.msra.mxu0 0
        %2148 = vmatprep.subr.bf16.mxu0 0
        %2149 = vmatpush1.bf16.msra.mxu0 0
        %2150 = vmatprep.subr.bf16.mxu0 0
        %2151 = vmatpush1.bf16.msra.mxu0 0
        %2152 = vmatprep.subr.bf16.mxu0 0
        %2153 = vmatpush1.bf16.msra.mxu0 0
        %2154 = vmatprep.mubr.bf16.mxu0 0
        %2155 = vmatmul.mubr.bf16.gmra.mrb[0].mxu0 %v2117
        %v2156 = vpop.f32.mrb[0].mxu0
        %v2157 = vadd.f32 0.0, %v2156
        %v2158 = vpop.f32.mrb[0].mxu0
        %v2159 = vpop.f32.mrb[0].mxu0
        %v2160 = vadd.f32 0.0, %v2159
        %v2161 = vpop.f32.mrb[0].mxu0
        %2162 = vmatprep.mubr.bf16.mxu0 0
        %2163 = vmatmul.mubr.bf16.gmra.mrb[0].mxu0 %v2120
        %v2164 = vpop.f32.mrb[0].mxu0
        %v2165 = vadd.f32 0.0, %v2164
        %v2166 = vpop.f32.mrb[0].mxu0
        %v2167 = vpop.f32.mrb[0].mxu0
        %v2168 = vadd.f32 0.0, %v2167
        %v2169 = vpop.f32.mrb[0].mxu0
        %2170 = vdwg.mxu0
        %v2171 = vadd.f32 %v1856, %v2157
        %v2172 = vadd.f32 %v1857, %v2160
        %v2173 = vadd.f32 %v1858, %v2165
        %v2174 = vadd.f32 %v1859, %v2168
        %v2175 = vld [vmem:[%s6] sm:$0x1]
        %v2177 = vlaneseq
        %v2178 = vshrl.u32 %v2177, 7
        %v2179 = vsub.s32 0, %v2178
        %v2180 = vrot.slane %v2175, %v2179
        %v2182 = vadd.f32 %v2171, %v2180
        %v2183 = vadd.f32 %v2172, %v2180
        %v2184 = vadd.f32 %v2173, %v2180
        %v2185 = vadd.f32 %v2174, %v2180
        %v2186 = vadd.f32 %v2182, %v546
        %v2187 = vadd.f32 %v2183, %v547
        %v2188 = vadd.f32 %v2184, %v548
        %v2189 = vadd.f32 %v2185, %v549
        %v2190 = vld [vmem:[%s7] sm:$0x1]
        %v2191 = vld [vmem:[%s8] sm:$0x1]
        %2192 = vadd.xlane.f32.xlu0 %v2186
        %v2193 = vpop.xlane.xlu0 %2192
        %2194 = vadd.xlane.f32.xlu0 %v2187
        %v2195 = vpop.xlane.xlu0 %2194
        %2196 = vadd.xlane.f32.xlu0 %v2188
        %v2197 = vpop.xlane.xlu0 %2196
        %2198 = vadd.xlane.f32.xlu0 %v2189
        %v2199 = vpop.xlane.xlu0 %2198
        %v2200 = vmul.f32 %v2193, %v560
        %v2201 = vmul.f32 %v2195, %v560
        %v2202 = vmul.f32 %v2197, %v560
        %v2203 = vmul.f32 %v2199, %v560
        %v2204 = vsub.f32 %v2186, %v2200
        %v2205 = vsub.f32 %v2187, %v2201
        %v2206 = vsub.f32 %v2188, %v2202
        %v2207 = vsub.f32 %v2189, %v2203
        %v2208 = vmul.f32 %v2204, %v2204
        %v2209 = vmul.f32 %v2205, %v2205
        %v2210 = vmul.f32 %v2206, %v2206
        %v2211 = vmul.f32 %v2207, %v2207
        %2212 = vadd.xlane.f32.xlu0 %v2208
        %v2213 = vpop.xlane.xlu0 %2212
        %2214 = vadd.xlane.f32.xlu0 %v2209
        %v2215 = vpop.xlane.xlu0 %2214
        %2216 = vadd.xlane.f32.xlu0 %v2210
        %v2217 = vpop.xlane.xlu0 %2216
        %2218 = vadd.xlane.f32.xlu0 %v2211
        %v2219 = vpop.xlane.xlu0 %2218
        %v2220 = vmul.f32 %v2213, %v560
        %v2221 = vmul.f32 %v2215, %v560
        %v2222 = vmul.f32 %v2217, %v560
        %v2223 = vmul.f32 %v2219, %v560
        %v2224 = vadd.f32 %v2220, 1e-05
        %v2225 = vadd.f32 %v2221, 1e-05
        %v2226 = vadd.f32 %v2222, 1e-05
        %v2227 = vadd.f32 %v2223, 1e-05
        %v2228 = vrsqrt.pop %v2224
        %v2229 = vrsqrt.pop %v2225
        %v2230 = vrsqrt.pop %v2226
        %v2231 = vrsqrt.pop %v2227
        %v2232 = vmul.f32 %v2204, %v2228
        %v2233 = vmul.f32 %v2205, %v2229
        %v2234 = vmul.f32 %v2206, %v2230
        %v2235 = vmul.f32 %v2207, %v2231
        %v2237 = vlaneseq
        %v2238 = vshrl.u32 %v2237, 7
        %v2239 = vsub.s32 0, %v2238
        %v2240 = vrot.slane %v2190, %v2239
        %v2242 = vmul.f32 %v2232, %v2240
        %v2243 = vmul.f32 %v2233, %v2240
        %v2244 = vmul.f32 %v2234, %v2240
        %v2245 = vmul.f32 %v2235, %v2240
        %v2247 = vlaneseq
        %v2248 = vshrl.u32 %v2247, 7
        %v2249 = vsub.s32 0, %v2248
        %v2250 = vrot.slane %v2191, %v2249
        %v2252 = vadd.f32 %v2242, %v2250
        %v2253 = vadd.f32 %v2243, %v2250
        %v2254 = vadd.f32 %v2244, %v2250
        %v2255 = vadd.f32 %v2245, %v2250
        %v2256 = vpack.c.bf16 %v2253, %v2252
        %v2257 = vpack.c.bf16 %v2255, %v2254
        %v2258 = vld [vmem:[#allocation11] sm:$0xff]
        %v2259 = vld [vmem:[#allocation11 + $0x8] sm:$0xff]
        %v2260 = vld [vmem:[#allocation11 + $0x10] sm:$0xff]
        %v2261 = vld [vmem:[#allocation11 + $0x18] sm:$0xff]
        %v2262 = vld [vmem:[#allocation11 + $0x20] sm:$0xff]
        %v2263 = vld [vmem:[#allocation11 + $0x28] sm:$0xff]
        %v2264 = vld [vmem:[#allocation11 + $0x30] sm:$0xff]
        %v2265 = vld [vmem:[#allocation11 + $0x38] sm:$0xff]
        %v2266 = vld [vmem:[#allocation11 + $0x40] sm:$0xff]
        %v2267 = vld [vmem:[#allocation11 + $0x48] sm:$0xff]
        %v2268 = vld [vmem:[#allocation11 + $0x50] sm:$0xff]
        %v2269 = vld [vmem:[#allocation11 + $0x58] sm:$0xff]
        %v2270 = vld [vmem:[#allocation11 + $0x60] sm:$0xff]
        %v2271 = vld [vmem:[#allocation11 + $0x68] sm:$0xff]
        %v2272 = vld [vmem:[#allocation11 + $0x70] sm:$0xff]
        %v2273 = vld [vmem:[#allocation11 + $0x78] sm:$0xff]
        %v2274 = vld [vmem:[#allocation11 + $0x80] sm:$0xff]
        %v2275 = vld [vmem:[#allocation11 + $0x88] sm:$0xff]
        %v2276 = vld [vmem:[#allocation11 + $0x90] sm:$0xff]
        %v2277 = vld [vmem:[#allocation11 + $0x98] sm:$0xff]
        %v2278 = vld [vmem:[#allocation11 + $0xa0] sm:$0xff]
        %v2279 = vld [vmem:[#allocation11 + $0xa8] sm:$0xff]
        %v2280 = vld [vmem:[#allocation11 + $0xb0] sm:$0xff]
        %v2281 = vld [vmem:[#allocation11 + $0xb8] sm:$0xff]
        %v2282 = vld [vmem:[#allocation11 + $0xc0] sm:$0xff]
        %v2283 = vld [vmem:[#allocation11 + $0xc8] sm:$0xff]
        %v2284 = vld [vmem:[#allocation11 + $0xd0] sm:$0xff]
        %v2285 = vld [vmem:[#allocation11 + $0xd8] sm:$0xff]
        %v2286 = vld [vmem:[#allocation11 + $0xe0] sm:$0xff]
        %v2287 = vld [vmem:[#allocation11 + $0xe8] sm:$0xff]
        %v2288 = vld [vmem:[#allocation11 + $0xf0] sm:$0xff]
        %v2289 = vld [vmem:[#allocation11 + $0xf8] sm:$0xff]
        %v2290 = vld [vmem:[%s10] sm:$0xf]
        %v2292 = vlaneseq
        %v2293 = vshrl.u32 %v2292, 7
        %v2294 = vsub.s32 0, %v2293
        %v2295 = vrot.slane %v2290, %v2294
        %v2296 = vlaneseq
        %v2297 = vshrl.u32 %v2296, 7
        %v2298 = vsub.s32 1, %v2297
        %v2299 = vrot.slane %v2290, %v2298
        %v2300 = vlaneseq
        %v2301 = vshrl.u32 %v2300, 7
        %v2302 = vsub.s32 2, %v2301
        %v2303 = vrot.slane %v2290, %v2302
        %v2304 = vlaneseq
        %v2305 = vshrl.u32 %v2304, 7
        %v2306 = vsub.s32 3, %v2305
        %v2307 = vrot.slane %v2290, %v2306
        %v2344 = vunpack.c.l.b16 %v2258
        %v2345 = vunpack.c.h.b16 %v2258
        %v2346 = vunpack.c.l.b16 %v2259
        %v2347 = vunpack.c.h.b16 %v2259
        %v2348 = vunpack.c.l.b16 %v2260
        %v2349 = vunpack.c.h.b16 %v2260
        %v2350 = vunpack.c.l.b16 %v2261
        %v2351 = vunpack.c.h.b16 %v2261
        %v2352 = vunpack.c.l.b16 %v2262
        %v2353 = vunpack.c.h.b16 %v2262
        %v2354 = vunpack.c.l.b16 %v2263
        %v2355 = vunpack.c.h.b16 %v2263
        %v2356 = vunpack.c.l.b16 %v2264
        %v2357 = vunpack.c.h.b16 %v2264
        %v2358 = vunpack.c.l.b16 %v2265
        %v2359 = vunpack.c.h.b16 %v2265
        %v2360 = vunpack.c.l.b16 %v2266
        %v2361 = vunpack.c.h.b16 %v2266
        %v2362 = vunpack.c.l.b16 %v2267
        %v2363 = vunpack.c.h.b16 %v2267
        %v2364 = vunpack.c.l.b16 %v2268
        %v2365 = vunpack.c.h.b16 %v2268
        %v2366 = vunpack.c.l.b16 %v2269
        %v2367 = vunpack.c.h.b16 %v2269
        %v2368 = vunpack.c.l.b16 %v2270
        %v2369 = vunpack.c.h.b16 %v2270
        %v2370 = vunpack.c.l.b16 %v2271
        %v2371 = vunpack.c.h.b16 %v2271
        %v2372 = vunpack.c.l.b16 %v2272
        %v2373 = vunpack.c.h.b16 %v2272
        %v2374 = vunpack.c.l.b16 %v2273
        %v2375 = vunpack.c.h.b16 %v2273
        %v2376 = vunpack.c.l.b16 %v2274
        %v2377 = vunpack.c.h.b16 %v2274
        %v2378 = vunpack.c.l.b16 %v2275
        %v2379 = vunpack.c.h.b16 %v2275
        %v2380 = vunpack.c.l.b16 %v2276
        %v2381 = vunpack.c.h.b16 %v2276
        %v2382 = vunpack.c.l.b16 %v2277
        %v2383 = vunpack.c.h.b16 %v2277
        %v2384 = vunpack.c.l.b16 %v2278
        %v2385 = vunpack.c.h.b16 %v2278
        %v2386 = vunpack.c.l.b16 %v2279
        %v2387 = vunpack.c.h.b16 %v2279
        %v2388 = vunpack.c.l.b16 %v2280
        %v2389 = vunpack.c.h.b16 %v2280
        %v2390 = vunpack.c.l.b16 %v2281
        %v2391 = vunpack.c.h.b16 %v2281
        %v2392 = vunpack.c.l.b16 %v2282
        %v2393 = vunpack.c.h.b16 %v2282
        %v2394 = vunpack.c.l.b16 %v2283
        %v2395 = vunpack.c.h.b16 %v2283
        %v2396 = vunpack.c.l.b16 %v2284
        %v2397 = vunpack.c.h.b16 %v2284
        %v2398 = vunpack.c.l.b16 %v2285
        %v2399 = vunpack.c.h.b16 %v2285
        %v2400 = vunpack.c.l.b16 %v2286
        %v2401 = vunpack.c.h.b16 %v2286
        %v2402 = vunpack.c.l.b16 %v2287
        %v2403 = vunpack.c.h.b16 %v2287
        %v2404 = vunpack.c.l.b16 %v2288
        %v2405 = vunpack.c.h.b16 %v2288
        %v2406 = vunpack.c.l.b16 %v2289
        %v2407 = vunpack.c.h.b16 %v2289
        %v2408 = vpack.c.b16 %v2348, %v2344
        %v2409 = vpack.c.b16 %v2349, %v2345
        %v2410 = vpack.c.b16 %v2350, %v2346
        %v2411 = vpack.c.b16 %v2351, %v2347
        %v2412 = vpack.c.b16 %v2356, %v2352
        %v2413 = vpack.c.b16 %v2357, %v2353
        %v2414 = vpack.c.b16 %v2358, %v2354
        %v2415 = vpack.c.b16 %v2359, %v2355
        %v2416 = vpack.c.b16 %v2364, %v2360
        %v2417 = vpack.c.b16 %v2365, %v2361
        %v2418 = vpack.c.b16 %v2366, %v2362
        %v2419 = vpack.c.b16 %v2367, %v2363
        %v2420 = vpack.c.b16 %v2372, %v2368
        %v2421 = vpack.c.b16 %v2373, %v2369
        %v2422 = vpack.c.b16 %v2374, %v2370
        %v2423 = vpack.c.b16 %v2375, %v2371
        %v2424 = vpack.c.b16 %v2380, %v2376
        %v2425 = vpack.c.b16 %v2381, %v2377
        %v2426 = vpack.c.b16 %v2382, %v2378
        %v2427 = vpack.c.b16 %v2383, %v2379
        %v2428 = vpack.c.b16 %v2388, %v2384
        %v2429 = vpack.c.b16 %v2389, %v2385
        %v2430 = vpack.c.b16 %v2390, %v2386
        %v2431 = vpack.c.b16 %v2391, %v2387
        %v2432 = vpack.c.b16 %v2396, %v2392
        %v2433 = vpack.c.b16 %v2397, %v2393
        %v2434 = vpack.c.b16 %v2398, %v2394
        %v2435 = vpack.c.b16 %v2399, %v2395
        %v2436 = vpack.c.b16 %v2404, %v2400
        %v2437 = vpack.c.b16 %v2405, %v2401
        %v2438 = vpack.c.b16 %v2406, %v2402
        %v2439 = vpack.c.b16 %v2407, %v2403
        %2472 = vmatprep.subr.bf16.mxu0 %v2409
        %2473 = vmatpush1.bf16.msra.mxu0 %v2408
        %2474 = vmatprep.subr.bf16.mxu0 %v2413
        %2475 = vmatpush1.bf16.msra.mxu0 %v2412
        %2476 = vmatprep.subr.bf16.mxu0 %v2417
        %2477 = vmatpush1.bf16.msra.mxu0 %v2416
        %2478 = vmatprep.subr.bf16.mxu0 %v2421
        %2479 = vmatpush1.bf16.msra.mxu0 %v2420
        %2480 = vmatprep.subr.bf16.mxu0 %v2425
        %2481 = vmatpush1.bf16.msra.mxu0 %v2424
        %2482 = vmatprep.subr.bf16.mxu0 %v2429
        %2483 = vmatpush1.bf16.msra.mxu0 %v2428
        %2484 = vmatprep.subr.bf16.mxu0 %v2433
        %2485 = vmatpush1.bf16.msra.mxu0 %v2432
        %2486 = vmatprep.subr.bf16.mxu0 %v2437
        %2487 = vmatpush1.bf16.msra.mxu0 %v2436
        %2488 = vmatprep.subr.bf16.mxu0 0
        %2489 = vmatpush1.bf16.msra.mxu0 0
        %2490 = vmatprep.subr.bf16.mxu0 0
        %2491 = vmatpush1.bf16.msra.mxu0 0
        %2492 = vmatprep.subr.bf16.mxu0 0
        %2493 = vmatpush1.bf16.msra.mxu0 0
        %2494 = vmatprep.subr.bf16.mxu0 0
        %2495 = vmatpush1.bf16.msra.mxu0 0
        %2496 = vmatprep.subr.bf16.mxu0 0
        %2497 = vmatpush1.bf16.msra.mxu0 0
        %2498 = vmatprep.subr.bf16.mxu0 0
        %2499 = vmatpush1.bf16.msra.mxu0 0
        %2500 = vmatprep.subr.bf16.mxu0 0
        %2501 = vmatpush1.bf16.msra.mxu0 0
        %2502 = vmatprep.subr.bf16.mxu0 0
        %2503 = vmatpush1.bf16.msra.mxu0 0
        %2504 = vmatprep.mubr.bf16.mxu0 0
        %2505 = vmatmul.mubr.bf16.gmra.mrb[0].mxu0 %v2256
        %v2506 = vpop.f32.mrb[0].mxu0
        %v2507 = vadd.f32 %v2295, %v2506
        %v2508 = vpop.f32.mrb[0].mxu0
        %v2509 = vadd.f32 %v2299, %v2508
        %v2510 = vpop.f32.mrb[0].mxu0
        %v2511 = vadd.f32 %v2295, %v2510
        %v2512 = vpop.f32.mrb[0].mxu0
        %v2513 = vadd.f32 %v2299, %v2512
        %2514 = vmatprep.mubr.bf16.mxu0 0
        %2515 = vmatmul.mubr.bf16.gmra.mrb[0].mxu0 %v2257
        %v2516 = vpop.f32.mrb[0].mxu0
        %v2517 = vadd.f32 %v2295, %v2516
        %v2518 = vpop.f32.mrb[0].mxu0
        %v2519 = vadd.f32 %v2299, %v2518
        %v2520 = vpop.f32.mrb[0].mxu0
        %v2521 = vadd.f32 %v2295, %v2520
        %v2522 = vpop.f32.mrb[0].mxu0
        %v2523 = vadd.f32 %v2299, %v2522
        %2524 = vdwg.mxu0
        %2525 = vmatprep.subr.bf16.mxu0 %v2411
        %2526 = vmatpush1.bf16.msra.mxu0 %v2410
        %2527 = vmatprep.subr.bf16.mxu0 %v2415
        %2528 = vmatpush1.bf16.msra.mxu0 %v2414
        %2529 = vmatprep.subr.bf16.mxu0 %v2419
        %2530 = vmatpush1.bf16.msra.mxu0 %v2418
        %2531 = vmatprep.subr.bf16.mxu0 %v2423
        %2532 = vmatpush1.bf16.msra.mxu0 %v2422
        %2533 = vmatprep.subr.bf16.mxu0 %v2427
        %2534 = vmatpush1.bf16.msra.mxu0 %v2426
        %2535 = vmatprep.subr.bf16.mxu0 %v2431
        %2536 = vmatpush1.bf16.msra.mxu0 %v2430
        %2537 = vmatprep.subr.bf16.mxu0 %v2435
        %2538 = vmatpush1.bf16.msra.mxu0 %v2434
        %2539 = vmatprep.subr.bf16.mxu0 %v2439
        %2540 = vmatpush1.bf16.msra.mxu0 %v2438
        %2541 = vmatprep.subr.bf16.mxu0 0
        %2542 = vmatpush1.bf16.msra.mxu0 0
        %2543 = vmatprep.subr.bf16.mxu0 0
        %2544 = vmatpush1.bf16.msra.mxu0 0
        %2545 = vmatprep.subr.bf16.mxu0 0
        %2546 = vmatpush1.bf16.msra.mxu0 0
        %2547 = vmatprep.subr.bf16.mxu0 0
        %2548 = vmatpush1.bf16.msra.mxu0 0
        %2549 = vmatprep.subr.bf16.mxu0 0
        %2550 = vmatpush1.bf16.msra.mxu0 0
        %2551 = vmatprep.subr.bf16.mxu0 0
        %2552 = vmatpush1.bf16.msra.mxu0 0
        %2553 = vmatprep.subr.bf16.mxu0 0
        %2554 = vmatpush1.bf16.msra.mxu0 0
        %2555 = vmatprep.subr.bf16.mxu0 0
        %2556 = vmatpush1.bf16.msra.mxu0 0
        %2557 = vmatprep.mubr.bf16.mxu0 0
        %2558 = vmatmul.mubr.bf16.gmra.mrb[0].mxu0 %v2256
        %v2559 = vpop.f32.mrb[0].mxu0
        %v2560 = vadd.f32 %v2303, %v2559
        %v2561 = vpop.f32.mrb[0].mxu0
        %v2562 = vadd.f32 %v2307, %v2561
        %v2563 = vpop.f32.mrb[0].mxu0
        %v2564 = vadd.f32 %v2303, %v2563
        %v2565 = vpop.f32.mrb[0].mxu0
        %v2566 = vadd.f32 %v2307, %v2565
        %2567 = vmatprep.mubr.bf16.mxu0 0
        %2568 = vmatmul.mubr.bf16.gmra.mrb[0].mxu0 %v2257
        %v2569 = vpop.f32.mrb[0].mxu0
        %v2570 = vadd.f32 %v2303, %v2569
        %v2571 = vpop.f32.mrb[0].mxu0
        %v2572 = vadd.f32 %v2307, %v2571
        %v2573 = vpop.f32.mrb[0].mxu0
        %v2574 = vadd.f32 %v2303, %v2573
        %v2575 = vpop.f32.mrb[0].mxu0
        %v2576 = vadd.f32 %v2307, %v2575
        %2577 = vdwg.mxu0
        %v2578 = vmul.f32 %v2507, 1.702
        %v2579 = vmul.f32 %v2509, 1.702
        %v2580 = vmul.f32 %v2560, 1.702
        %v2581 = vmul.f32 %v2562, 1.702
        %v2582 = vmul.f32 %v2511, 1.702
        %v2583 = vmul.f32 %v2513, 1.702
        %v2584 = vmul.f32 %v2564, 1.702
        %v2585 = vmul.f32 %v2566, 1.702
        %v2586 = vmul.f32 %v2517, 1.702
        %v2587 = vmul.f32 %v2519, 1.702
        %v2588 = vmul.f32 %v2570, 1.702
        %v2589 = vmul.f32 %v2572, 1.702
        %v2590 = vmul.f32 %v2521, 1.702
        %v2591 = vmul.f32 %v2523, 1.702
        %v2592 = vmul.f32 %v2574, 1.702
        %v2593 = vmul.f32 %v2576, 1.702
        %v2594 = vxor.u32 %v2578, 2147483648
        %v2595 = vxor.u32 %v2579, 2147483648
        %v2596 = vxor.u32 %v2580, 2147483648
        %v2597 = vxor.u32 %v2581, 2147483648
        %v2598 = vxor.u32 %v2582, 2147483648
        %v2599 = vxor.u32 %v2583, 2147483648
        %v2600 = vxor.u32 %v2584, 2147483648
        %v2601 = vxor.u32 %v2585, 2147483648
        %v2602 = vxor.u32 %v2586, 2147483648
        %v2603 = vxor.u32 %v2587, 2147483648
        %v2604 = vxor.u32 %v2588, 2147483648
        %v2605 = vxor.u32 %v2589, 2147483648
        %v2606 = vxor.u32 %v2590, 2147483648
        %v2607 = vxor.u32 %v2591, 2147483648
        %v2608 = vxor.u32 %v2592, 2147483648
        %v2609 = vxor.u32 %v2593, 2147483648
        %v2610 = vmul.f32 %v2594, 1.442695
        %v2611 = vpow.pop %v2610
        %v2612 = vmul.f32 %v2595, 1.442695
        %v2613 = vpow.pop %v2612
        %v2614 = vmul.f32 %v2596, 1.442695
        %v2615 = vpow.pop %v2614
        %v2616 = vmul.f32 %v2597, 1.442695
        %v2617 = vpow.pop %v2616
        %v2618 = vmul.f32 %v2598, 1.442695
        %v2619 = vpow.pop %v2618
        %v2620 = vmul.f32 %v2599, 1.442695
        %v2621 = vpow.pop %v2620
        %v2622 = vmul.f32 %v2600, 1.442695
        %v2623 = vpow.pop %v2622
        %v2624 = vmul.f32 %v2601, 1.442695
        %v2625 = vpow.pop %v2624
        %v2626 = vmul.f32 %v2602, 1.442695
        %v2627 = vpow.pop %v2626
        %v2628 = vmul.f32 %v2603, 1.442695
        %v2629 = vpow.pop %v2628
        %v2630 = vmul.f32 %v2604, 1.442695
        %v2631 = vpow.pop %v2630
        %v2632 = vmul.f32 %v2605, 1.442695
        %v2633 = vpow.pop %v2632
        %v2634 = vmul.f32 %v2606, 1.442695
        %v2635 = vpow.pop %v2634
        %v2636 = vmul.f32 %v2607, 1.442695
        %v2637 = vpow.pop %v2636
        %v2638 = vmul.f32 %v2608, 1.442695
        %v2639 = vpow.pop %v2638
        %v2640 = vmul.f32 %v2609, 1.442695
        %v2641 = vpow.pop %v2640
        %v2642 = vadd.f32 %v2611, 1.0
        %v2643 = vadd.f32 %v2613, 1.0
        %v2644 = vadd.f32 %v2615, 1.0
        %v2645 = vadd.f32 %v2617, 1.0
        %v2646 = vadd.f32 %v2619, 1.0
        %v2647 = vadd.f32 %v2621, 1.0
        %v2648 = vadd.f32 %v2623, 1.0
        %v2649 = vadd.f32 %v2625, 1.0
        %v2650 = vadd.f32 %v2627, 1.0
        %v2651 = vadd.f32 %v2629, 1.0
        %v2652 = vadd.f32 %v2631, 1.0
        %v2653 = vadd.f32 %v2633, 1.0
        %v2654 = vadd.f32 %v2635, 1.0
        %v2655 = vadd.f32 %v2637, 1.0
        %v2656 = vadd.f32 %v2639, 1.0
        %v2657 = vadd.f32 %v2641, 1.0
        %v2658 = vrcp.pop %v2642
        %v2659 = vmul.f32 1.0, %v2658
        %v2660 = vrcp.pop %v2643
        %v2661 = vmul.f32 1.0, %v2660
        %v2662 = vrcp.pop %v2644
        %v2663 = vmul.f32 1.0, %v2662
        %v2664 = vrcp.pop %v2645
        %v2665 = vmul.f32 1.0, %v2664
        %v2666 = vrcp.pop %v2646
        %v2667 = vmul.f32 1.0, %v2666
        %v2668 = vrcp.pop %v2647
        %v2669 = vmul.f32 1.0, %v2668
        %v2670 = vrcp.pop %v2648
        %v2671 = vmul.f32 1.0, %v2670
        %v2672 = vrcp.pop %v2649
        %v2673 = vmul.f32 1.0, %v2672
        %v2674 = vrcp.pop %v2650
        %v2675 = vmul.f32 1.0, %v2674
        %v2676 = vrcp.pop %v2651
        %v2677 = vmul.f32 1.0, %v2676
        %v2678 = vrcp.pop %v2652
        %v2679 = vmul.f32 1.0, %v2678
        %v2680 = vrcp.pop %v2653
        %v2681 = vmul.f32 1.0, %v2680
        %v2682 = vrcp.pop %v2654
        %v2683 = vmul.f32 1.0, %v2682
        %v2684 = vrcp.pop %v2655
        %v2685 = vmul.f32 1.0, %v2684
        %v2686 = vrcp.pop %v2656
        %v2687 = vmul.f32 1.0, %v2686
        %v2688 = vrcp.pop %v2657
        %v2689 = vmul.f32 1.0, %v2688
        %v2690 = vmul.f32 %v2507, %v2659
        %v2691 = vmul.f32 %v2509, %v2661
        %v2692 = vmul.f32 %v2560, %v2663
        %v2693 = vmul.f32 %v2562, %v2665
        %v2694 = vmul.f32 %v2511, %v2667
        %v2695 = vmul.f32 %v2513, %v2669
        %v2696 = vmul.f32 %v2564, %v2671
        %v2697 = vmul.f32 %v2566, %v2673
        %v2698 = vmul.f32 %v2517, %v2675
        %v2699 = vmul.f32 %v2519, %v2677
        %v2700 = vmul.f32 %v2570, %v2679
        %v2701 = vmul.f32 %v2572, %v2681
        %v2702 = vmul.f32 %v2521, %v2683
        %v2703 = vmul.f32 %v2523, %v2685
        %v2704 = vmul.f32 %v2574, %v2687
        %v2705 = vmul.f32 %v2576, %v2689
        %v2706 = vpack.c.bf16 %v2694, %v2690
        %v2707 = vpack.c.bf16 %v2695, %v2691
        %v2708 = vpack.c.bf16 %v2696, %v2692
        %v2709 = vpack.c.bf16 %v2697, %v2693
        %v2710 = vpack.c.bf16 %v2702, %v2698
        %v2711 = vpack.c.bf16 %v2703, %v2699
        %v2712 = vpack.c.bf16 %v2704, %v2700
        %v2713 = vpack.c.bf16 %v2705, %v2701
        %v2714 = vld [vmem:[#allocation13] sm:$0xf]
        %v2715 = vld [vmem:[#allocation13 + $0x4] sm:$0xf]
        %v2716 = vld [vmem:[#allocation13 + $0x8] sm:$0xf]
        %v2717 = vld [vmem:[#allocation13 + $0xc] sm:$0xf]
        %v2718 = vld [vmem:[#allocation13 + $0x10] sm:$0xf]
        %v2719 = vld [vmem:[#allocation13 + $0x14] sm:$0xf]
        %v2720 = vld [vmem:[#allocation13 + $0x18] sm:$0xf]
        %v2721 = vld [vmem:[#allocation13 + $0x1c] sm:$0xf]
        %v2722 = vld [vmem:[#allocation13 + $0x20] sm:$0xf]
        %v2723 = vld [vmem:[#allocation13 + $0x24] sm:$0xf]
        %v2724 = vld [vmem:[#allocation13 + $0x28] sm:$0xf]
        %v2725 = vld [vmem:[#allocation13 + $0x2c] sm:$0xf]
        %v2726 = vld [vmem:[#allocation13 + $0x30] sm:$0xf]
        %v2727 = vld [vmem:[#allocation13 + $0x34] sm:$0xf]
        %v2728 = vld [vmem:[#allocation13 + $0x38] sm:$0xf]
        %v2729 = vld [vmem:[#allocation13 + $0x3c] sm:$0xf]
        %v2730 = vld [vmem:[#allocation13 + $0x40] sm:$0xf]
        %v2731 = vld [vmem:[#allocation13 + $0x44] sm:$0xf]
        %v2732 = vld [vmem:[#allocation13 + $0x48] sm:$0xf]
        %v2733 = vld [vmem:[#allocation13 + $0x4c] sm:$0xf]
        %v2734 = vld [vmem:[#allocation13 + $0x50] sm:$0xf]
        %v2735 = vld [vmem:[#allocation13 + $0x54] sm:$0xf]
        %v2736 = vld [vmem:[#allocation13 + $0x58] sm:$0xf]
        %v2737 = vld [vmem:[#allocation13 + $0x5c] sm:$0xf]
        %v2738 = vld [vmem:[#allocation13 + $0x60] sm:$0xf]
        %v2739 = vld [vmem:[#allocation13 + $0x64] sm:$0xf]
        %v2740 = vld [vmem:[#allocation13 + $0x68] sm:$0xf]
        %v2741 = vld [vmem:[#allocation13 + $0x6c] sm:$0xf]
        %v2742 = vld [vmem:[#allocation13 + $0x70] sm:$0xf]
        %v2743 = vld [vmem:[#allocation13 + $0x74] sm:$0xf]
        %v2744 = vld [vmem:[#allocation13 + $0x78] sm:$0xf]
        %v2745 = vld [vmem:[#allocation13 + $0x7c] sm:$0xf]
        %v2746 = vld [vmem:[#allocation13 + $0x80] sm:$0xf]
        %v2747 = vld [vmem:[#allocation13 + $0x84] sm:$0xf]
        %v2748 = vld [vmem:[#allocation13 + $0x88] sm:$0xf]
        %v2749 = vld [vmem:[#allocation13 + $0x8c] sm:$0xf]
        %v2750 = vld [vmem:[#allocation13 + $0x90] sm:$0xf]
        %v2751 = vld [vmem:[#allocation13 + $0x94] sm:$0xf]
        %v2752 = vld [vmem:[#allocation13 + $0x98] sm:$0xf]
        %v2753 = vld [vmem:[#allocation13 + $0x9c] sm:$0xf]
        %v2754 = vld [vmem:[#allocation13 + $0xa0] sm:$0xf]
        %v2755 = vld [vmem:[#allocation13 + $0xa4] sm:$0xf]
        %v2756 = vld [vmem:[#allocation13 + $0xa8] sm:$0xf]
        %v2757 = vld [vmem:[#allocation13 + $0xac] sm:$0xf]
        %v2758 = vld [vmem:[#allocation13 + $0xb0] sm:$0xf]
        %v2759 = vld [vmem:[#allocation13 + $0xb4] sm:$0xf]
        %v2760 = vld [vmem:[#allocation13 + $0xb8] sm:$0xf]
        %v2761 = vld [vmem:[#allocation13 + $0xbc] sm:$0xf]
        %v2762 = vld [vmem:[#allocation13 + $0xc0] sm:$0xf]
        %v2763 = vld [vmem:[#allocation13 + $0xc4] sm:$0xf]
        %v2764 = vld [vmem:[#allocation13 + $0xc8] sm:$0xf]
        %v2765 = vld [vmem:[#allocation13 + $0xcc] sm:$0xf]
        %v2766 = vld [vmem:[#allocation13 + $0xd0] sm:$0xf]
        %v2767 = vld [vmem:[#allocation13 + $0xd4] sm:$0xf]
        %v2768 = vld [vmem:[#allocation13 + $0xd8] sm:$0xf]
        %v2769 = vld [vmem:[#allocation13 + $0xdc] sm:$0xf]
        %v2770 = vld [vmem:[#allocation13 + $0xe0] sm:$0xf]
        %v2771 = vld [vmem:[#allocation13 + $0xe4] sm:$0xf]
        %v2772 = vld [vmem:[#allocation13 + $0xe8] sm:$0xf]
        %v2773 = vld [vmem:[#allocation13 + $0xec] sm:$0xf]
        %v2774 = vld [vmem:[#allocation13 + $0xf0] sm:$0xf]
        %v2775 = vld [vmem:[#allocation13 + $0xf4] sm:$0xf]
        %v2776 = vld [vmem:[#allocation13 + $0xf8] sm:$0xf]
        %v2777 = vld [vmem:[#allocation13 + $0xfc] sm:$0xf]
        %v2778 = vld [vmem:[%s12] sm:$0x1]
        %v2780 = vlaneseq
        %v2781 = vshrl.u32 %v2780, 7
        %v2782 = vsub.s32 0, %v2781
        %v2783 = vrot.slane %v2778, %v2782
        %v2849 = vunpack.c.l.b16 %v2714
        %v2850 = vunpack.c.l.b16 %v2715
        %v2851 = vunpack.c.l.b16 %v2716
        %v2852 = vunpack.c.l.b16 %v2717
        %v2853 = vunpack.c.l.b16 %v2718
        %v2854 = vunpack.c.l.b16 %v2719
        %v2855 = vunpack.c.l.b16 %v2720
        %v2856 = vunpack.c.l.b16 %v2721
        %v2857 = vunpack.c.l.b16 %v2722
        %v2858 = vunpack.c.l.b16 %v2723
        %v2859 = vunpack.c.l.b16 %v2724
        %v2860 = vunpack.c.l.b16 %v2725
        %v2861 = vunpack.c.l.b16 %v2726
        %v2862 = vunpack.c.l.b16 %v2727
        %v2863 = vunpack.c.l.b16 %v2728
        %v2864 = vunpack.c.l.b16 %v2729
        %v2865 = vunpack.c.l.b16 %v2730
        %v2866 = vunpack.c.l.b16 %v2731
        %v2867 = vunpack.c.l.b16 %v2732
        %v2868 = vunpack.c.l.b16 %v2733
        %v2869 = vunpack.c.l.b16 %v2734
        %v2870 = vunpack.c.l.b16 %v2735
        %v2871 = vunpack.c.l.b16 %v2736
        %v2872 = vunpack.c.l.b16 %v2737
        %v2873 = vunpack.c.l.b16 %v2738
        %v2874 = vunpack.c.l.b16 %v2739
        %v2875 = vunpack.c.l.b16 %v2740
        %v2876 = vunpack.c.l.b16 %v2741
        %v2877 = vunpack.c.l.b16 %v2742
        %v2878 = vunpack.c.l.b16 %v2743
        %v2879 = vunpack.c.l.b16 %v2744
        %v2880 = vunpack.c.l.b16 %v2745
        %v2881 = vunpack.c.l.b16 %v2746
        %v2882 = vunpack.c.l.b16 %v2747
        %v2883 = vunpack.c.l.b16 %v2748
        %v2884 = vunpack.c.l.b16 %v2749
        %v2885 = vunpack.c.l.b16 %v2750
        %v2886 = vunpack.c.l.b16 %v2751
        %v2887 = vunpack.c.l.b16 %v2752
        %v2888 = vunpack.c.l.b16 %v2753
        %v2889 = vunpack.c.l.b16 %v2754
        %v2890 = vunpack.c.l.b16 %v2755
        %v2891 = vunpack.c.l.b16 %v2756
        %v2892 = vunpack.c.l.b16 %v2757
        %v2893 = vunpack.c.l.b16 %v2758
        %v2894 = vunpack.c.l.b16 %v2759
        %v2895 = vunpack.c.l.b16 %v2760
        %v2896 = vunpack.c.l.b16 %v2761
        %v2897 = vunpack.c.l.b16 %v2762
        %v2898 = vunpack.c.l.b16 %v2763
        %v2899 = vunpack.c.l.b16 %v2764
        %v2900 = vunpack.c.l.b16 %v2765
        %v2901 = vunpack.c.l.b16 %v2766
        %v2902 = vunpack.c.l.b16 %v2767
        %v2903 = vunpack.c.l.b16 %v2768
        %v2904 = vunpack.c.l.b16 %v2769
        %v2905 = vunpack.c.l.b16 %v2770
        %v2906 = vunpack.c.l.b16 %v2771
        %v2907 = vunpack.c.l.b16 %v2772
        %v2908 = vunpack.c.l.b16 %v2773
        %v2909 = vunpack.c.l.b16 %v2774
        %v2910 = vunpack.c.l.b16 %v2775
        %v2911 = vunpack.c.l.b16 %v2776
        %v2912 = vunpack.c.l.b16 %v2777
        %v2913 = vpack.c.b16 %v2850, %v2849
        %v2914 = vpack.c.b16 %v2852, %v2851
        %v2915 = vpack.c.b16 %v2854, %v2853
        %v2916 = vpack.c.b16 %v2856, %v2855
        %v2917 = vpack.c.b16 %v2858, %v2857
        %v2918 = vpack.c.b16 %v2860, %v2859
        %v2919 = vpack.c.b16 %v2862, %v2861
        %v2920 = vpack.c.b16 %v2864, %v2863
        %v2921 = vpack.c.b16 %v2866, %v2865
        %v2922 = vpack.c.b16 %v2868, %v2867
        %v2923 = vpack.c.b16 %v2870, %v2869
        %v2924 = vpack.c.b16 %v2872, %v2871
        %v2925 = vpack.c.b16 %v2874, %v2873
        %v2926 = vpack.c.b16 %v2876, %v2875
        %v2927 = vpack.c.b16 %v2878, %v2877
        %v2928 = vpack.c.b16 %v2880, %v2879
        %v2929 = vpack.c.b16 %v2882, %v2881
        %v2930 = vpack.c.b16 %v2884, %v2883
        %v2931 = vpack.c.b16 %v2886, %v2885
        %v2932 = vpack.c.b16 %v2888, %v2887
        %v2933 = vpack.c.b16 %v2890, %v2889
        %v2934 = vpack.c.b16 %v2892, %v2891
        %v2935 = vpack.c.b16 %v2894, %v2893
        %v2936 = vpack.c.b16 %v2896, %v2895
        %v2937 = vpack.c.b16 %v2898, %v2897
        %v2938 = vpack.c.b16 %v2900, %v2899
        %v2939 = vpack.c.b16 %v2902, %v2901
        %v2940 = vpack.c.b16 %v2904, %v2903
        %v2941 = vpack.c.b16 %v2906, %v2905
        %v2942 = vpack.c.b16 %v2908, %v2907
        %v2943 = vpack.c.b16 %v2910, %v2909
        %v2944 = vpack.c.b16 %v2912, %v2911
        %2977 = vmatprep.subr.bf16.mxu0 0
        %2978 = vmatpush1.bf16.msra.mxu0 %v2913
        %2979 = vmatprep.subr.bf16.mxu0 0
        %2980 = vmatpush1.bf16.msra.mxu0 %v2914
        %2981 = vmatprep.subr.bf16.mxu0 0
        %2982 = vmatpush1.bf16.msra.mxu0 %v2915
        %2983 = vmatprep.subr.bf16.mxu0 0
        %2984 = vmatpush1.bf16.msra.mxu0 %v2916
        %2985 = vmatprep.subr.bf16.mxu0 0
        %2986 = vmatpush1.bf16.msra.mxu0 %v2917
        %2987 = vmatprep.subr.bf16.mxu0 0
        %2988 = vmatpush1.bf16.msra.mxu0 %v2918
        %2989 = vmatprep.subr.bf16.mxu0 0
        %2990 = vmatpush1.bf16.msra.mxu0 %v2919
        %2991 = vmatprep.subr.bf16.mxu0 0
        %2992 = vmatpush1.bf16.msra.mxu0 %v2920
        %2993 = vmatprep.subr.bf16.mxu0 0
        %2994 = vmatpush1.bf16.msra.mxu0 %v2921
        %2995 = vmatprep.subr.bf16.mxu0 0
        %2996 = vmatpush1.bf16.msra.mxu0 %v2922
        %2997 = vmatprep.subr.bf16.mxu0 0
        %2998 = vmatpush1.bf16.msra.mxu0 %v2923
        %2999 = vmatprep.subr.bf16.mxu0 0
        %3000 = vmatpush1.bf16.msra.mxu0 %v2924
        %3001 = vmatprep.subr.bf16.mxu0 0
        %3002 = vmatpush1.bf16.msra.mxu0 %v2925
        %3003 = vmatprep.subr.bf16.mxu0 0
        %3004 = vmatpush1.bf16.msra.mxu0 %v2926
        %3005 = vmatprep.subr.bf16.mxu0 0
        %3006 = vmatpush1.bf16.msra.mxu0 %v2927
        %3007 = vmatprep.subr.bf16.mxu0 0
        %3008 = vmatpush1.bf16.msra.mxu0 %v2928
        %3009 = vmatprep.mubr.bf16.mxu0 %v2707
        %3010 = vmatmul.mubr.bf16.gmra.mrb[0].mxu0 %v2706
        %v3011 = vpop.f32.mrb[0].mxu0
        %v3012 = vadd.f32 %v2783, %v3011
        %v3013 = vpop.f32.mrb[0].mxu0
        %v3014 = vpop.f32.mrb[0].mxu0
        %v3015 = vadd.f32 %v2783, %v3014
        %v3016 = vpop.f32.mrb[0].mxu0
        %3017 = vmatprep.mubr.bf16.mxu0 %v2711
        %3018 = vmatmul.mubr.bf16.gmra.mrb[0].mxu0 %v2710
        %v3019 = vpop.f32.mrb[0].mxu0
        %v3020 = vadd.f32 %v2783, %v3019
        %v3021 = vpop.f32.mrb[0].mxu0
        %v3022 = vpop.f32.mrb[0].mxu0
        %v3023 = vadd.f32 %v2783, %v3022
        %v3024 = vpop.f32.mrb[0].mxu0
        %3025 = vdwg.mxu0
        %3026 = vmatprep.subr.bf16.mxu0 0
        %3027 = vmatpush1.bf16.msra.mxu0 %v2929
        %3028 = vmatprep.subr.bf16.mxu0 0
        %3029 = vmatpush1.bf16.msra.mxu0 %v2930
        %3030 = vmatprep.subr.bf16.mxu0 0
        %3031 = vmatpush1.bf16.msra.mxu0 %v2931
        %3032 = vmatprep.subr.bf16.mxu0 0
        %3033 = vmatpush1.bf16.msra.mxu0 %v2932
        %3034 = vmatprep.subr.bf16.mxu0 0
        %3035 = vmatpush1.bf16.msra.mxu0 %v2933
        %3036 = vmatprep.subr.bf16.mxu0 0
        %3037 = vmatpush1.bf16.msra.mxu0 %v2934
        %3038 = vmatprep.subr.bf16.mxu0 0
        %3039 = vmatpush1.bf16.msra.mxu0 %v2935
        %3040 = vmatprep.subr.bf16.mxu0 0
        %3041 = vmatpush1.bf16.msra.mxu0 %v2936
        %3042 = vmatprep.subr.bf16.mxu0 0
        %3043 = vmatpush1.bf16.msra.mxu0 %v2937
        %3044 = vmatprep.subr.bf16.mxu0 0
        %3045 = vmatpush1.bf16.msra.mxu0 %v2938
        %3046 = vmatprep.subr.bf16.mxu0 0
        %3047 = vmatpush1.bf16.msra.mxu0 %v2939
        %3048 = vmatprep.subr.bf16.mxu0 0
        %3049 = vmatpush1.bf16.msra.mxu0 %v2940
        %3050 = vmatprep.subr.bf16.mxu0 0
        %3051 = vmatpush1.bf16.msra.mxu0 %v2941
        %3052 = vmatprep.subr.bf16.mxu0 0
        %3053 = vmatpush1.bf16.msra.mxu0 %v2942
        %3054 = vmatprep.subr.bf16.mxu0 0
        %3055 = vmatpush1.bf16.msra.mxu0 %v2943
        %3056 = vmatprep.subr.bf16.mxu0 0
        %3057 = vmatpush1.bf16.msra.mxu0 %v2944
        %3058 = vmatprep.mubr.bf16.mxu0 %v2709
        %3059 = vmatmul.mubr.bf16.gmra.mrb[0].mxu0 %v2708
        %v3060 = vpop.f32.mrb[0].mxu0
        %v3061 = vadd.f32 %v3012, %v3060
        %v3062 = vpop.f32.mrb[0].mxu0
        %v3063 = vpop.f32.mrb[0].mxu0
        %v3064 = vadd.f32 %v3015, %v3063
        %v3065 = vpop.f32.mrb[0].mxu0
        %3066 = vmatprep.mubr.bf16.mxu0 %v2713
        %3067 = vmatmul.mubr.bf16.gmra.mrb[0].mxu0 %v2712
        %v3068 = vpop.f32.mrb[0].mxu0
        %v3069 = vadd.f32 %v3020, %v3068
        %v3070 = vpop.f32.mrb[0].mxu0
        %v3071 = vpop.f32.mrb[0].mxu0
        %v3072 = vadd.f32 %v3023, %v3071
        %v3073 = vpop.f32.mrb[0].mxu0
        %3074 = vdwg.mxu0
        %v3075 = vadd.f32 %v3061, %v2186
        %v3076 = vadd.f32 %v3064, %v2187
        %v3077 = vadd.f32 %v3069, %v2188
        %v3078 = vadd.f32 %v3072, %v2189
        %3079 = vst [vmem:[%s542] sm:$0xff] %v3075
        %3080 = vst [vmem:[%s542 + $0x8] sm:$0xff] %v3076
        %3081 = vst [vmem:[%s542 + $0x10] sm:$0xff] %v3077
        %3082 = vst [vmem:[%s542 + $0x18] sm:$0xff] %v3078
        %s3083 = sand.u32 %s319, 1
        %s3084 = scalar_lea.sflag [#allocation4], %s3083
        %s3085 = sand.u32 %s319, 1
        %s3086 = smul.addr %s3085, 32
        %s3087 = scalar_lea.vmem [#allocation14], %s3086
        // Predicated region
        $region101: #{tpu_custom_call.1} parent=71 // pred_check
          %p3088 = pneg %p329
        $region102: #{tpu_custom_call.1} parent=71 // pred_check_branch
          %3090 = sbr.rel (%p3088) target = $region104
        $region103: #{tpu_custom_call.1} parent=71 // pred_region
          %s3091 = smul.u32 2, %s33
          %s3093 = ssub.s32 512, 512
          %3094 = vsyncadd %s3084, %s3093
          %s3095 = smul.addr %s3091, 2
          %s3096 = smul.addr %s3095, 128
          %s3097 = scalar_lea.hbm %s13, %s3096
          %s3098 = sshll.u32 %s3087, 4
          %s3099 = int_to_ptr.vmem [resolvable:$true] %s3098
          %3104 = dma.vmem_to_hbm [thread:$0]  %s3099, 512, %s3097, %s3084, 128, 128, 8
        $region104: #{tpu_custom_call.1} parent=71 // pred_fallthru
          _
      $region72: #{tpu_custom_call.1} parent=5 // pred_fallthru
        _
      %p3105 = scmp.le.s32.totalorder 2, %s28
      // Predicated region
      $region105: #{tpu_custom_call.1} parent=5 // pred_check
        %p3106 = pneg %p3105
      $region106: #{tpu_custom_call.1} parent=5 // pred_check_branch
        %3108 = sbr.rel (%p3106) target = $region108
      $region107: #{tpu_custom_call.1} parent=5 // pred_region
        %s3109 = ssub.s32 %s28, 2
        // Predicated region
        $region109: #{tpu_custom_call.1} parent=107 // pred_check
          %p3110 = pneg %p335
        $region110: #{tpu_custom_call.1} parent=107 // pred_check_branch
          %3112 = sbr.rel (%p3110) target = $region112
        $region111: #{tpu_custom_call.1} parent=107 // pred_region
          %s3113 = sand.u32 %s320, 1
          %s3114 = scalar_lea.sflag [#allocation4], %s3113
          %s3115 = sand.u32 %s320, 1
          %s3116 = smul.addr %s3115, 32
          %s3117 = scalar_lea.vmem [#allocation14], %s3116
          %3118 = dma.done %s3114, 512
        $region112: #{tpu_custom_call.1} parent=107 // pred_fallthru
          _
      $region108: #{tpu_custom_call.1} parent=5 // pred_fallthru
        _
    $region6: #{tpu_custom_call.1} parent=1 // loop_footer
      %s32 = sadd.s32 1, %s28
    $region7: #{tpu_custom_call.1} parent=1 // loop_footer_branch
      %27 = sbr.rel target = $region3
    $region8: #{tpu_custom_call.1} parent=1 // loop_exit
      _
    %3119 = vsyncpa [#allocation3], 1
    %s3120 = scalar_lea.sflag [#allocation3], 1
    %3121 = vsyncpa %s3120, 1
    %3122 = vsyncpa [#allocation6], 1
    %3123 = vsyncpa [#allocation9], 1
    %3124 = vsyncpa [#allocation12], 1
    %3125 = vsyncpa [#allocation4], 1
    %s3126 = scalar_lea.sflag [#allocation4], 1
    %3127 = vsyncpa %s3126, 1

</llo_original>
